<compile_context>
chip_gen: v5e
topology: v5e:2x2
jax: 0.10.0
libtpu: 0.0.40
codegen_flags: <defaults>
</compile_context>

<pallas_src>
import jax
import jax.numpy as jnp
from jax.experimental import pallas as pl
from jax.experimental.pallas import tpu as pltpu

# ---------------- config (small, consistent with the module's forward) -----
B, S = 2, 16                 # batch, sequence length
H = 128                      # hidden size (scaled down from 768)
NH, HD = 2, 64               # heads, head dim
G = B * NH                   # batched attention groups
INTER = 256                  # FFN intermediate
LAYERS = 2
VOCAB = 100
MAX_POS = 32
NUM_TAG = 8                  # num_tag of the Linear(768, num_tag) head
TAG_PAD = 128                # lane-padded tag dim
EPS = 1e-12                  # BERT layernorm eps
N = B * S

VMEM = pltpu.MemorySpace.VMEM
SMEM = pltpu.MemorySpace.SMEM


# ---------------- kernel helpers -------------------------------------------
def _layernorm(x, g, b):
    mu = jnp.mean(x, axis=-1, keepdims=True)
    var = jnp.mean((x - mu) ** 2, axis=-1, keepdims=True)
    return (x - mu) * jax.lax.rsqrt(var + EPS) * g + b


def _split_heads(t):
    """(N, H) f32 -> (B*NH, S, HD) f32, head-major (g = h*B + b)."""
    t3 = t.reshape(B, S, H)
    return jnp.concatenate([t3[:, :, h * HD:(h + 1) * HD] for h in range(NH)],
                           axis=0)


def _merge_heads(c):
    """(B*NH, S, HD) f32 -> (N, H) f32."""
    merged = jnp.concatenate([c[h * B:(h + 1) * B] for h in range(NH)], axis=-1)
    return merged.reshape(N, H)


# ---------------- fused forward kernel --------------------------------------
def fused_forward_kernel(x_ref, mask_attn_ref, mask_tok_ref, labels_ref,
                         embg_ref, embb_ref,
                         wqkv_ref, bqkv_ref, wo_ref, bo_ref,
                         ln1g_ref, ln1b_ref, w1_ref, b1_ref, w2_ref, b2_ref,
                         ln2g_ref, ln2b_ref, wout_ref, bout_ref,
                         logits_ref, loss_ref):
    # ---- embedding layernorm (bert_drop = Dropout(0.3) -> eval identity) ----
    x = _layernorm(x_ref[...], embg_ref[...], embb_ref[...])        # (N, H) f32

    # ---- attention bias from the mask, computed once for both layers -------
    bias3 = (1.0 - mask_attn_ref[...].astype(jnp.float32)) * -10000.0  # (B,1,S)
    bias_g = jnp.concatenate([bias3] * NH, axis=0)                   # (G,1,S)

    scale = 1.0 / (HD ** 0.5)

    # ---- encoder layers (weights resident in VMEM, static unroll) ----------
    for l in range(LAYERS):
        wqkv = wqkv_ref[l]                                           # (H,3H) bf16
        bqkv = bqkv_ref[l]                                           # (1,3H) f32
        wo, bo = wo_ref[l], bo_ref[l]
        w1, b1 = w1_ref[l], b1_ref[l]
        w2, b2 = w2_ref[l], b2_ref[l]

        # fused QKV projection: one (N,H)@(H,3H) matmul, bf16 in / f32 acc
        qkv = jnp.dot(x.astype(jnp.bfloat16), wqkv,
                      preferred_element_type=jnp.float32) + bqkv     # (N, 3H)

        qh = _split_heads(qkv[:, 0 * H:1 * H]).astype(jnp.bfloat16)  # (G,S,HD)
        kh = _split_heads(qkv[:, 1 * H:2 * H]).astype(jnp.bfloat16)
        vh = _split_heads(qkv[:, 2 * H:3 * H]).astype(jnp.bfloat16)

        # batched scores over all (b, h) groups at once
        s = jnp.einsum('gqd,gkd->gqk', qh, kh,
                       preferred_element_type=jnp.float32)           # (G,S,S)
        s = s * scale + bias_g
        s = s - jnp.max(s, axis=-1, keepdims=True)
        p = jnp.exp(s)
        p = p * pl.reciprocal(jnp.sum(p, axis=-1, keepdims=True), approx=True)

        ctx = jnp.einsum('gqk,gkd->gqd', p.astype(jnp.bfloat16), vh,
                         preferred_element_type=jnp.float32)         # (G,S,HD)
        ctx = _merge_heads(ctx)                                      # (N, H)

        attn = jnp.dot(ctx.astype(jnp.bfloat16), wo,
                       preferred_element_type=jnp.float32) + bo
        h1 = _layernorm(x + attn, ln1g_ref[l], ln1b_ref[l])

        ff = jnp.dot(h1.astype(jnp.bfloat16), w1,
                     preferred_element_type=jnp.float32) + b1
        # TODO(synk): BERT uses exact erf-GELU; tanh approximation used for clean TPU lowering.
        ff = jax.nn.gelu(ff, approximate=True)
        ff = jnp.dot(ff.astype(jnp.bfloat16), w2,
                     preferred_element_type=jnp.float32) + b2
        x = _layernorm(h1 + ff, ln2g_ref[l], ln2b_ref[l])

    # ---- tag head (lane-padded to 128) + masked cross-entropy ---------------
    logits = jnp.dot(x.astype(jnp.bfloat16), wout_ref[...],
                     preferred_element_type=jnp.float32) + bout_ref[...]
    logits_ref[...] = logits                                         # (N, TAG_PAD)

    col = jax.lax.broadcasted_iota(jnp.int32, (N, TAG_PAD), 1)
    valid_cls = col < NUM_TAG
    ml = jnp.where(valid_cls, logits, -1e30)
    m = jnp.max(ml, axis=-1, keepdims=True)
    lse = m + jnp.log(jnp.sum(jnp.exp(ml - m), axis=-1, keepdims=True))

    labels = labels_ref[...]                                         # (N,1) int32
    onehot = (col == labels) & valid_cls
    lab_logit = jnp.sum(jnp.where(onehot, logits, 0.0), axis=-1, keepdims=True)
    per_tok = lse - lab_logit                                        # (N,1)

    # CrossEntropyLoss with ignore_index on inactive (mask==0) tokens:
    # mean over active tokens only.
    active = (mask_tok_ref[...] == 1).astype(jnp.float32)            # (N,1)
    total = jnp.sum(per_tok * active)
    count = jnp.maximum(jnp.sum(active), 1.0)
    loss_ref[0, 0] = total / count


def fused_forward_call(x, mask_attn, mask_tok, labels, p):
    args = (x, mask_attn, mask_tok, labels,
            p["emb_ln_g"], p["emb_ln_b"],
            p["wqkv"], p["bqkv"], p["wo"], p["bo"],
            p["ln1g"], p["ln1b"], p["w1"], p["b1"], p["w2"], p["b2"],
            p["ln2g"], p["ln2b"], p["w_out"], p["b_out"])
    return pl.pallas_call(
        fused_forward_kernel,
        out_shape=(jax.ShapeDtypeStruct((N, TAG_PAD), jnp.float32),
                   jax.ShapeDtypeStruct((1, 1), jnp.float32)),
        in_specs=[pl.BlockSpec(memory_space=VMEM)] * len(args),
        out_specs=(pl.BlockSpec(memory_space=VMEM),
                   pl.BlockSpec(memory_space=SMEM)),
    )(*args)


# ---------------- parameters & model ----------------------------------------
def init_params(key):
    keys = iter(jax.random.split(key, 64))

    def nrm(shape):
        return 0.02 * jax.random.normal(next(keys), shape, jnp.float32)

    p = {
        "word_emb": nrm((VOCAB, H)),
        "pos_emb": nrm((MAX_POS, H)),
        "type_emb": nrm((2, H)),
        "emb_ln_g": jnp.ones((1, H), jnp.float32),
        "emb_ln_b": jnp.zeros((1, H), jnp.float32),
    }
    wqkv, wo, w1, w2 = [], [], [], []
    for _ in range(LAYERS):
        wqkv.append(jnp.concatenate([nrm((H, H)) for _ in range(3)], axis=1))
        wo.append(nrm((H, H)))
        w1.append(nrm((H, INTER)))
        w2.append(nrm((INTER, H)))
    # matmul weights kept in bf16 (f32 accumulate in-kernel); LN/bias stay f32
    p["wqkv"] = jnp.stack(wqkv).astype(jnp.bfloat16)        # (L, H, 3H)
    p["bqkv"] = jnp.zeros((LAYERS, 1, 3 * H), jnp.float32)
    p["wo"] = jnp.stack(wo).astype(jnp.bfloat16)            # (L, H, H)
    p["bo"] = jnp.zeros((LAYERS, 1, H), jnp.float32)
    p["ln1g"] = jnp.ones((LAYERS, 1, H), jnp.float32)
    p["ln1b"] = jnp.zeros((LAYERS, 1, H), jnp.float32)
    p["w1"] = jnp.stack(w1).astype(jnp.bfloat16)            # (L, H, INTER)
    p["b1"] = jnp.zeros((LAYERS, 1, INTER), jnp.float32)
    p["w2"] = jnp.stack(w2).astype(jnp.bfloat16)            # (L, INTER, H)
    p["b2"] = jnp.zeros((LAYERS, 1, H), jnp.float32)
    p["ln2g"] = jnp.ones((LAYERS, 1, H), jnp.float32)
    p["ln2b"] = jnp.zeros((LAYERS, 1, H), jnp.float32)
    w_out = nrm((H, NUM_TAG))
    p["w_out"] = (jnp.zeros((H, TAG_PAD), jnp.float32)
                  .at[:, :NUM_TAG].set(w_out).astype(jnp.bfloat16))
    p["b_out"] = jnp.zeros((1, TAG_PAD), jnp.float32)
    return p


def entity_model_forward(params, ids, mask, token_type_ids, target_tag):
    # --- embeddings (gather = plain-JAX glue) ---
    pos_ids = jnp.arange(S)
    emb = (params["word_emb"][ids]
           + params["pos_emb"][pos_ids][None, :, :]
           + params["type_emb"][token_type_ids])                     # (B, S, H)
    x = emb.reshape(N, H).astype(jnp.float32)

    mask_attn = mask.reshape(B, 1, S).astype(jnp.int32)              # attention mask
    mask_tok = mask.reshape(N, 1).astype(jnp.int32)                  # loss mask
    labels = target_tag.reshape(N, 1).astype(jnp.int32)

    # TODO(synk): on v7x a grid=(B,) "parallel" axis would shard across both
    # TensorCores; at B=2/S=16 the fused single-call kernel is dispatch-bound,
    # so no grid is used.
    logits_pad, loss = fused_forward_call(x, mask_attn, mask_tok, labels, params)

    tag = logits_pad.reshape(B, S, TAG_PAD)[:, :, :NUM_TAG]          # (B, S, num_tag)
    return tag, loss[0, 0]


# ---------------- main -------------------------------------------------------
if __name__ == "__main__":
    key = jax.random.PRNGKey(0)
    kp, kids, ktag = jax.random.split(key, 3)

    params = init_params(kp)

    ids = jax.random.randint(kids, (B, S), 0, VOCAB, dtype=jnp.int32)
    token_type_ids = jnp.zeros((B, S), jnp.int32)
    mask = jnp.ones((B, S), jnp.int32).at[1, 12:].set(0)             # some padding
    target_tag = jax.random.randint(ktag, (B, S), 0, NUM_TAG, dtype=jnp.int32)

    forward = jax.jit(entity_model_forward)
    tag, loss = forward(params, ids, mask, token_type_ids, target_tag)
    tag = jax.block_until_ready(tag)
    loss = jax.block_until_ready(loss)

    assert tag.shape == (B, S, NUM_TAG)
    assert jnp.isfinite(loss)
    print("KERNEL_OK")
</pallas_src>

<mosaic_0001>
module attributes {stable_mosaic.version = 11 : i64} {
  func.func @fused_forward_kernel(%arg0: memref<32x128xf32, #tpu.memory_space<vmem>>, %arg1: memref<2x1x16xi32, #tpu.memory_space<vmem>>, %arg2: memref<32x1xi32, #tpu.memory_space<vmem>>, %arg3: memref<32x1xi32, #tpu.memory_space<vmem>>, %arg4: memref<1x128xf32, #tpu.memory_space<vmem>>, %arg5: memref<1x128xf32, #tpu.memory_space<vmem>>, %arg6: memref<2x128x384xbf16, #tpu.memory_space<vmem>>, %arg7: memref<2x1x384xf32, #tpu.memory_space<vmem>>, %arg8: memref<2x128x128xbf16, #tpu.memory_space<vmem>>, %arg9: memref<2x1x128xf32, #tpu.memory_space<vmem>>, %arg10: memref<2x1x128xf32, #tpu.memory_space<vmem>>, %arg11: memref<2x1x128xf32, #tpu.memory_space<vmem>>, %arg12: memref<2x128x256xbf16, #tpu.memory_space<vmem>>, %arg13: memref<2x1x256xf32, #tpu.memory_space<vmem>>, %arg14: memref<2x256x128xbf16, #tpu.memory_space<vmem>>, %arg15: memref<2x1x128xf32, #tpu.memory_space<vmem>>, %arg16: memref<2x1x128xf32, #tpu.memory_space<vmem>>, %arg17: memref<2x1x128xf32, #tpu.memory_space<vmem>>, %arg18: memref<128x128xbf16, #tpu.memory_space<vmem>>, %arg19: memref<1x128xf32, #tpu.memory_space<vmem>>, %arg20: memref<32x128xf32, #tpu.memory_space<vmem>>, %arg21: memref<1x1xf32, #tpu.memory_space<smem>>) attributes {dimension_semantics = [], scalar_prefetch = 0 : i64, scratch_operands = 0 : i64, tpu.core_type = #tpu.core_type<tc>} {
    %c0 = arith.constant 0 : index
    %c0_0 = arith.constant 0 : index
    %0 = vector.load %arg0[%c0, %c0_0] : memref<32x128xf32, #tpu.memory_space<vmem>>, vector<32x128xf32>
    %c0_1 = arith.constant 0 : index
    %c0_2 = arith.constant 0 : index
    %1 = vector.load %arg4[%c0_1, %c0_2] : memref<1x128xf32, #tpu.memory_space<vmem>>, vector<1x128xf32>
    %c0_3 = arith.constant 0 : index
    %c0_4 = arith.constant 0 : index
    %2 = vector.load %arg5[%c0_3, %c0_4] : memref<1x128xf32, #tpu.memory_space<vmem>>, vector<1x128xf32>
    %cst = arith.constant dense<0.000000e+00> : vector<32xf32>
    %3 = vector.multi_reduction <add>, %0, %cst [1] : vector<32x128xf32> to vector<32xf32>
    %4 = vector.shape_cast %3 : vector<32xf32> to vector<32x1xf32>
    %cst_5 = arith.constant 1.280000e+02 : f32
    %5 = vector.broadcast %cst_5 : f32 to vector<32x1xf32>
    %6 = arith.divf %4, %5 : vector<32x1xf32>
    %7 = vector.broadcast %6 : vector<32x1xf32> to vector<32x128xf32>
    %8 = arith.subf %0, %7 : vector<32x128xf32>
    %9 = arith.mulf %8, %8 : vector<32x128xf32>
    %cst_6 = arith.constant dense<0.000000e+00> : vector<32xf32>
    %10 = vector.multi_reduction <add>, %9, %cst_6 [1] : vector<32x128xf32> to vector<32xf32>
    %11 = vector.shape_cast %10 : vector<32xf32> to vector<32x1xf32>
    %cst_7 = arith.constant 1.280000e+02 : f32
    %12 = vector.broadcast %cst_7 : f32 to vector<32x1xf32>
    %13 = arith.divf %11, %12 : vector<32x1xf32>
    %14 = vector.broadcast %6 : vector<32x1xf32> to vector<32x128xf32>
    %15 = arith.subf %0, %14 : vector<32x128xf32>
    %cst_8 = arith.constant 9.99999996E-13 : f32
    %16 = vector.broadcast %cst_8 : f32 to vector<32x1xf32>
    %17 = arith.addf %13, %16 : vector<32x1xf32>
    %18 = math.rsqrt %17 : vector<32x1xf32>
    %19 = vector.broadcast %18 : vector<32x1xf32> to vector<32x128xf32>
    %20 = arith.mulf %15, %19 : vector<32x128xf32>
    %21 = vector.broadcast %1 : vector<1x128xf32> to vector<32x128xf32>
    %22 = arith.mulf %20, %21 : vector<32x128xf32>
    %23 = vector.broadcast %2 : vector<1x128xf32> to vector<32x128xf32>
    %24 = arith.addf %22, %23 : vector<32x128xf32>
    %c0_9 = arith.constant 0 : index
    %c0_10 = arith.constant 0 : index
    %c0_11 = arith.constant 0 : index
    %25 = vector.load %arg1[%c0_9, %c0_10, %c0_11] : memref<2x1x16xi32, #tpu.memory_space<vmem>>, vector<2x1x16xi32>
    %26 = arith.sitofp %25 : vector<2x1x16xi32> to vector<2x1x16xf32>
    %cst_12 = arith.constant 1.000000e+00 : f32
    %27 = vector.broadcast %cst_12 : f32 to vector<2x1x16xf32>
    %28 = arith.subf %27, %26 : vector<2x1x16xf32>
    %cst_13 = arith.constant -1.000000e+04 : f32
    %29 = vector.broadcast %cst_13 : f32 to vector<2x1x16xf32>
    %30 = arith.mulf %28, %29 : vector<2x1x16xf32>
    %31 = tpu.concatenate %30, %30 in 0 : vector<2x1x16xf32>, vector<2x1x16xf32> -> vector<4x1x16xf32>
    %c0_14 = arith.constant 0 : index
    %c0_15 = arith.constant 0 : index
    %c0_16 = arith.constant 0 : index
    %32 = vector.load %arg6[%c0_14, %c0_15, %c0_16] : memref<2x128x384xbf16, #tpu.memory_space<vmem>>, vector<1x128x384xbf16>
    %33 = vector.shape_cast %32 : vector<1x128x384xbf16> to vector<128x384xbf16>
    %c0_17 = arith.constant 0 : index
    %c0_18 = arith.constant 0 : index
    %c0_19 = arith.constant 0 : index
    %34 = vector.load %arg7[%c0_17, %c0_18, %c0_19] : memref<2x1x384xf32, #tpu.memory_space<vmem>>, vector<1x1x384xf32>
    %35 = vector.shape_cast %34 : vector<1x1x384xf32> to vector<1x384xf32>
    %c0_20 = arith.constant 0 : index
    %c0_21 = arith.constant 0 : index
    %c0_22 = arith.constant 0 : index
    %36 = vector.load %arg8[%c0_20, %c0_21, %c0_22] : memref<2x128x128xbf16, #tpu.memory_space<vmem>>, vector<1x128x128xbf16>
    %37 = vector.shape_cast %36 : vector<1x128x128xbf16> to vector<128x128xbf16>
    %c0_23 = arith.constant 0 : index
    %c0_24 = arith.constant 0 : index
    %c0_25 = arith.constant 0 : index
    %38 = vector.load %arg9[%c0_23, %c0_24, %c0_25] : memref<2x1x128xf32, #tpu.memory_space<vmem>>, vector<1x1x128xf32>
    %39 = vector.shape_cast %38 : vector<1x1x128xf32> to vector<1x128xf32>
    %c0_26 = arith.constant 0 : index
    %c0_27 = arith.constant 0 : index
    %c0_28 = arith.constant 0 : index
    %40 = vector.load %arg12[%c0_26, %c0_27, %c0_28] : memref<2x128x256xbf16, #tpu.memory_space<vmem>>, vector<1x128x256xbf16>
    %41 = vector.shape_cast %40 : vector<1x128x256xbf16> to vector<128x256xbf16>
    %c0_29 = arith.constant 0 : index
    %c0_30 = arith.constant 0 : index
    %c0_31 = arith.constant 0 : index
    %42 = vector.load %arg13[%c0_29, %c0_30, %c0_31] : memref<2x1x256xf32, #tpu.memory_space<vmem>>, vector<1x1x256xf32>
    %43 = vector.shape_cast %42 : vector<1x1x256xf32> to vector<1x256xf32>
    %c0_32 = arith.constant 0 : index
    %c0_33 = arith.constant 0 : index
    %c0_34 = arith.constant 0 : index
    %44 = vector.load %arg14[%c0_32, %c0_33, %c0_34] : memref<2x256x128xbf16, #tpu.memory_space<vmem>>, vector<1x256x128xbf16>
    %45 = vector.shape_cast %44 : vector<1x256x128xbf16> to vector<256x128xbf16>
    %c0_35 = arith.constant 0 : index
    %c0_36 = arith.constant 0 : index
    %c0_37 = arith.constant 0 : index
    %46 = vector.load %arg15[%c0_35, %c0_36, %c0_37] : memref<2x1x128xf32, #tpu.memory_space<vmem>>, vector<1x1x128xf32>
    %47 = vector.shape_cast %46 : vector<1x1x128xf32> to vector<1x128xf32>
    %48 = arith.truncf %24 : vector<32x128xf32> to vector<32x128xbf16>
    %cst_38 = arith.constant dense<0.000000e+00> : vector<32x384xf32>
    %49 = tpu.matmul %48, %33, %cst_38 {dimension_numbers = #tpu.dot_dimension_numbers<[1], [0], [0], [1], [0, 0, 1, 1], [], []>} : vector<32x128xbf16>, vector<128x384xbf16>, vector<32x384xf32> -> vector<32x384xf32>
    %50 = vector.broadcast %35 : vector<1x384xf32> to vector<32x384xf32>
    %51 = arith.addf %49, %50 : vector<32x384xf32>
    %52 = vector.extract_strided_slice %51 {offsets = [0, 0], sizes = [32, 128], strides = [1, 1]} : vector<32x384xf32> to vector<32x128xf32>
    %53 = vector.shape_cast %52 : vector<32x128xf32> to vector<2x16x128xf32>
    %54 = vector.extract_strided_slice %53 {offsets = [0, 0, 0], sizes = [2, 16, 64], strides = [1, 1, 1]} : vector<2x16x128xf32> to vector<2x16x64xf32>
    %55 = vector.extract_strided_slice %53 {offsets = [0, 0, 64], sizes = [2, 16, 64], strides = [1, 1, 1]} : vector<2x16x128xf32> to vector<2x16x64xf32>
    %56 = tpu.concatenate %54, %55 in 0 : vector<2x16x64xf32>, vector<2x16x64xf32> -> vector<4x16x64xf32>
    %57 = arith.truncf %56 : vector<4x16x64xf32> to vector<4x16x64xbf16>
    %58 = vector.extract_strided_slice %51 {offsets = [0, 128], sizes = [32, 128], strides = [1, 1]} : vector<32x384xf32> to vector<32x128xf32>
    %59 = vector.shape_cast %58 : vector<32x128xf32> to vector<2x16x128xf32>
    %60 = vector.extract_strided_slice %59 {offsets = [0, 0, 0], sizes = [2, 16, 64], strides = [1, 1, 1]} : vector<2x16x128xf32> to vector<2x16x64xf32>
    %61 = vector.extract_strided_slice %59 {offsets = [0, 0, 64], sizes = [2, 16, 64], strides = [1, 1, 1]} : vector<2x16x128xf32> to vector<2x16x64xf32>
    %62 = tpu.concatenate %60, %61 in 0 : vector<2x16x64xf32>, vector<2x16x64xf32> -> vector<4x16x64xf32>
    %63 = arith.truncf %62 : vector<4x16x64xf32> to vector<4x16x64xbf16>
    %64 = vector.extract_strided_slice %51 {offsets = [0, 256], sizes = [32, 128], strides = [1, 1]} : vector<32x384xf32> to vector<32x128xf32>
    %65 = vector.shape_cast %64 : vector<32x128xf32> to vector<2x16x128xf32>
    %66 = vector.extract_strided_slice %65 {offsets = [0, 0, 0], sizes = [2, 16, 64], strides = [1, 1, 1]} : vector<2x16x128xf32> to vector<2x16x64xf32>
    %67 = vector.extract_strided_slice %65 {offsets = [0, 0, 64], sizes = [2, 16, 64], strides = [1, 1, 1]} : vector<2x16x128xf32> to vector<2x16x64xf32>
    %68 = tpu.concatenate %66, %67 in 0 : vector<2x16x64xf32>, vector<2x16x64xf32> -> vector<4x16x64xf32>
    %69 = arith.truncf %68 : vector<4x16x64xf32> to vector<4x16x64xbf16>
    "tpu.trace_start"() <{level = 10 : i32, message = "gqd,gkd->gqk"}> : () -> ()
    %cst_39 = arith.constant dense<0.000000e+00> : vector<4x16x16xf32>
    %70 = tpu.matmul %57, %63, %cst_39 {dimension_numbers = #tpu.dot_dimension_numbers<[2], [2], [1], [1], [0, 0, 0, 1, 1, 1], [0], [0]>} : vector<4x16x64xbf16>, vector<4x16x64xbf16>, vector<4x16x16xf32> -> vector<4x16x16xf32>
    "tpu.trace_stop"() : () -> ()
    %cst_40 = arith.constant 1.250000e-01 : f32
    %71 = vector.broadcast %cst_40 : f32 to vector<4x16x16xf32>
    %72 = arith.mulf %70, %71 : vector<4x16x16xf32>
    %73 = vector.broadcast %31 : vector<4x1x16xf32> to vector<4x16x16xf32>
    %74 = arith.addf %72, %73 : vector<4x16x16xf32>
    %cst_41 = arith.constant dense<0xFF800000> : vector<4x16xf32>
    %75 = vector.multi_reduction <maximumf>, %74, %cst_41 [2] : vector<4x16x16xf32> to vector<4x16xf32>
    %76 = vector.shape_cast %75 : vector<4x16xf32> to vector<4x16x1xf32>
    %77 = vector.broadcast %76 : vector<4x16x1xf32> to vector<4x16x16xf32>
    %78 = arith.subf %74, %77 : vector<4x16x16xf32>
    %79 = math.exp %78 : vector<4x16x16xf32>
    %cst_42 = arith.constant dense<0.000000e+00> : vector<4x16xf32>
    %80 = vector.multi_reduction <add>, %79, %cst_42 [2] : vector<4x16x16xf32> to vector<4x16xf32>
    %81 = vector.shape_cast %80 : vector<4x16xf32> to vector<4x16x1xf32>
    %82 = tpu.reciprocal %81 {approx = true} : vector<4x16x1xf32> -> vector<4x16x1xf32>
    %83 = vector.broadcast %82 : vector<4x16x1xf32> to vector<4x16x16xf32>
    %84 = arith.mulf %79, %83 : vector<4x16x16xf32>
    %85 = arith.truncf %84 : vector<4x16x16xf32> to vector<4x16x16xbf16>
    "tpu.trace_start"() <{level = 10 : i32, message = "gqk,gkd->gqd"}> : () -> ()
    %cst_43 = arith.constant dense<0.000000e+00> : vector<4x16x64xf32>
    %86 = tpu.matmul %85, %69, %cst_43 {dimension_numbers = #tpu.dot_dimension_numbers<[2], [1], [1], [2], [0, 0, 0, 1, 1, 2], [0], [0]>} : vector<4x16x16xbf16>, vector<4x16x64xbf16>, vector<4x16x64xf32> -> vector<4x16x64xf32>
    "tpu.trace_stop"() : () -> ()
    %87 = vector.extract_strided_slice %86 {offsets = [0, 0, 0], sizes = [2, 16, 64], strides = [1, 1, 1]} : vector<4x16x64xf32> to vector<2x16x64xf32>
    %88 = vector.extract_strided_slice %86 {offsets = [2, 0, 0], sizes = [2, 16, 64], strides = [1, 1, 1]} : vector<4x16x64xf32> to vector<2x16x64xf32>
    %89 = tpu.concatenate %87, %88 in 2 : vector<2x16x64xf32>, vector<2x16x64xf32> -> vector<2x16x128xf32>
    %90 = vector.shape_cast %89 : vector<2x16x128xf32> to vector<32x128xf32>
    %91 = arith.truncf %90 : vector<32x128xf32> to vector<32x128xbf16>
    %cst_44 = arith.constant dense<0.000000e+00> : vector<32x128xf32>
    %92 = tpu.matmul %91, %37, %cst_44 {dimension_numbers = #tpu.dot_dimension_numbers<[1], [0], [0], [1], [0, 0, 1, 1], [], []>} : vector<32x128xbf16>, vector<128x128xbf16>, vector<32x128xf32> -> vector<32x128xf32>
    %93 = vector.broadcast %39 : vector<1x128xf32> to vector<32x128xf32>
    %94 = arith.addf %92, %93 : vector<32x128xf32>
    %95 = arith.addf %24, %94 : vector<32x128xf32>
    %c0_45 = arith.constant 0 : index
    %c0_46 = arith.constant 0 : index
    %c0_47 = arith.constant 0 : index
    %96 = vector.load %arg10[%c0_45, %c0_46, %c0_47] : memref<2x1x128xf32, #tpu.memory_space<vmem>>, vector<1x1x128xf32>
    %97 = vector.shape_cast %96 : vector<1x1x128xf32> to vector<1x128xf32>
    %c0_48 = arith.constant 0 : index
    %c0_49 = arith.constant 0 : index
    %c0_50 = arith.constant 0 : index
    %98 = vector.load %arg11[%c0_48, %c0_49, %c0_50] : memref<2x1x128xf32, #tpu.memory_space<vmem>>, vector<1x1x128xf32>
    %99 = vector.shape_cast %98 : vector<1x1x128xf32> to vector<1x128xf32>
    %cst_51 = arith.constant dense<0.000000e+00> : vector<32xf32>
    %100 = vector.multi_reduction <add>, %95, %cst_51 [1] : vector<32x128xf32> to vector<32xf32>
    %101 = vector.shape_cast %100 : vector<32xf32> to vector<32x1xf32>
    %cst_52 = arith.constant 1.280000e+02 : f32
    %102 = vector.broadcast %cst_52 : f32 to vector<32x1xf32>
    %103 = arith.divf %101, %102 : vector<32x1xf32>
    %104 = vector.broadcast %103 : vector<32x1xf32> to vector<32x128xf32>
    %105 = arith.subf %95, %104 : vector<32x128xf32>
    %106 = arith.mulf %105, %105 : vector<32x128xf32>
    %cst_53 = arith.constant dense<0.000000e+00> : vector<32xf32>
    %107 = vector.multi_reduction <add>, %106, %cst_53 [1] : vector<32x128xf32> to vector<32xf32>
    %108 = vector.shape_cast %107 : vector<32xf32> to vector<32x1xf32>
    %cst_54 = arith.constant 1.280000e+02 : f32
    %109 = vector.broadcast %cst_54 : f32 to vector<32x1xf32>
    %110 = arith.divf %108, %109 : vector<32x1xf32>
    %111 = vector.broadcast %103 : vector<32x1xf32> to vector<32x128xf32>
    %112 = arith.subf %95, %111 : vector<32x128xf32>
    %cst_55 = arith.constant 9.99999996E-13 : f32
    %113 = vector.broadcast %cst_55 : f32 to vector<32x1xf32>
    %114 = arith.addf %110, %113 : vector<32x1xf32>
    %115 = math.rsqrt %114 : vector<32x1xf32>
    %116 = vector.broadcast %115 : vector<32x1xf32> to vector<32x128xf32>
    %117 = arith.mulf %112, %116 : vector<32x128xf32>
    %118 = vector.broadcast %97 : vector<1x128xf32> to vector<32x128xf32>
    %119 = arith.mulf %117, %118 : vector<32x128xf32>
    %120 = vector.broadcast %99 : vector<1x128xf32> to vector<32x128xf32>
    %121 = arith.addf %119, %120 : vector<32x128xf32>
    %122 = arith.truncf %121 : vector<32x128xf32> to vector<32x128xbf16>
    %cst_56 = arith.constant dense<0.000000e+00> : vector<32x256xf32>
    %123 = tpu.matmul %122, %41, %cst_56 {dimension_numbers = #tpu.dot_dimension_numbers<[1], [0], [0], [1], [0, 0, 1, 1], [], []>} : vector<32x128xbf16>, vector<128x256xbf16>, vector<32x256xf32> -> vector<32x256xf32>
    %124 = vector.broadcast %43 : vector<1x256xf32> to vector<32x256xf32>
    %125 = arith.addf %123, %124 : vector<32x256xf32>
    %126 = arith.mulf %125, %125 : vector<32x256xf32>
    %127 = arith.mulf %125, %126 : vector<32x256xf32>
    %cst_57 = arith.constant 4.471500e-02 : f32
    %128 = vector.broadcast %cst_57 : f32 to vector<32x256xf32>
    %129 = arith.mulf %128, %127 : vector<32x256xf32>
    %130 = arith.addf %125, %129 : vector<32x256xf32>
    %cst_58 = arith.constant 0.797884583 : f32
    %131 = vector.broadcast %cst_58 : f32 to vector<32x256xf32>
    %132 = arith.mulf %131, %130 : vector<32x256xf32>
    %133 = math.tanh %132 : vector<32x256xf32>
    %cst_59 = arith.constant 1.000000e+00 : f32
    %134 = vector.broadcast %cst_59 : f32 to vector<32x256xf32>
    %135 = arith.addf %134, %133 : vector<32x256xf32>
    %cst_60 = arith.constant 5.000000e-01 : f32
    %136 = vector.broadcast %cst_60 : f32 to vector<32x256xf32>
    %137 = arith.mulf %136, %135 : vector<32x256xf32>
    %138 = arith.mulf %125, %137 : vector<32x256xf32>
    %139 = arith.truncf %138 : vector<32x256xf32> to vector<32x256xbf16>
    %cst_61 = arith.constant dense<0.000000e+00> : vector<32x128xf32>
    %140 = tpu.matmul %139, %45, %cst_61 {dimension_numbers = #tpu.dot_dimension_numbers<[1], [0], [0], [1], [0, 0, 1, 1], [], []>} : vector<32x256xbf16>, vector<256x128xbf16>, vector<32x128xf32> -> vector<32x128xf32>
    %141 = vector.broadcast %47 : vector<1x128xf32> to vector<32x128xf32>
    %142 = arith.addf %140, %141 : vector<32x128xf32>
    %143 = arith.addf %121, %142 : vector<32x128xf32>
    %c0_62 = arith.constant 0 : index
    %c0_63 = arith.constant 0 : index
    %c0_64 = arith.constant 0 : index
    %144 = vector.load %arg16[%c0_62, %c0_63, %c0_64] : memref<2x1x128xf32, #tpu.memory_space<vmem>>, vector<1x1x128xf32>
    %145 = vector.shape_cast %144 : vector<1x1x128xf32> to vector<1x128xf32>
    %c0_65 = arith.constant 0 : index
    %c0_66 = arith.constant 0 : index
    %c0_67 = arith.constant 0 : index
    %146 = vector.load %arg17[%c0_65, %c0_66, %c0_67] : memref<2x1x128xf32, #tpu.memory_space<vmem>>, vector<1x1x128xf32>
    %147 = vector.shape_cast %146 : vector<1x1x128xf32> to vector<1x128xf32>
    %cst_68 = arith.constant dense<0.000000e+00> : vector<32xf32>
    %148 = vector.multi_reduction <add>, %143, %cst_68 [1] : vector<32x128xf32> to vector<32xf32>
    %149 = vector.shape_cast %148 : vector<32xf32> to vector<32x1xf32>
    %cst_69 = arith.constant 1.280000e+02 : f32
    %150 = vector.broadcast %cst_69 : f32 to vector<32x1xf32>
    %151 = arith.divf %149, %150 : vector<32x1xf32>
    %152 = vector.broadcast %151 : vector<32x1xf32> to vector<32x128xf32>
    %153 = arith.subf %143, %152 : vector<32x128xf32>
    %154 = arith.mulf %153, %153 : vector<32x128xf32>
    %cst_70 = arith.constant dense<0.000000e+00> : vector<32xf32>
    %155 = vector.multi_reduction <add>, %154, %cst_70 [1] : vector<32x128xf32> to vector<32xf32>
    %156 = vector.shape_cast %155 : vector<32xf32> to vector<32x1xf32>
    %cst_71 = arith.constant 1.280000e+02 : f32
    %157 = vector.broadcast %cst_71 : f32 to vector<32x1xf32>
    %158 = arith.divf %156, %157 : vector<32x1xf32>
    %159 = vector.broadcast %151 : vector<32x1xf32> to vector<32x128xf32>
    %160 = arith.subf %143, %159 : vector<32x128xf32>
    %cst_72 = arith.constant 9.99999996E-13 : f32
    %161 = vector.broadcast %cst_72 : f32 to vector<32x1xf32>
    %162 = arith.addf %158, %161 : vector<32x1xf32>
    %163 = math.rsqrt %162 : vector<32x1xf32>
    %164 = vector.broadcast %163 : vector<32x1xf32> to vector<32x128xf32>
    %165 = arith.mulf %160, %164 : vector<32x128xf32>
    %166 = vector.broadcast %145 : vector<1x128xf32> to vector<32x128xf32>
    %167 = arith.mulf %165, %166 : vector<32x128xf32>
    %168 = vector.broadcast %147 : vector<1x128xf32> to vector<32x128xf32>
    %169 = arith.addf %167, %168 : vector<32x128xf32>
    %c1 = arith.constant 1 : index
    %c0_73 = arith.constant 0 : index
    %c0_74 = arith.constant 0 : index
    %170 = vector.load %arg6[%c1, %c0_73, %c0_74] : memref<2x128x384xbf16, #tpu.memory_space<vmem>>, vector<1x128x384xbf16>
    %171 = vector.shape_cast %170 : vector<1x128x384xbf16> to vector<128x384xbf16>
    %c1_75 = arith.constant 1 : index
    %c0_76 = arith.constant 0 : index
    %c0_77 = arith.constant 0 : index
    %172 = vector.load %arg7[%c1_75, %c0_76, %c0_77] : memref<2x1x384xf32, #tpu.memory_space<vmem>>, vector<1x1x384xf32>
    %173 = vector.shape_cast %172 : vector<1x1x384xf32> to vector<1x384xf32>
    %c1_78 = arith.constant 1 : index
    %c0_79 = arith.constant 0 : index
    %c0_80 = arith.constant 0 : index
    %174 = vector.load %arg8[%c1_78, %c0_79, %c0_80] : memref<2x128x128xbf16, #tpu.memory_space<vmem>>, vector<1x128x128xbf16>
    %175 = vector.shape_cast %174 : vector<1x128x128xbf16> to vector<128x128xbf16>
    %c1_81 = arith.constant 1 : index
    %c0_82 = arith.constant 0 : index
    %c0_83 = arith.constant 0 : index
    %176 = vector.load %arg9[%c1_81, %c0_82, %c0_83] : memref<2x1x128xf32, #tpu.memory_space<vmem>>, vector<1x1x128xf32>
    %177 = vector.shape_cast %176 : vector<1x1x128xf32> to vector<1x128xf32>
    %c1_84 = arith.constant 1 : index
    %c0_85 = arith.constant 0 : index
    %c0_86 = arith.constant 0 : index
    %178 = vector.load %arg12[%c1_84, %c0_85, %c0_86] : memref<2x128x256xbf16, #tpu.memory_space<vmem>>, vector<1x128x256xbf16>
    %179 = vector.shape_cast %178 : vector<1x128x256xbf16> to vector<128x256xbf16>
    %c1_87 = arith.constant 1 : index
    %c0_88 = arith.constant 0 : index
    %c0_89 = arith.constant 0 : index
    %180 = vector.load %arg13[%c1_87, %c0_88, %c0_89] : memref<2x1x256xf32, #tpu.memory_space<vmem>>, vector<1x1x256xf32>
    %181 = vector.shape_cast %180 : vector<1x1x256xf32> to vector<1x256xf32>
    %c1_90 = arith.constant 1 : index
    %c0_91 = arith.constant 0 : index
    %c0_92 = arith.constant 0 : index
    %182 = vector.load %arg14[%c1_90, %c0_91, %c0_92] : memref<2x256x128xbf16, #tpu.memory_space<vmem>>, vector<1x256x128xbf16>
    %183 = vector.shape_cast %182 : vector<1x256x128xbf16> to vector<256x128xbf16>
    %c1_93 = arith.constant 1 : index
    %c0_94 = arith.constant 0 : index
    %c0_95 = arith.constant 0 : index
    %184 = vector.load %arg15[%c1_93, %c0_94, %c0_95] : memref<2x1x128xf32, #tpu.memory_space<vmem>>, vector<1x1x128xf32>
    %185 = vector.shape_cast %184 : vector<1x1x128xf32> to vector<1x128xf32>
    %186 = arith.truncf %169 : vector<32x128xf32> to vector<32x128xbf16>
    %cst_96 = arith.constant dense<0.000000e+00> : vector<32x384xf32>
    %187 = tpu.matmul %186, %171, %cst_96 {dimension_numbers = #tpu.dot_dimension_numbers<[1], [0], [0], [1], [0, 0, 1, 1], [], []>} : vector<32x128xbf16>, vector<128x384xbf16>, vector<32x384xf32> -> vector<32x384xf32>
    %188 = vector.broadcast %173 : vector<1x384xf32> to vector<32x384xf32>
    %189 = arith.addf %187, %188 : vector<32x384xf32>
    %190 = vector.extract_strided_slice %189 {offsets = [0, 0], sizes = [32, 128], strides = [1, 1]} : vector<32x384xf32> to vector<32x128xf32>
    %191 = vector.shape_cast %190 : vector<32x128xf32> to vector<2x16x128xf32>
    %192 = vector.extract_strided_slice %191 {offsets = [0, 0, 0], sizes = [2, 16, 64], strides = [1, 1, 1]} : vector<2x16x128xf32> to vector<2x16x64xf32>
    %193 = vector.extract_strided_slice %191 {offsets = [0, 0, 64], sizes = [2, 16, 64], strides = [1, 1, 1]} : vector<2x16x128xf32> to vector<2x16x64xf32>
    %194 = tpu.concatenate %192, %193 in 0 : vector<2x16x64xf32>, vector<2x16x64xf32> -> vector<4x16x64xf32>
    %195 = arith.truncf %194 : vector<4x16x64xf32> to vector<4x16x64xbf16>
    %196 = vector.extract_strided_slice %189 {offsets = [0, 128], sizes = [32, 128], strides = [1, 1]} : vector<32x384xf32> to vector<32x128xf32>
    %197 = vector.shape_cast %196 : vector<32x128xf32> to vector<2x16x128xf32>
    %198 = vector.extract_strided_slice %197 {offsets = [0, 0, 0], sizes = [2, 16, 64], strides = [1, 1, 1]} : vector<2x16x128xf32> to vector<2x16x64xf32>
    %199 = vector.extract_strided_slice %197 {offsets = [0, 0, 64], sizes = [2, 16, 64], strides = [1, 1, 1]} : vector<2x16x128xf32> to vector<2x16x64xf32>
    %200 = tpu.concatenate %198, %199 in 0 : vector<2x16x64xf32>, vector<2x16x64xf32> -> vector<4x16x64xf32>
    %201 = arith.truncf %200 : vector<4x16x64xf32> to vector<4x16x64xbf16>
    %202 = vector.extract_strided_slice %189 {offsets = [0, 256], sizes = [32, 128], strides = [1, 1]} : vector<32x384xf32> to vector<32x128xf32>
    %203 = vector.shape_cast %202 : vector<32x128xf32> to vector<2x16x128xf32>
    %204 = vector.extract_strided_slice %203 {offsets = [0, 0, 0], sizes = [2, 16, 64], strides = [1, 1, 1]} : vector<2x16x128xf32> to vector<2x16x64xf32>
    %205 = vector.extract_strided_slice %203 {offsets = [0, 0, 64], sizes = [2, 16, 64], strides = [1, 1, 1]} : vector<2x16x128xf32> to vector<2x16x64xf32>
    %206 = tpu.concatenate %204, %205 in 0 : vector<2x16x64xf32>, vector<2x16x64xf32> -> vector<4x16x64xf32>
    %207 = arith.truncf %206 : vector<4x16x64xf32> to vector<4x16x64xbf16>
    "tpu.trace_start"() <{level = 10 : i32, message = "gqd,gkd->gqk"}> : () -> ()
    %cst_97 = arith.constant dense<0.000000e+00> : vector<4x16x16xf32>
    %208 = tpu.matmul %195, %201, %cst_97 {dimension_numbers = #tpu.dot_dimension_numbers<[2], [2], [1], [1], [0, 0, 0, 1, 1, 1], [0], [0]>} : vector<4x16x64xbf16>, vector<4x16x64xbf16>, vector<4x16x16xf32> -> vector<4x16x16xf32>
    "tpu.trace_stop"() : () -> ()
    %cst_98 = arith.constant 1.250000e-01 : f32
    %209 = vector.broadcast %cst_98 : f32 to vector<4x16x16xf32>
    %210 = arith.mulf %208, %209 : vector<4x16x16xf32>
    %211 = vector.broadcast %31 : vector<4x1x16xf32> to vector<4x16x16xf32>
    %212 = arith.addf %210, %211 : vector<4x16x16xf32>
    %cst_99 = arith.constant dense<0xFF800000> : vector<4x16xf32>
    %213 = vector.multi_reduction <maximumf>, %212, %cst_99 [2] : vector<4x16x16xf32> to vector<4x16xf32>
    %214 = vector.shape_cast %213 : vector<4x16xf32> to vector<4x16x1xf32>
    %215 = vector.broadcast %214 : vector<4x16x1xf32> to vector<4x16x16xf32>
    %216 = arith.subf %212, %215 : vector<4x16x16xf32>
    %217 = math.exp %216 : vector<4x16x16xf32>
    %cst_100 = arith.constant dense<0.000000e+00> : vector<4x16xf32>
    %218 = vector.multi_reduction <add>, %217, %cst_100 [2] : vector<4x16x16xf32> to vector<4x16xf32>
    %219 = vector.shape_cast %218 : vector<4x16xf32> to vector<4x16x1xf32>
    %220 = tpu.reciprocal %219 {approx = true} : vector<4x16x1xf32> -> vector<4x16x1xf32>
    %221 = vector.broadcast %220 : vector<4x16x1xf32> to vector<4x16x16xf32>
    %222 = arith.mulf %217, %221 : vector<4x16x16xf32>
    %223 = arith.truncf %222 : vector<4x16x16xf32> to vector<4x16x16xbf16>
    "tpu.trace_start"() <{level = 10 : i32, message = "gqk,gkd->gqd"}> : () -> ()
    %cst_101 = arith.constant dense<0.000000e+00> : vector<4x16x64xf32>
    %224 = tpu.matmul %223, %207, %cst_101 {dimension_numbers = #tpu.dot_dimension_numbers<[2], [1], [1], [2], [0, 0, 0, 1, 1, 2], [0], [0]>} : vector<4x16x16xbf16>, vector<4x16x64xbf16>, vector<4x16x64xf32> -> vector<4x16x64xf32>
    "tpu.trace_stop"() : () -> ()
    %225 = vector.extract_strided_slice %224 {offsets = [0, 0, 0], sizes = [2, 16, 64], strides = [1, 1, 1]} : vector<4x16x64xf32> to vector<2x16x64xf32>
    %226 = vector.extract_strided_slice %224 {offsets = [2, 0, 0], sizes = [2, 16, 64], strides = [1, 1, 1]} : vector<4x16x64xf32> to vector<2x16x64xf32>
    %227 = tpu.concatenate %225, %226 in 2 : vector<2x16x64xf32>, vector<2x16x64xf32> -> vector<2x16x128xf32>
    %228 = vector.shape_cast %227 : vector<2x16x128xf32> to vector<32x128xf32>
    %229 = arith.truncf %228 : vector<32x128xf32> to vector<32x128xbf16>
    %cst_102 = arith.constant dense<0.000000e+00> : vector<32x128xf32>
    %230 = tpu.matmul %229, %175, %cst_102 {dimension_numbers = #tpu.dot_dimension_numbers<[1], [0], [0], [1], [0, 0, 1, 1], [], []>} : vector<32x128xbf16>, vector<128x128xbf16>, vector<32x128xf32> -> vector<32x128xf32>
    %231 = vector.broadcast %177 : vector<1x128xf32> to vector<32x128xf32>
    %232 = arith.addf %230, %231 : vector<32x128xf32>
    %233 = arith.addf %169, %232 : vector<32x128xf32>
    %c1_103 = arith.constant 1 : index
    %c0_104 = arith.constant 0 : index
    %c0_105 = arith.constant 0 : index
    %234 = vector.load %arg10[%c1_103, %c0_104, %c0_105] : memref<2x1x128xf32, #tpu.memory_space<vmem>>, vector<1x1x128xf32>
    %235 = vector.shape_cast %234 : vector<1x1x128xf32> to vector<1x128xf32>
    %c1_106 = arith.constant 1 : index
    %c0_107 = arith.constant 0 : index
    %c0_108 = arith.constant 0 : index
    %236 = vector.load %arg11[%c1_106, %c0_107, %c0_108] : memref<2x1x128xf32, #tpu.memory_space<vmem>>, vector<1x1x128xf32>
    %237 = vector.shape_cast %236 : vector<1x1x128xf32> to vector<1x128xf32>
    %cst_109 = arith.constant dense<0.000000e+00> : vector<32xf32>
    %238 = vector.multi_reduction <add>, %233, %cst_109 [1] : vector<32x128xf32> to vector<32xf32>
    %239 = vector.shape_cast %238 : vector<32xf32> to vector<32x1xf32>
    %cst_110 = arith.constant 1.280000e+02 : f32
    %240 = vector.broadcast %cst_110 : f32 to vector<32x1xf32>
    %241 = arith.divf %239, %240 : vector<32x1xf32>
    %242 = vector.broadcast %241 : vector<32x1xf32> to vector<32x128xf32>
    %243 = arith.subf %233, %242 : vector<32x128xf32>
    %244 = arith.mulf %243, %243 : vector<32x128xf32>
    %cst_111 = arith.constant dense<0.000000e+00> : vector<32xf32>
    %245 = vector.multi_reduction <add>, %244, %cst_111 [1] : vector<32x128xf32> to vector<32xf32>
    %246 = vector.shape_cast %245 : vector<32xf32> to vector<32x1xf32>
    %cst_112 = arith.constant 1.280000e+02 : f32
    %247 = vector.broadcast %cst_112 : f32 to vector<32x1xf32>
    %248 = arith.divf %246, %247 : vector<32x1xf32>
    %249 = vector.broadcast %241 : vector<32x1xf32> to vector<32x128xf32>
    %250 = arith.subf %233, %249 : vector<32x128xf32>
    %cst_113 = arith.constant 9.99999996E-13 : f32
    %251 = vector.broadcast %cst_113 : f32 to vector<32x1xf32>
    %252 = arith.addf %248, %251 : vector<32x1xf32>
    %253 = math.rsqrt %252 : vector<32x1xf32>
    %254 = vector.broadcast %253 : vector<32x1xf32> to vector<32x128xf32>
    %255 = arith.mulf %250, %254 : vector<32x128xf32>
    %256 = vector.broadcast %235 : vector<1x128xf32> to vector<32x128xf32>
    %257 = arith.mulf %255, %256 : vector<32x128xf32>
    %258 = vector.broadcast %237 : vector<1x128xf32> to vector<32x128xf32>
    %259 = arith.addf %257, %258 : vector<32x128xf32>
    %260 = arith.truncf %259 : vector<32x128xf32> to vector<32x128xbf16>
    %cst_114 = arith.constant dense<0.000000e+00> : vector<32x256xf32>
    %261 = tpu.matmul %260, %179, %cst_114 {dimension_numbers = #tpu.dot_dimension_numbers<[1], [0], [0], [1], [0, 0, 1, 1], [], []>} : vector<32x128xbf16>, vector<128x256xbf16>, vector<32x256xf32> -> vector<32x256xf32>
    %262 = vector.broadcast %181 : vector<1x256xf32> to vector<32x256xf32>
    %263 = arith.addf %261, %262 : vector<32x256xf32>
    %264 = arith.mulf %263, %263 : vector<32x256xf32>
    %265 = arith.mulf %263, %264 : vector<32x256xf32>
    %cst_115 = arith.constant 4.471500e-02 : f32
    %266 = vector.broadcast %cst_115 : f32 to vector<32x256xf32>
    %267 = arith.mulf %266, %265 : vector<32x256xf32>
    %268 = arith.addf %263, %267 : vector<32x256xf32>
    %cst_116 = arith.constant 0.797884583 : f32
    %269 = vector.broadcast %cst_116 : f32 to vector<32x256xf32>
    %270 = arith.mulf %269, %268 : vector<32x256xf32>
    %271 = math.tanh %270 : vector<32x256xf32>
    %cst_117 = arith.constant 1.000000e+00 : f32
    %272 = vector.broadcast %cst_117 : f32 to vector<32x256xf32>
    %273 = arith.addf %272, %271 : vector<32x256xf32>
    %cst_118 = arith.constant 5.000000e-01 : f32
    %274 = vector.broadcast %cst_118 : f32 to vector<32x256xf32>
    %275 = arith.mulf %274, %273 : vector<32x256xf32>
    %276 = arith.mulf %263, %275 : vector<32x256xf32>
    %277 = arith.truncf %276 : vector<32x256xf32> to vector<32x256xbf16>
    %cst_119 = arith.constant dense<0.000000e+00> : vector<32x128xf32>
    %278 = tpu.matmul %277, %183, %cst_119 {dimension_numbers = #tpu.dot_dimension_numbers<[1], [0], [0], [1], [0, 0, 1, 1], [], []>} : vector<32x256xbf16>, vector<256x128xbf16>, vector<32x128xf32> -> vector<32x128xf32>
    %279 = vector.broadcast %185 : vector<1x128xf32> to vector<32x128xf32>
    %280 = arith.addf %278, %279 : vector<32x128xf32>
    %281 = arith.addf %259, %280 : vector<32x128xf32>
    %c1_120 = arith.constant 1 : index
    %c0_121 = arith.constant 0 : index
    %c0_122 = arith.constant 0 : index
    %282 = vector.load %arg16[%c1_120, %c0_121, %c0_122] : memref<2x1x128xf32, #tpu.memory_space<vmem>>, vector<1x1x128xf32>
    %283 = vector.shape_cast %282 : vector<1x1x128xf32> to vector<1x128xf32>
    %c1_123 = arith.constant 1 : index
    %c0_124 = arith.constant 0 : index
    %c0_125 = arith.constant 0 : index
    %284 = vector.load %arg17[%c1_123, %c0_124, %c0_125] : memref<2x1x128xf32, #tpu.memory_space<vmem>>, vector<1x1x128xf32>
    %285 = vector.shape_cast %284 : vector<1x1x128xf32> to vector<1x128xf32>
    %cst_126 = arith.constant dense<0.000000e+00> : vector<32xf32>
    %286 = vector.multi_reduction <add>, %281, %cst_126 [1] : vector<32x128xf32> to vector<32xf32>
    %287 = vector.shape_cast %286 : vector<32xf32> to vector<32x1xf32>
    %cst_127 = arith.constant 1.280000e+02 : f32
    %288 = vector.broadcast %cst_127 : f32 to vector<32x1xf32>
    %289 = arith.divf %287, %288 : vector<32x1xf32>
    %290 = vector.broadcast %289 : vector<32x1xf32> to vector<32x128xf32>
    %291 = arith.subf %281, %290 : vector<32x128xf32>
    %292 = arith.mulf %291, %291 : vector<32x128xf32>
    %cst_128 = arith.constant dense<0.000000e+00> : vector<32xf32>
    %293 = vector.multi_reduction <add>, %292, %cst_128 [1] : vector<32x128xf32> to vector<32xf32>
    %294 = vector.shape_cast %293 : vector<32xf32> to vector<32x1xf32>
    %cst_129 = arith.constant 1.280000e+02 : f32
    %295 = vector.broadcast %cst_129 : f32 to vector<32x1xf32>
    %296 = arith.divf %294, %295 : vector<32x1xf32>
    %297 = vector.broadcast %289 : vector<32x1xf32> to vector<32x128xf32>
    %298 = arith.subf %281, %297 : vector<32x128xf32>
    %cst_130 = arith.constant 9.99999996E-13 : f32
    %299 = vector.broadcast %cst_130 : f32 to vector<32x1xf32>
    %300 = arith.addf %296, %299 : vector<32x1xf32>
    %301 = math.rsqrt %300 : vector<32x1xf32>
    %302 = vector.broadcast %301 : vector<32x1xf32> to vector<32x128xf32>
    %303 = arith.mulf %298, %302 : vector<32x128xf32>
    %304 = vector.broadcast %283 : vector<1x128xf32> to vector<32x128xf32>
    %305 = arith.mulf %303, %304 : vector<32x128xf32>
    %306 = vector.broadcast %285 : vector<1x128xf32> to vector<32x128xf32>
    %307 = arith.addf %305, %306 : vector<32x128xf32>
    %308 = arith.truncf %307 : vector<32x128xf32> to vector<32x128xbf16>
    %c0_131 = arith.constant 0 : index
    %c0_132 = arith.constant 0 : index
    %309 = vector.load %arg18[%c0_131, %c0_132] : memref<128x128xbf16, #tpu.memory_space<vmem>>, vector<128x128xbf16>
    %cst_133 = arith.constant dense<0.000000e+00> : vector<32x128xf32>
    %310 = tpu.matmul %308, %309, %cst_133 {dimension_numbers = #tpu.dot_dimension_numbers<[1], [0], [0], [1], [0, 0, 1, 1], [], []>} : vector<32x128xbf16>, vector<128x128xbf16>, vector<32x128xf32> -> vector<32x128xf32>
    %c0_134 = arith.constant 0 : index
    %c0_135 = arith.constant 0 : index
    %311 = vector.load %arg19[%c0_134, %c0_135] : memref<1x128xf32, #tpu.memory_space<vmem>>, vector<1x128xf32>
    %312 = vector.broadcast %311 : vector<1x128xf32> to vector<32x128xf32>
    %313 = arith.addf %310, %312 : vector<32x128xf32>
    %c0_136 = arith.constant 0 : index
    %c0_137 = arith.constant 0 : index
    %314 = vector.load %arg20[%c0_136, %c0_137] : memref<32x128xf32, #tpu.memory_space<vmem>>, vector<32x128xf32>
    tpu.vector_store %arg20[%c0_136, %c0_137], %313 {strides = array<i32>} : memref<32x128xf32, #tpu.memory_space<vmem>>, vector<32x128xf32>,
    %315 = tpu.iota {dimensions = array<i32: 1>} : vector<32x128xi32>
    %c8_i32 = arith.constant 8 : i32
    %316 = vector.broadcast %c8_i32 : i32 to vector<32x128xi32>
    %317 = arith.cmpi slt, %315, %316 : vector<32x128xi32>
    %cst_138 = arith.constant -1.000000e+30 : f32
    %318 = vector.broadcast %cst_138 : f32 to vector<32x128xf32>
    %319 = arith.select %317, %313, %318 : vector<32x128xi1>, vector<32x128xf32>
    %cst_139 = arith.constant dense<0xFF800000> : vector<32xf32>
    %320 = vector.multi_reduction <maximumf>, %319, %cst_139 [1] : vector<32x128xf32> to vector<32xf32>
    %321 = vector.shape_cast %320 : vector<32xf32> to vector<32x1xf32>
    %322 = vector.broadcast %321 : vector<32x1xf32> to vector<32x128xf32>
    %323 = arith.subf %319, %322 : vector<32x128xf32>
    %324 = math.exp %323 : vector<32x128xf32>
    %cst_140 = arith.constant dense<0.000000e+00> : vector<32xf32>
    %325 = vector.multi_reduction <add>, %324, %cst_140 [1] : vector<32x128xf32> to vector<32xf32>
    %326 = vector.shape_cast %325 : vector<32xf32> to vector<32x1xf32>
    %327 = math.log %326 : vector<32x1xf32>
    %328 = arith.addf %321, %327 : vector<32x1xf32>
    %c0_141 = arith.constant 0 : index
    %c0_142 = arith.constant 0 : index
    %329 = vector.load %arg3[%c0_141, %c0_142] : memref<32x1xi32, #tpu.memory_space<vmem>>, vector<32x1xi32>
    %330 = vector.broadcast %329 : vector<32x1xi32> to vector<32x128xi32>
    %331 = arith.cmpi eq, %315, %330 : vector<32x128xi32>
    %332 = arith.andi %331, %317 : vector<32x128xi1>
    %cst_143 = arith.constant 0.000000e+00 : f32
    %333 = vector.broadcast %cst_143 : f32 to vector<32x128xf32>
    %334 = arith.select %332, %313, %333 : vector<32x128xi1>, vector<32x128xf32>
    %cst_144 = arith.constant dense<0.000000e+00> : vector<32xf32>
    %335 = vector.multi_reduction <add>, %334, %cst_144 [1] : vector<32x128xf32> to vector<32xf32>
    %336 = vector.shape_cast %335 : vector<32xf32> to vector<32x1xf32>
    %337 = arith.subf %328, %336 : vector<32x1xf32>
    %c0_145 = arith.constant 0 : index
    %c0_146 = arith.constant 0 : index
    %338 = vector.load %arg2[%c0_145, %c0_146] : memref<32x1xi32, #tpu.memory_space<vmem>>, vector<32x1xi32>
    %c1_i32 = arith.constant 1 : i32
    %339 = vector.broadcast %c1_i32 : i32 to vector<32x1xi32>
    %340 = arith.cmpi eq, %338, %339 : vector<32x1xi32>
    %341 = arith.extui %340 : vector<32x1xi1> to vector<32x1xi32>
    %342 = arith.sitofp %341 : vector<32x1xi32> to vector<32x1xf32>
    %343 = arith.mulf %337, %342 : vector<32x1xf32>
    %344 = vector.shape_cast %343 : vector<32x1xf32> to vector<1x32x1xf32>
    %cst_147 = arith.constant dense<0.000000e+00> : vector<1xf32>
    %345 = vector.multi_reduction <add>, %344, %cst_147 [1, 2] : vector<1x32x1xf32> to vector<1xf32>
    %346 = vector.shape_cast %345 : vector<1xf32> to vector<1x1x1xf32>
    %347 = vector.extract %346[0, 0, 0] : f32 from vector<1x1x1xf32>
    %348 = vector.shape_cast %342 : vector<32x1xf32> to vector<1x32x1xf32>
    %cst_148 = arith.constant dense<0.000000e+00> : vector<1xf32>
    %349 = vector.multi_reduction <add>, %348, %cst_148 [1, 2] : vector<1x32x1xf32> to vector<1xf32>
    %350 = vector.shape_cast %349 : vector<1xf32> to vector<1x1x1xf32>
    %351 = vector.extract %350[0, 0, 0] : f32 from vector<1x1x1xf32>
    %cst_149 = arith.constant 1.000000e+00 : f32
    %352 = arith.maximumf %351, %cst_149 : f32
    %353 = arith.divf %347, %352 : f32
    %c0_150 = arith.constant 0 : index
    %c0_151 = arith.constant 0 : index
    %354 = memref.load %arg21[%c0_150, %c0_151] : memref<1x1xf32, #tpu.memory_space<smem>>
    memref.store %353, %arg21[%c0_150, %c0_151] : memref<1x1xf32, #tpu.memory_space<smem>>
    return
  }
}

</mosaic_0001>

<llo_original>
// kernel: entity_model_forward.1
$region0: #{entity_model_forward.1}
  #allocation0 [shape = 'u32[]', space=smem, size = 0x4, offset = 0x4, fixed_abs, tag = 'smem constant byte address 0x4 - core index']
  #allocation1 [shape = 'u32[72,128]{1,0:T(1,128)}', space=vmem, size = 0x9000, scoped, tag = 'internal scratch']
  %s0 = inlined_call_operand.vmem [shape: f32[32,128], index: 0, kind: input, shape index: {}]
  %s1 = inlined_call_operand.vmem [shape: s32[2,1,16], index: 1, kind: input, shape index: {}]
  %s2 = inlined_call_operand.vmem [shape: s32[32,1], index: 2, kind: input, shape index: {}]
  %s3 = inlined_call_operand.vmem [shape: s32[32,1], index: 3, kind: input, shape index: {}]
  %s4 = inlined_call_operand.vmem [shape: f32[1,128], index: 4, kind: input, shape index: {}]
  %s5 = inlined_call_operand.vmem [shape: f32[1,128], index: 5, kind: input, shape index: {}]
  %s6 = inlined_call_operand.vmem [shape: bf16[2,128,384], index: 6, kind: input, shape index: {}]
  %s7 = inlined_call_operand.vmem [shape: f32[2,1,384], index: 7, kind: input, shape index: {}]
  %s8 = inlined_call_operand.vmem [shape: bf16[2,128,128], index: 8, kind: input, shape index: {}]
  %s9 = inlined_call_operand.vmem [shape: f32[2,1,128], index: 9, kind: input, shape index: {}]
  %s10 = inlined_call_operand.vmem [shape: f32[2,1,128], index: 10, kind: input, shape index: {}]
  %s11 = inlined_call_operand.vmem [shape: f32[2,1,128], index: 11, kind: input, shape index: {}]
  %s12 = inlined_call_operand.vmem [shape: bf16[2,128,256], index: 12, kind: input, shape index: {}]
  %s13 = inlined_call_operand.vmem [shape: f32[2,1,256], index: 13, kind: input, shape index: {}]
  %s14 = inlined_call_operand.hbm [shape: bf16[2,256,128], index: 14, kind: input, shape index: {}]
  %s15 = inlined_call_operand.vmem [shape: f32[2,1,128], index: 15, kind: input, shape index: {}]
  %s16 = inlined_call_operand.vmem [shape: f32[2,1,128], index: 16, kind: input, shape index: {}]
  %s17 = inlined_call_operand.vmem [shape: f32[2,1,128], index: 17, kind: input, shape index: {}]
  %s18 = inlined_call_operand.vmem [shape: bf16[128,128], index: 18, kind: input, shape index: {}]
  %s19 = inlined_call_operand.vmem [shape: f32[1,128], index: 19, kind: input, shape index: {}]
  %s20 = inlined_call_operand.vmem [shape: f32[32,128], index: 20, kind: output, shape index: {0}]
  %s21 = inlined_call_operand.hbm [shape: f32[1,1], index: 21, kind: output, shape index: {1}]
  %22 = xla_tuple %s20, %s21
  %s23 = sld [smem:[#allocation0]]
  $region102: #{entity_model_forward.1} parent=0
    _
  %s25 = ssub.s32 1, %s23
  %s26 = scalar_select 0, %s25, %s23
  $region1: #{entity_model_forward.1} parent=0
    #allocation2 [shape = 'u8[131072]{0}', space=vmem, size = 0x20000, scoped, tag = 'input window, operand 14, single buffered']
    #allocation3 [shape = 's32[1]{0}', space=sflag, size = 0x4, scoped, tag = 'scoped memory for entity_model_forward.1']
    #allocation4 [shape = 's32[1]{0}', space=sflag, size = 0x4, scoped, tag = 'scoped memory for entity_model_forward.1']
    #allocation5 [shape = 'u8[512]{0}', space=smem, size = 0x200, scoped, tag = 'output window, operand 1, single buffered']
    %27 = vsyncpa [#allocation3], 0
    %28 = vsyncpa [#allocation4], 0
    // Predicated region
    $region2: #{entity_model_forward.1} parent=1 // pred_check
      _
    $region3: #{entity_model_forward.1} parent=1 // pred_check_branch
      %30 = sbr.rel (0) target = $region5
    $region4: #{entity_model_forward.1} parent=1 // pred_region
      _
    $region5: #{entity_model_forward.1} parent=1 // pred_fallthru
      _
    // Predicated region
    $region6: #{entity_model_forward.1} parent=1 // pred_check
      _
    $region7: #{entity_model_forward.1} parent=1 // pred_check_branch
      %32 = sbr.rel (0) target = $region9
    $region8: #{entity_model_forward.1} parent=1 // pred_region
      _
    $region9: #{entity_model_forward.1} parent=1 // pred_fallthru
      _
    // Predicated region
    $region10: #{entity_model_forward.1} parent=1 // pred_check
      _
    $region11: #{entity_model_forward.1} parent=1 // pred_check_branch
      %34 = sbr.rel (0) target = $region13
    $region12: #{entity_model_forward.1} parent=1 // pred_region
      _
    $region13: #{entity_model_forward.1} parent=1 // pred_fallthru
      _
    // Predicated region
    $region14: #{entity_model_forward.1} parent=1 // pred_check
      _
    $region15: #{entity_model_forward.1} parent=1 // pred_check_branch
      %36 = sbr.rel (0) target = $region17
    $region16: #{entity_model_forward.1} parent=1 // pred_region
      _
    $region17: #{entity_model_forward.1} parent=1 // pred_fallthru
      _
    // Predicated region
    $region18: #{entity_model_forward.1} parent=1 // pred_check
      _
    $region19: #{entity_model_forward.1} parent=1 // pred_check_branch
      %38 = sbr.rel (0) target = $region21
    $region20: #{entity_model_forward.1} parent=1 // pred_region
      _
    $region21: #{entity_model_forward.1} parent=1 // pred_fallthru
      _
    // Predicated region
    $region22: #{entity_model_forward.1} parent=1 // pred_check
      _
    $region23: #{entity_model_forward.1} parent=1 // pred_check_branch
      %40 = sbr.rel (0) target = $region25
    $region24: #{entity_model_forward.1} parent=1 // pred_region
      _
    $region25: #{entity_model_forward.1} parent=1 // pred_fallthru
      _
    // Predicated region
    $region26: #{entity_model_forward.1} parent=1 // pred_check
      _
    $region27: #{entity_model_forward.1} parent=1 // pred_check_branch
      %42 = sbr.rel (0) target = $region29
    $region28: #{entity_model_forward.1} parent=1 // pred_region
      _
    $region29: #{entity_model_forward.1} parent=1 // pred_fallthru
      _
    // Predicated region
    $region30: #{entity_model_forward.1} parent=1 // pred_check
      _
    $region31: #{entity_model_forward.1} parent=1 // pred_check_branch
      %44 = sbr.rel (0) target = $region33
    $region32: #{entity_model_forward.1} parent=1 // pred_region
      _
    $region33: #{entity_model_forward.1} parent=1 // pred_fallthru
      _
    // Predicated region
    $region34: #{entity_model_forward.1} parent=1 // pred_check
      _
    $region35: #{entity_model_forward.1} parent=1 // pred_check_branch
      %46 = sbr.rel (0) target = $region37
    $region36: #{entity_model_forward.1} parent=1 // pred_region
      _
    $region37: #{entity_model_forward.1} parent=1 // pred_fallthru
      _
    // Predicated region
    $region38: #{entity_model_forward.1} parent=1 // pred_check
      _
    $region39: #{entity_model_forward.1} parent=1 // pred_check_branch
      %48 = sbr.rel (0) target = $region41
    $region40: #{entity_model_forward.1} parent=1 // pred_region
      _
    $region41: #{entity_model_forward.1} parent=1 // pred_fallthru
      _
    // Predicated region
    $region42: #{entity_model_forward.1} parent=1 // pred_check
      _
    $region43: #{entity_model_forward.1} parent=1 // pred_check_branch
      %50 = sbr.rel (0) target = $region45
    $region44: #{entity_model_forward.1} parent=1 // pred_region
      _
    $region45: #{entity_model_forward.1} parent=1 // pred_fallthru
      _
    // Predicated region
    $region46: #{entity_model_forward.1} parent=1 // pred_check
      _
    $region47: #{entity_model_forward.1} parent=1 // pred_check_branch
      %52 = sbr.rel (0) target = $region49
    $region48: #{entity_model_forward.1} parent=1 // pred_region
      _
    $region49: #{entity_model_forward.1} parent=1 // pred_fallthru
      _
    // Predicated region
    $region50: #{entity_model_forward.1} parent=1 // pred_check
      _
    $region51: #{entity_model_forward.1} parent=1 // pred_check_branch
      %54 = sbr.rel (0) target = $region53
    $region52: #{entity_model_forward.1} parent=1 // pred_region
      _
    $region53: #{entity_model_forward.1} parent=1 // pred_fallthru
      _
    // Predicated region
    $region54: #{entity_model_forward.1} parent=1 // pred_check
      _
    $region55: #{entity_model_forward.1} parent=1 // pred_check_branch
      %56 = sbr.rel (0) target = $region57
    $region56: #{entity_model_forward.1} parent=1 // pred_region
      _
    $region57: #{entity_model_forward.1} parent=1 // pred_fallthru
      _
    // Predicated region
    $region58: #{entity_model_forward.1} parent=1 // pred_check
      _
    $region59: #{entity_model_forward.1} parent=1 // pred_check_branch
      %58 = sbr.rel (0) target = $region61
    $region60: #{entity_model_forward.1} parent=1 // pred_region
      %60 = vsyncadd [#allocation3], 0
      %s61 = sshll.u32 %s14, 4
      %s62 = int_to_ptr.hbm [resolvable:$true] %s61
      %s63 = sshll.u32 [#allocation2], 4
      %s64 = int_to_ptr.vmem [resolvable:$true] %s63
      %69 = dma.hbm_to_vmem [thread:$0]  %s62, 4096, %s64, [#allocation3], 64, 64, 4
    $region61: #{entity_model_forward.1} parent=1 // pred_fallthru
      _
    // Predicated region
    $region62: #{entity_model_forward.1} parent=1 // pred_check
      _
    $region63: #{entity_model_forward.1} parent=1 // pred_check_branch
      %71 = sbr.rel (0) target = $region65
    $region64: #{entity_model_forward.1} parent=1 // pred_region
      _
    $region65: #{entity_model_forward.1} parent=1 // pred_fallthru
      _
    // Predicated region
    $region66: #{entity_model_forward.1} parent=1 // pred_check
      _
    $region67: #{entity_model_forward.1} parent=1 // pred_check_branch
      %73 = sbr.rel (0) target = $region69
    $region68: #{entity_model_forward.1} parent=1 // pred_region
      _
    $region69: #{entity_model_forward.1} parent=1 // pred_fallthru
      _
    // Predicated region
    $region70: #{entity_model_forward.1} parent=1 // pred_check
      _
    $region71: #{entity_model_forward.1} parent=1 // pred_check_branch
      %75 = sbr.rel (0) target = $region73
    $region72: #{entity_model_forward.1} parent=1 // pred_region
      _
    $region73: #{entity_model_forward.1} parent=1 // pred_fallthru
      _
    // Predicated region
    $region74: #{entity_model_forward.1} parent=1 // pred_check
      _
    $region75: #{entity_model_forward.1} parent=1 // pred_check_branch
      %77 = sbr.rel (0) target = $region77
    $region76: #{entity_model_forward.1} parent=1 // pred_region
      _
    $region77: #{entity_model_forward.1} parent=1 // pred_fallthru
      _
    // Predicated region
    $region78: #{entity_model_forward.1} parent=1 // pred_check
      _
    $region79: #{entity_model_forward.1} parent=1 // pred_check_branch
      %79 = sbr.rel (0) target = $region81
    $region80: #{entity_model_forward.1} parent=1 // pred_region
      _
    $region81: #{entity_model_forward.1} parent=1 // pred_fallthru
      _
    // Predicated region
    $region82: #{entity_model_forward.1} parent=1 // pred_check
      _
    $region83: #{entity_model_forward.1} parent=1 // pred_check_branch
      %81 = sbr.rel (0) target = $region85
    $region84: #{entity_model_forward.1} parent=1 // pred_region
      %83 = dma.done [#allocation3], 4096
    $region85: #{entity_model_forward.1} parent=1 // pred_fallthru
      _
    %v85 = vld [vmem:[%s0] sm:$0xff]
    %v86 = vld [vmem:[%s0 + $0x8] sm:$0xff]
    %v87 = vld [vmem:[%s0 + $0x10] sm:$0xff]
    %v88 = vld [vmem:[%s0 + $0x18] sm:$0xff]
    %v89 = vld [vmem:[%s4] sm:$0x1]
    %v90 = vld [vmem:[%s5] sm:$0x1]
    %91 = vadd.xlane.f32.xlu0 %v85
    %v92 = vpop.xlane.xlu0 %91
    %93 = vadd.xlane.f32.xlu0 %v86
    %v94 = vpop.xlane.xlu0 %93
    %95 = vadd.xlane.f32.xlu0 %v87
    %v96 = vpop.xlane.xlu0 %95
    %97 = vadd.xlane.f32.xlu0 %v88
    %v98 = vpop.xlane.xlu0 %97
    %v99 = vrcp.pop 128.0
    %v100 = vmul.f32 128.0, %v99
    %v101 = vsub.f32 1.0, %v100
    %v102 = vmul.f32 %v99, %v101
    %v103 = vadd.f32 %v99, %v102
    %vm104 = vweird.f32 %v99
    %v105 = vsel %vm104, %v99, %v103
    %v106 = vmul.f32 %v92, %v105
    %v107 = vmul.f32 %v94, %v105
    %v108 = vmul.f32 %v96, %v105
    %v109 = vmul.f32 %v98, %v105
    %v110 = vsub.f32 %v85, %v106
    %v111 = vsub.f32 %v86, %v107
    %v112 = vsub.f32 %v87, %v108
    %v113 = vsub.f32 %v88, %v109
    %v114 = vmul.f32 %v110, %v110
    %v115 = vmul.f32 %v111, %v111
    %v116 = vmul.f32 %v112, %v112
    %v117 = vmul.f32 %v113, %v113
    %118 = vadd.xlane.f32.xlu0 %v114
    %v119 = vpop.xlane.xlu0 %118
    %120 = vadd.xlane.f32.xlu0 %v115
    %v121 = vpop.xlane.xlu0 %120
    %122 = vadd.xlane.f32.xlu0 %v116
    %v123 = vpop.xlane.xlu0 %122
    %124 = vadd.xlane.f32.xlu0 %v117
    %v125 = vpop.xlane.xlu0 %124
    %v126 = vmul.f32 %v119, %v105
    %v127 = vmul.f32 %v121, %v105
    %v128 = vmul.f32 %v123, %v105
    %v129 = vmul.f32 %v125, %v105
    %v130 = vadd.f32 %v126, 1e-12
    %v131 = vadd.f32 %v127, 1e-12
    %v132 = vadd.f32 %v128, 1e-12
    %v133 = vadd.f32 %v129, 1e-12
    %v134 = vrsqrt.pop %v130
    %v135 = vmul.f32 %v134, %v130
    %v136 = vmul.f32 %v135, %v134
    %v137 = vmul.f32 0.5, %v136
    %v138 = vsub.f32 1.5, %v137
    %v139 = vmul.f32 %v134, %v138
    %vm140 = vweird.f32 %v130
    %vm141 = vweird.f32 %v134
    %vm142 = vmor %vm140, %vm141
    %v143 = vsel %vm142, %v134, %v139
    %v144 = vrsqrt.pop %v131
    %v145 = vmul.f32 %v144, %v131
    %v146 = vmul.f32 %v145, %v144
    %v147 = vmul.f32 0.5, %v146
    %v148 = vsub.f32 1.5, %v147
    %v149 = vmul.f32 %v144, %v148
    %vm150 = vweird.f32 %v131
    %vm151 = vweird.f32 %v144
    %vm152 = vmor %vm150, %vm151
    %v153 = vsel %vm152, %v144, %v149
    %v154 = vrsqrt.pop %v132
    %v155 = vmul.f32 %v154, %v132
    %v156 = vmul.f32 %v155, %v154
    %v157 = vmul.f32 0.5, %v156
    %v158 = vsub.f32 1.5, %v157
    %v159 = vmul.f32 %v154, %v158
    %vm160 = vweird.f32 %v132
    %vm161 = vweird.f32 %v154
    %vm162 = vmor %vm160, %vm161
    %v163 = vsel %vm162, %v154, %v159
    %v164 = vrsqrt.pop %v133
    %v165 = vmul.f32 %v164, %v133
    %v166 = vmul.f32 %v165, %v164
    %v167 = vmul.f32 0.5, %v166
    %v168 = vsub.f32 1.5, %v167
    %v169 = vmul.f32 %v164, %v168
    %vm170 = vweird.f32 %v133
    %vm171 = vweird.f32 %v164
    %vm172 = vmor %vm170, %vm171
    %v173 = vsel %vm172, %v164, %v169
    %v174 = vmul.f32 %v110, %v143
    %v175 = vmul.f32 %v111, %v153
    %v176 = vmul.f32 %v112, %v163
    %v177 = vmul.f32 %v113, %v173
    %v179 = vperm.slane %v89, 0
    %v181 = vmul.f32 %v174, %v179
    %v182 = vmul.f32 %v175, %v179
    %v183 = vmul.f32 %v176, %v179
    %v184 = vmul.f32 %v177, %v179
    %v186 = vperm.slane %v90, 0
    %v188 = vadd.f32 %v181, %v186
    %v189 = vadd.f32 %v182, %v186
    %v190 = vadd.f32 %v183, %v186
    %v191 = vadd.f32 %v184, %v186
    %v192 = vld [vmem:[%s1] sm:$0x1]
    %v193 = vld [vmem:[%s1 + $0x1] sm:$0x1]
    %v194 = vcvt.s32.f32 %v192
    %v195 = vcvt.s32.f32 %v193
    %v196 = vsub.f32 1.0, %v194
    %v197 = vsub.f32 1.0, %v195
    %v198 = vmul.f32 %v196, -10000.0
    %v199 = vmul.f32 %v197, -10000.0
    %v200 = vld [vmem:[%s6] sm:$0xff]
    %v201 = vld [vmem:[%s6 + $0x8] sm:$0xf]
    %v202 = vld [vmem:[%s6 + $0xc] sm:$0xff]
    %v203 = vld [vmem:[%s6 + $0x14] sm:$0xf]
    %v204 = vld [vmem:[%s6 + $0x18] sm:$0xff]
    %v205 = vld [vmem:[%s6 + $0x20] sm:$0xf]
    %v206 = vld [vmem:[%s6 + $0x24] sm:$0xff]
    %v207 = vld [vmem:[%s6 + $0x2c] sm:$0xf]
    %v208 = vld [vmem:[%s6 + $0x30] sm:$0xff]
    %v209 = vld [vmem:[%s6 + $0x38] sm:$0xf]
    %v210 = vld [vmem:[%s6 + $0x3c] sm:$0xff]
    %v211 = vld [vmem:[%s6 + $0x44] sm:$0xf]
    %v212 = vld [vmem:[%s6 + $0x48] sm:$0xff]
    %v213 = vld [vmem:[%s6 + $0x50] sm:$0xf]
    %v214 = vld [vmem:[%s6 + $0x54] sm:$0xff]
    %v215 = vld [vmem:[%s6 + $0x5c] sm:$0xf]
    %v216 = vld [vmem:[%s6 + $0x60] sm:$0xff]
    %v217 = vld [vmem:[%s6 + $0x68] sm:$0xf]
    %v218 = vld [vmem:[%s6 + $0x6c] sm:$0xff]
    %v219 = vld [vmem:[%s6 + $0x74] sm:$0xf]
    %v220 = vld [vmem:[%s6 + $0x78] sm:$0xff]
    %v221 = vld [vmem:[%s6 + $0x80] sm:$0xf]
    %v222 = vld [vmem:[%s6 + $0x84] sm:$0xff]
    %v223 = vld [vmem:[%s6 + $0x8c] sm:$0xf]
    %v224 = vld [vmem:[%s6 + $0x90] sm:$0xff]
    %v225 = vld [vmem:[%s6 + $0x98] sm:$0xf]
    %v226 = vld [vmem:[%s6 + $0x9c] sm:$0xff]
    %v227 = vld [vmem:[%s6 + $0xa4] sm:$0xf]
    %v228 = vld [vmem:[%s6 + $0xa8] sm:$0xff]
    %v229 = vld [vmem:[%s6 + $0xb0] sm:$0xf]
    %v230 = vld [vmem:[%s6 + $0xb4] sm:$0xff]
    %v231 = vld [vmem:[%s6 + $0xbc] sm:$0xf]
    %v232 = vld [vmem:[%s7] sm:$0x7]
    %v233 = vld [vmem:[%s8] sm:$0xf]
    %v234 = vld [vmem:[%s8 + $0x4] sm:$0xf]
    %v235 = vld [vmem:[%s8 + $0x8] sm:$0xf]
    %v236 = vld [vmem:[%s8 + $0xc] sm:$0xf]
    %v237 = vld [vmem:[%s8 + $0x10] sm:$0xf]
    %v238 = vld [vmem:[%s8 + $0x14] sm:$0xf]
    %v239 = vld [vmem:[%s8 + $0x18] sm:$0xf]
    %v240 = vld [vmem:[%s8 + $0x1c] sm:$0xf]
    %v241 = vld [vmem:[%s8 + $0x20] sm:$0xf]
    %v242 = vld [vmem:[%s8 + $0x24] sm:$0xf]
    %v243 = vld [vmem:[%s8 + $0x28] sm:$0xf]
    %v244 = vld [vmem:[%s8 + $0x2c] sm:$0xf]
    %v245 = vld [vmem:[%s8 + $0x30] sm:$0xf]
    %v246 = vld [vmem:[%s8 + $0x34] sm:$0xf]
    %v247 = vld [vmem:[%s8 + $0x38] sm:$0xf]
    %v248 = vld [vmem:[%s8 + $0x3c] sm:$0xf]
    %v249 = vld [vmem:[%s9] sm:$0x1]
    %v250 = vld [vmem:[%s12] sm:$0xff]
    %v251 = vld [vmem:[%s12 + $0x8] sm:$0xff]
    %v252 = vld [vmem:[%s12 + $0x10] sm:$0xff]
    %v253 = vld [vmem:[%s12 + $0x18] sm:$0xff]
    %v254 = vld [vmem:[%s12 + $0x20] sm:$0xff]
    %v255 = vld [vmem:[%s12 + $0x28] sm:$0xff]
    %v256 = vld [vmem:[%s12 + $0x30] sm:$0xff]
    %v257 = vld [vmem:[%s12 + $0x38] sm:$0xff]
    %v258 = vld [vmem:[%s12 + $0x40] sm:$0xff]
    %v259 = vld [vmem:[%s12 + $0x48] sm:$0xff]
    %v260 = vld [vmem:[%s12 + $0x50] sm:$0xff]
    %v261 = vld [vmem:[%s12 + $0x58] sm:$0xff]
    %v262 = vld [vmem:[%s12 + $0x60] sm:$0xff]
    %v263 = vld [vmem:[%s12 + $0x68] sm:$0xff]
    %v264 = vld [vmem:[%s12 + $0x70] sm:$0xff]
    %v265 = vld [vmem:[%s12 + $0x78] sm:$0xff]
    %v266 = vld [vmem:[%s13] sm:$0x3]
    %v267 = vld [vmem:[#allocation2] sm:$0xf]
    %v268 = vld [vmem:[#allocation2 + $0x4] sm:$0xf]
    %v269 = vld [vmem:[#allocation2 + $0x8] sm:$0xf]
    %v270 = vld [vmem:[#allocation2 + $0xc] sm:$0xf]
    %v271 = vld [vmem:[#allocation2 + $0x10] sm:$0xf]
    %v272 = vld [vmem:[#allocation2 + $0x14] sm:$0xf]
    %v273 = vld [vmem:[#allocation2 + $0x18] sm:$0xf]
    %v274 = vld [vmem:[#allocation2 + $0x1c] sm:$0xf]
    %v275 = vld [vmem:[#allocation2 + $0x20] sm:$0xf]
    %v276 = vld [vmem:[#allocation2 + $0x24] sm:$0xf]
    %v277 = vld [vmem:[#allocation2 + $0x28] sm:$0xf]
    %v278 = vld [vmem:[#allocation2 + $0x2c] sm:$0xf]
    %v279 = vld [vmem:[#allocation2 + $0x30] sm:$0xf]
    %v280 = vld [vmem:[#allocation2 + $0x34] sm:$0xf]
    %v281 = vld [vmem:[#allocation2 + $0x38] sm:$0xf]
    %v282 = vld [vmem:[#allocation2 + $0x3c] sm:$0xf]
    %v283 = vld [vmem:[#allocation2 + $0x40] sm:$0xf]
    %v284 = vld [vmem:[#allocation2 + $0x44] sm:$0xf]
    %v285 = vld [vmem:[#allocation2 + $0x48] sm:$0xf]
    %v286 = vld [vmem:[#allocation2 + $0x4c] sm:$0xf]
    %v287 = vld [vmem:[#allocation2 + $0x50] sm:$0xf]
    %v288 = vld [vmem:[#allocation2 + $0x54] sm:$0xf]
    %v289 = vld [vmem:[#allocation2 + $0x58] sm:$0xf]
    %v290 = vld [vmem:[#allocation2 + $0x5c] sm:$0xf]
    %v291 = vld [vmem:[#allocation2 + $0x60] sm:$0xf]
    %v292 = vld [vmem:[#allocation2 + $0x64] sm:$0xf]
    %v293 = vld [vmem:[#allocation2 + $0x68] sm:$0xf]
    %v294 = vld [vmem:[#allocation2 + $0x6c] sm:$0xf]
    %v295 = vld [vmem:[#allocation2 + $0x70] sm:$0xf]
    %v296 = vld [vmem:[#allocation2 + $0x74] sm:$0xf]
    %v297 = vld [vmem:[#allocation2 + $0x78] sm:$0xf]
    %v298 = vld [vmem:[#allocation2 + $0x7c] sm:$0xf]
    %v299 = vld [vmem:[%s15] sm:$0x1]
    %v300 = vpack.c.bf16 %v189, %v188
    %v301 = vpack.c.bf16 %v191, %v190
    %v303 = vperm.slane %v232, 0
    %v304 = vperm.slane %v232, 1
    %v305 = vperm.slane %v232, 2
    %v341 = vunpack.c.l.b16 %v200
    %v342 = vunpack.c.h.b16 %v200
    %v343 = vunpack.c.l.b16 %v201
    %v344 = vunpack.c.l.b16 %v202
    %v345 = vunpack.c.h.b16 %v202
    %v346 = vunpack.c.l.b16 %v203
    %v347 = vunpack.c.l.b16 %v204
    %v348 = vunpack.c.h.b16 %v204
    %v349 = vunpack.c.l.b16 %v205
    %v350 = vunpack.c.l.b16 %v206
    %v351 = vunpack.c.h.b16 %v206
    %v352 = vunpack.c.l.b16 %v207
    %v353 = vunpack.c.l.b16 %v208
    %v354 = vunpack.c.h.b16 %v208
    %v355 = vunpack.c.l.b16 %v209
    %v356 = vunpack.c.l.b16 %v210
    %v357 = vunpack.c.h.b16 %v210
    %v358 = vunpack.c.l.b16 %v211
    %v359 = vunpack.c.l.b16 %v212
    %v360 = vunpack.c.h.b16 %v212
    %v361 = vunpack.c.l.b16 %v213
    %v362 = vunpack.c.l.b16 %v214
    %v363 = vunpack.c.h.b16 %v214
    %v364 = vunpack.c.l.b16 %v215
    %v365 = vunpack.c.l.b16 %v216
    %v366 = vunpack.c.h.b16 %v216
    %v367 = vunpack.c.l.b16 %v217
    %v368 = vunpack.c.l.b16 %v218
    %v369 = vunpack.c.h.b16 %v218
    %v370 = vunpack.c.l.b16 %v219
    %v371 = vunpack.c.l.b16 %v220
    %v372 = vunpack.c.h.b16 %v220
    %v373 = vunpack.c.l.b16 %v221
    %v374 = vunpack.c.l.b16 %v222
    %v375 = vunpack.c.h.b16 %v222
    %v376 = vunpack.c.l.b16 %v223
    %v377 = vunpack.c.l.b16 %v224
    %v378 = vunpack.c.h.b16 %v224
    %v379 = vunpack.c.l.b16 %v225
    %v380 = vunpack.c.l.b16 %v226
    %v381 = vunpack.c.h.b16 %v226
    %v382 = vunpack.c.l.b16 %v227
    %v383 = vunpack.c.l.b16 %v228
    %v384 = vunpack.c.h.b16 %v228
    %v385 = vunpack.c.l.b16 %v229
    %v386 = vunpack.c.l.b16 %v230
    %v387 = vunpack.c.h.b16 %v230
    %v388 = vunpack.c.l.b16 %v231
    %v389 = vpack.c.b16 %v344, %v341
    %v390 = vpack.c.b16 %v345, %v342
    %v391 = vpack.c.b16 %v346, %v343
    %v392 = vpack.c.b16 %v350, %v347
    %v393 = vpack.c.b16 %v351, %v348
    %v394 = vpack.c.b16 %v352, %v349
    %v395 = vpack.c.b16 %v356, %v353
    %v396 = vpack.c.b16 %v357, %v354
    %v397 = vpack.c.b16 %v358, %v355
    %v398 = vpack.c.b16 %v362, %v359
    %v399 = vpack.c.b16 %v363, %v360
    %v400 = vpack.c.b16 %v364, %v361
    %v401 = vpack.c.b16 %v368, %v365
    %v402 = vpack.c.b16 %v369, %v366
    %v403 = vpack.c.b16 %v370, %v367
    %v404 = vpack.c.b16 %v374, %v371
    %v405 = vpack.c.b16 %v375, %v372
    %v406 = vpack.c.b16 %v376, %v373
    %v407 = vpack.c.b16 %v380, %v377
    %v408 = vpack.c.b16 %v381, %v378
    %v409 = vpack.c.b16 %v382, %v379
    %v410 = vpack.c.b16 %v386, %v383
    %v411 = vpack.c.b16 %v387, %v384
    %v412 = vpack.c.b16 %v388, %v385
    %437 = vmatpush.bf16.msra.mxu0 %v410
    %438 = vmatpush.bf16.msra.mxu0 %v407
    %439 = vmatpush.bf16.msra.mxu0 %v404
    %440 = vmatpush.bf16.msra.mxu0 %v401
    %441 = vmatpush.bf16.msra.mxu0 %v398
    %442 = vmatpush.bf16.msra.mxu0 %v395
    %443 = vmatpush.bf16.msra.mxu0 %v392
    %444 = vmatpush.bf16.msra.mxu0 %v389
    %445 = vmatmul.bf16.gmra.mxu0 %v300
    %v446 = vpop.f32.mrf.mxu0
    %v447 = vadd.f32 %v303, %v446
    %v448 = vpop.f32.mrf.mxu0
    %v449 = vadd.f32 %v303, %v448
    %450 = vmatmul.bf16.gmra.mxu0 %v301
    %v451 = vpop.f32.mrf.mxu0
    %v452 = vadd.f32 %v303, %v451
    %v453 = vpop.f32.mrf.mxu0
    %v454 = vadd.f32 %v303, %v453
    %455 = vdwg.mxu0
    %456 = vmatpush.bf16.msra.mxu0 %v411
    %457 = vmatpush.bf16.msra.mxu0 %v408
    %458 = vmatpush.bf16.msra.mxu0 %v405
    %459 = vmatpush.bf16.msra.mxu0 %v402
    %460 = vmatpush.bf16.msra.mxu0 %v399
    %461 = vmatpush.bf16.msra.mxu0 %v396
    %462 = vmatpush.bf16.msra.mxu0 %v393
    %463 = vmatpush.bf16.msra.mxu0 %v390
    %464 = vmatmul.bf16.gmra.mxu0 %v300
    %v465 = vpop.f32.mrf.mxu0
    %v466 = vadd.f32 %v304, %v465
    %v467 = vpop.f32.mrf.mxu0
    %v468 = vadd.f32 %v304, %v467
    %469 = vmatmul.bf16.gmra.mxu0 %v301
    %v470 = vpop.f32.mrf.mxu0
    %v471 = vadd.f32 %v304, %v470
    %v472 = vpop.f32.mrf.mxu0
    %v473 = vadd.f32 %v304, %v472
    %474 = vdwg.mxu0
    %475 = vmatpush.bf16.msra.mxu0 %v412
    %476 = vmatpush.bf16.msra.mxu0 %v409
    %477 = vmatpush.bf16.msra.mxu0 %v406
    %478 = vmatpush.bf16.msra.mxu0 %v403
    %479 = vmatpush.bf16.msra.mxu0 %v400
    %480 = vmatpush.bf16.msra.mxu0 %v397
    %481 = vmatpush.bf16.msra.mxu0 %v394
    %482 = vmatpush.bf16.msra.mxu0 %v391
    %483 = vmatmul.bf16.gmra.mxu0 %v300
    %v484 = vpop.f32.mrf.mxu0
    %v485 = vadd.f32 %v305, %v484
    %v486 = vpop.f32.mrf.mxu0
    %v487 = vadd.f32 %v305, %v486
    %488 = vmatmul.bf16.gmra.mxu0 %v301
    %v489 = vpop.f32.mrf.mxu0
    %v490 = vadd.f32 %v305, %v489
    %v491 = vpop.f32.mrf.mxu0
    %v492 = vadd.f32 %v305, %v491
    %493 = vdwg.mxu0
    %498 = vrot.lane.b32.xlu0 %v447, 64
    %v499 = vpop.permute.xlu0 %498
    %500 = vrot.lane.b32.xlu0 %v449, 64
    %v501 = vpop.permute.xlu0 %500
    %502 = vrot.lane.b32.xlu0 %v452, 64
    %v503 = vpop.permute.xlu0 %502
    %504 = vrot.lane.b32.xlu0 %v454, 64
    %v505 = vpop.permute.xlu0 %504
    %v510 = vpack.c.bf16 %v447, %v447
    %v511 = vpack.c.bf16 %v449, %v449
    %v512 = vpack.c.bf16 %v452, %v452
    %v513 = vpack.c.bf16 %v454, %v454
    %v514 = vpack.c.bf16 %v499, %v499
    %v515 = vpack.c.bf16 %v501, %v501
    %v516 = vpack.c.bf16 %v503, %v503
    %v517 = vpack.c.bf16 %v505, %v505
    %522 = vrot.lane.b32.xlu0 %v466, 64
    %v523 = vpop.permute.xlu0 %522
    %524 = vrot.lane.b32.xlu0 %v468, 64
    %v525 = vpop.permute.xlu0 %524
    %526 = vrot.lane.b32.xlu0 %v471, 64
    %v527 = vpop.permute.xlu0 %526
    %528 = vrot.lane.b32.xlu0 %v473, 64
    %v529 = vpop.permute.xlu0 %528
    %v534 = vpack.c.bf16 %v466, %v466
    %v535 = vpack.c.bf16 %v468, %v468
    %v536 = vpack.c.bf16 %v471, %v471
    %v537 = vpack.c.bf16 %v473, %v473
    %v538 = vpack.c.bf16 %v523, %v523
    %v539 = vpack.c.bf16 %v525, %v525
    %v540 = vpack.c.bf16 %v527, %v527
    %v541 = vpack.c.bf16 %v529, %v529
    %546 = vrot.lane.b32.xlu0 %v485, 64
    %v547 = vpop.permute.xlu0 %546
    %548 = vrot.lane.b32.xlu0 %v487, 64
    %v549 = vpop.permute.xlu0 %548
    %550 = vrot.lane.b32.xlu0 %v490, 64
    %v551 = vpop.permute.xlu0 %550
    %552 = vrot.lane.b32.xlu0 %v492, 64
    %v553 = vpop.permute.xlu0 %552
    %v558 = vpack.c.bf16 %v485, %v485
    %v559 = vpack.c.bf16 %v487, %v487
    %v560 = vpack.c.bf16 %v490, %v490
    %v561 = vpack.c.bf16 %v492, %v492
    %v562 = vpack.c.bf16 %v547, %v547
    %v563 = vpack.c.bf16 %v549, %v549
    %v564 = vpack.c.bf16 %v551, %v551
    %v565 = vpack.c.bf16 %v553, %v553
    %v568 = vunpack.c.l.b16 %v510
    %v569 = vunpack.c.l.b16 %v511
    %v570 = vpack.c.b16 %v569, %v568
    %v573 = vunpack.c.l.b16 %v534
    %v574 = vunpack.c.l.b16 %v535
    %v575 = vpack.c.b16 %v574, %v573
    %vm576 = vcmask 523264
    %v578 = vsel %vm576, %v570, 0
    %v581 = vsel %vm576, %v575, 0
    %583 = vmatpush.bf16.xpose.msra.mxu0 0
    %584 = vmatpush.bf16.xpose.msra.mxu0 0
    %585 = vmatpush.bf16.xpose.msra.mxu0 0
    %586 = vmatpush.bf16.xpose.msra.mxu0 0
    %587 = vmatpush.bf16.xpose.msra.mxu0 0
    %588 = vmatpush.bf16.xpose.msra.mxu0 0
    %589 = vmatpush.bf16.xpose.msra.mxu0 0
    %590 = vmatpush.bf16.xpose.msra.mxu0 %v581
    %591 = vmatmul.bf16.gmra.mxu0 %v578
    %v592 = vpop.f32.mrf.mxu0
    %v593 = vadd.f32 0.0, %v592
    %v594 = vpop.f32.mrf.mxu0
    %v595 = vadd.f32 0.0, %v594
    %596 = vdwg.mxu0
    %v599 = vunpack.c.l.b16 %v512
    %v600 = vunpack.c.l.b16 %v513
    %v601 = vpack.c.b16 %v600, %v599
    %v604 = vunpack.c.l.b16 %v536
    %v605 = vunpack.c.l.b16 %v537
    %v606 = vpack.c.b16 %v605, %v604
    %v608 = vsel %vm576, %v601, 0
    %v611 = vsel %vm576, %v606, 0
    %613 = vmatpush.bf16.xpose.msra.mxu0 0
    %614 = vmatpush.bf16.xpose.msra.mxu0 0
    %615 = vmatpush.bf16.xpose.msra.mxu0 0
    %616 = vmatpush.bf16.xpose.msra.mxu0 0
    %617 = vmatpush.bf16.xpose.msra.mxu0 0
    %618 = vmatpush.bf16.xpose.msra.mxu0 0
    %619 = vmatpush.bf16.xpose.msra.mxu0 0
    %620 = vmatpush.bf16.xpose.msra.mxu0 %v611
    %621 = vmatmul.bf16.gmra.mxu0 %v608
    %v622 = vpop.f32.mrf.mxu0
    %v623 = vadd.f32 0.0, %v622
    %v624 = vpop.f32.mrf.mxu0
    %v625 = vadd.f32 0.0, %v624
    %626 = vdwg.mxu0
    %v629 = vunpack.c.l.b16 %v514
    %v630 = vunpack.c.l.b16 %v515
    %v631 = vpack.c.b16 %v630, %v629
    %v634 = vunpack.c.l.b16 %v538
    %v635 = vunpack.c.l.b16 %v539
    %v636 = vpack.c.b16 %v635, %v634
    %v638 = vsel %vm576, %v631, 0
    %v641 = vsel %vm576, %v636, 0
    %643 = vmatpush.bf16.xpose.msra.mxu0 0
    %644 = vmatpush.bf16.xpose.msra.mxu0 0
    %645 = vmatpush.bf16.xpose.msra.mxu0 0
    %646 = vmatpush.bf16.xpose.msra.mxu0 0
    %647 = vmatpush.bf16.xpose.msra.mxu0 0
    %648 = vmatpush.bf16.xpose.msra.mxu0 0
    %649 = vmatpush.bf16.xpose.msra.mxu0 0
    %650 = vmatpush.bf16.xpose.msra.mxu0 %v641
    %651 = vmatmul.bf16.gmra.mxu0 %v638
    %v652 = vpop.f32.mrf.mxu0
    %v653 = vadd.f32 0.0, %v652
    %v654 = vpop.f32.mrf.mxu0
    %v655 = vadd.f32 0.0, %v654
    %656 = vdwg.mxu0
    %v659 = vunpack.c.l.b16 %v516
    %v660 = vunpack.c.l.b16 %v517
    %v661 = vpack.c.b16 %v660, %v659
    %v664 = vunpack.c.l.b16 %v540
    %v665 = vunpack.c.l.b16 %v541
    %v666 = vpack.c.b16 %v665, %v664
    %v668 = vsel %vm576, %v661, 0
    %v671 = vsel %vm576, %v666, 0
    %673 = vmatpush.bf16.xpose.msra.mxu0 0
    %674 = vmatpush.bf16.xpose.msra.mxu0 0
    %675 = vmatpush.bf16.xpose.msra.mxu0 0
    %676 = vmatpush.bf16.xpose.msra.mxu0 0
    %677 = vmatpush.bf16.xpose.msra.mxu0 0
    %678 = vmatpush.bf16.xpose.msra.mxu0 0
    %679 = vmatpush.bf16.xpose.msra.mxu0 0
    %680 = vmatpush.bf16.xpose.msra.mxu0 %v671
    %681 = vmatmul.bf16.gmra.mxu0 %v668
    %v682 = vpop.f32.mrf.mxu0
    %v683 = vadd.f32 0.0, %v682
    %v684 = vpop.f32.mrf.mxu0
    %v685 = vadd.f32 0.0, %v684
    %686 = vdwg.mxu0
    %v687 = vmul.f32 %v593, 0.125
    %v688 = vmul.f32 %v595, 0.125
    %v689 = vmul.f32 %v623, 0.125
    %v690 = vmul.f32 %v625, 0.125
    %v691 = vmul.f32 %v653, 0.125
    %v692 = vmul.f32 %v655, 0.125
    %v693 = vmul.f32 %v683, 0.125
    %v694 = vmul.f32 %v685, 0.125
    %v697 = vperm.slane %v198, 0
    %v698 = vperm.slane %v199, 0
    %v701 = vadd.f32 %v687, %v697
    %v702 = vadd.f32 %v688, %v697
    %v703 = vadd.f32 %v689, %v698
    %v704 = vadd.f32 %v690, %v698
    %v705 = vadd.f32 %v691, %v697
    %v706 = vadd.f32 %v692, %v697
    %v707 = vadd.f32 %v693, %v698
    %v708 = vadd.f32 %v694, %v698
    %vm709 = vcmask 130048
    %v710 = vsel %vm709, %v701, -inf
    %711 = vmax.xlane.f32.xlu0 %v710
    %v712 = vpop.xlane.xlu0 %711
    %v713 = vsel %vm709, %v702, -inf
    %714 = vmax.xlane.f32.xlu0 %v713
    %v715 = vpop.xlane.xlu0 %714
    %v716 = vsel %vm709, %v703, -inf
    %717 = vmax.xlane.f32.xlu0 %v716
    %v718 = vpop.xlane.xlu0 %717
    %v719 = vsel %vm709, %v704, -inf
    %720 = vmax.xlane.f32.xlu0 %v719
    %v721 = vpop.xlane.xlu0 %720
    %v722 = vsel %vm709, %v705, -inf
    %723 = vmax.xlane.f32.xlu0 %v722
    %v724 = vpop.xlane.xlu0 %723
    %v725 = vsel %vm709, %v706, -inf
    %726 = vmax.xlane.f32.xlu0 %v725
    %v727 = vpop.xlane.xlu0 %726
    %v728 = vsel %vm709, %v707, -inf
    %729 = vmax.xlane.f32.xlu0 %v728
    %v730 = vpop.xlane.xlu0 %729
    %v731 = vsel %vm709, %v708, -inf
    %732 = vmax.xlane.f32.xlu0 %v731
    %v733 = vpop.xlane.xlu0 %732
    %v734 = vsub.f32 %v701, %v712
    %v735 = vsub.f32 %v702, %v715
    %v736 = vsub.f32 %v703, %v718
    %v737 = vsub.f32 %v704, %v721
    %v738 = vsub.f32 %v705, %v724
    %v739 = vsub.f32 %v706, %v727
    %v740 = vsub.f32 %v707, %v730
    %v741 = vsub.f32 %v708, %v733
    %v742 = vmul.f32 %v734, 1.442695
    %v743 = vpow.pop %v742
    %v744 = vmul.f32 %v735, 1.442695
    %v745 = vpow.pop %v744
    %v746 = vmul.f32 %v736, 1.442695
    %v747 = vpow.pop %v746
    %v748 = vmul.f32 %v737, 1.442695
    %v749 = vpow.pop %v748
    %v750 = vmul.f32 %v738, 1.442695
    %v751 = vpow.pop %v750
    %v752 = vmul.f32 %v739, 1.442695
    %v753 = vpow.pop %v752
    %v754 = vmul.f32 %v740, 1.442695
    %v755 = vpow.pop %v754
    %v756 = vmul.f32 %v741, 1.442695
    %v757 = vpow.pop %v756
    %v758 = vsel %vm709, %v743, 0.0
    %759 = vadd.xlane.f32.xlu0 %v758
    %v760 = vpop.xlane.xlu0 %759
    %v761 = vsel %vm709, %v745, 0.0
    %762 = vadd.xlane.f32.xlu0 %v761
    %v763 = vpop.xlane.xlu0 %762
    %v764 = vsel %vm709, %v747, 0.0
    %765 = vadd.xlane.f32.xlu0 %v764
    %v766 = vpop.xlane.xlu0 %765
    %v767 = vsel %vm709, %v749, 0.0
    %768 = vadd.xlane.f32.xlu0 %v767
    %v769 = vpop.xlane.xlu0 %768
    %v770 = vsel %vm709, %v751, 0.0
    %771 = vadd.xlane.f32.xlu0 %v770
    %v772 = vpop.xlane.xlu0 %771
    %v773 = vsel %vm709, %v753, 0.0
    %774 = vadd.xlane.f32.xlu0 %v773
    %v775 = vpop.xlane.xlu0 %774
    %v776 = vsel %vm709, %v755, 0.0
    %777 = vadd.xlane.f32.xlu0 %v776
    %v778 = vpop.xlane.xlu0 %777
    %v779 = vsel %vm709, %v757, 0.0
    %780 = vadd.xlane.f32.xlu0 %v779
    %v781 = vpop.xlane.xlu0 %780
    %v782 = vrcp.pop %v760
    %v783 = vrcp.pop %v763
    %v784 = vrcp.pop %v766
    %v785 = vrcp.pop %v769
    %v786 = vrcp.pop %v772
    %v787 = vrcp.pop %v775
    %v788 = vrcp.pop %v778
    %v789 = vrcp.pop %v781
    %v790 = vmul.f32 %v743, %v782
    %v791 = vmul.f32 %v745, %v783
    %v792 = vmul.f32 %v747, %v784
    %v793 = vmul.f32 %v749, %v785
    %v794 = vmul.f32 %v751, %v786
    %v795 = vmul.f32 %v753, %v787
    %v796 = vmul.f32 %v755, %v788
    %v797 = vmul.f32 %v757, %v789
    %v798 = vpack.c.bf16 %v790, %v790
    %v799 = vpack.c.bf16 %v791, %v791
    %v800 = vpack.c.bf16 %v792, %v792
    %v801 = vpack.c.bf16 %v793, %v793
    %v802 = vpack.c.bf16 %v794, %v794
    %v803 = vpack.c.bf16 %v795, %v795
    %v804 = vpack.c.bf16 %v796, %v796
    %v805 = vpack.c.bf16 %v797, %v797
    %v808 = vunpack.c.l.b16 %v798
    %v809 = vunpack.c.l.b16 %v799
    %v810 = vpack.c.b16 %v809, %v808
    %v813 = vunpack.c.l.b16 %v558
    %v814 = vunpack.c.l.b16 %v559
    %v815 = vpack.c.b16 %v814, %v813
    %v818 = vsel %vm709, %v810, 0
    %820 = vmatpush.bf16.msra.mxu0 0
    %821 = vmatpush.bf16.msra.mxu0 0
    %822 = vmatpush.bf16.msra.mxu0 0
    %823 = vmatpush.bf16.msra.mxu0 0
    %824 = vmatpush.bf16.msra.mxu0 0
    %825 = vmatpush.bf16.msra.mxu0 0
    %826 = vmatpush.bf16.msra.mxu0 0
    %827 = vmatpush.bf16.msra.mxu0 %v815
    %828 = vmatmul.bf16.gmra.mxu0 %v818
    %v829 = vpop.f32.mrf.mxu0
    %v830 = vadd.f32 0.0, %v829
    %v831 = vpop.f32.mrf.mxu0
    %v832 = vadd.f32 0.0, %v831
    %833 = vdwg.mxu0
    %v836 = vunpack.c.l.b16 %v800
    %v837 = vunpack.c.l.b16 %v801
    %v838 = vpack.c.b16 %v837, %v836
    %v841 = vunpack.c.l.b16 %v560
    %v842 = vunpack.c.l.b16 %v561
    %v843 = vpack.c.b16 %v842, %v841
    %v846 = vsel %vm709, %v838, 0
    %848 = vmatpush.bf16.msra.mxu0 0
    %849 = vmatpush.bf16.msra.mxu0 0
    %850 = vmatpush.bf16.msra.mxu0 0
    %851 = vmatpush.bf16.msra.mxu0 0
    %852 = vmatpush.bf16.msra.mxu0 0
    %853 = vmatpush.bf16.msra.mxu0 0
    %854 = vmatpush.bf16.msra.mxu0 0
    %855 = vmatpush.bf16.msra.mxu0 %v843
    %856 = vmatmul.bf16.gmra.mxu0 %v846
    %v857 = vpop.f32.mrf.mxu0
    %v858 = vadd.f32 0.0, %v857
    %v859 = vpop.f32.mrf.mxu0
    %v860 = vadd.f32 0.0, %v859
    %861 = vdwg.mxu0
    %v864 = vunpack.c.l.b16 %v802
    %v865 = vunpack.c.l.b16 %v803
    %v866 = vpack.c.b16 %v865, %v864
    %v869 = vunpack.c.l.b16 %v562
    %v870 = vunpack.c.l.b16 %v563
    %v871 = vpack.c.b16 %v870, %v869
    %v874 = vsel %vm709, %v866, 0
    %876 = vmatpush.bf16.msra.mxu0 0
    %877 = vmatpush.bf16.msra.mxu0 0
    %878 = vmatpush.bf16.msra.mxu0 0
    %879 = vmatpush.bf16.msra.mxu0 0
    %880 = vmatpush.bf16.msra.mxu0 0
    %881 = vmatpush.bf16.msra.mxu0 0
    %882 = vmatpush.bf16.msra.mxu0 0
    %883 = vmatpush.bf16.msra.mxu0 %v871
    %884 = vmatmul.bf16.gmra.mxu0 %v874
    %v885 = vpop.f32.mrf.mxu0
    %v886 = vadd.f32 0.0, %v885
    %v887 = vpop.f32.mrf.mxu0
    %v888 = vadd.f32 0.0, %v887
    %889 = vdwg.mxu0
    %v892 = vunpack.c.l.b16 %v804
    %v893 = vunpack.c.l.b16 %v805
    %v894 = vpack.c.b16 %v893, %v892
    %v897 = vunpack.c.l.b16 %v564
    %v898 = vunpack.c.l.b16 %v565
    %v899 = vpack.c.b16 %v898, %v897
    %v902 = vsel %vm709, %v894, 0
    %904 = vmatpush.bf16.msra.mxu0 0
    %905 = vmatpush.bf16.msra.mxu0 0
    %906 = vmatpush.bf16.msra.mxu0 0
    %907 = vmatpush.bf16.msra.mxu0 0
    %908 = vmatpush.bf16.msra.mxu0 0
    %909 = vmatpush.bf16.msra.mxu0 0
    %910 = vmatpush.bf16.msra.mxu0 0
    %911 = vmatpush.bf16.msra.mxu0 %v899
    %912 = vmatmul.bf16.gmra.mxu0 %v902
    %v913 = vpop.f32.mrf.mxu0
    %v914 = vadd.f32 0.0, %v913
    %v915 = vpop.f32.mrf.mxu0
    %v916 = vadd.f32 0.0, %v915
    %917 = vdwg.mxu0
    %922 = vrot.lane.b32.xlu0 %v886, 64
    %v923 = vpop.permute.xlu0 %922
    %924 = vrot.lane.b32.xlu0 %v888, 64
    %v925 = vpop.permute.xlu0 %924
    %926 = vrot.lane.b32.xlu0 %v914, 64
    %v927 = vpop.permute.xlu0 %926
    %928 = vrot.lane.b32.xlu0 %v916, 64
    %v929 = vpop.permute.xlu0 %928
    %v934 = vsel %vm576, %v830, %v923
    %v935 = vsel %vm576, %v832, %v925
    %v936 = vsel %vm576, %v858, %v927
    %v937 = vsel %vm576, %v860, %v929
    %v938 = vpack.c.bf16 %v935, %v934
    %v939 = vpack.c.bf16 %v937, %v936
    %v941 = vperm.slane %v249, 0
    %v959 = vunpack.c.l.b16 %v233
    %v960 = vunpack.c.l.b16 %v234
    %v961 = vunpack.c.l.b16 %v235
    %v962 = vunpack.c.l.b16 %v236
    %v963 = vunpack.c.l.b16 %v237
    %v964 = vunpack.c.l.b16 %v238
    %v965 = vunpack.c.l.b16 %v239
    %v966 = vunpack.c.l.b16 %v240
    %v967 = vunpack.c.l.b16 %v241
    %v968 = vunpack.c.l.b16 %v242
    %v969 = vunpack.c.l.b16 %v243
    %v970 = vunpack.c.l.b16 %v244
    %v971 = vunpack.c.l.b16 %v245
    %v972 = vunpack.c.l.b16 %v246
    %v973 = vunpack.c.l.b16 %v247
    %v974 = vunpack.c.l.b16 %v248
    %v975 = vpack.c.b16 %v960, %v959
    %v976 = vpack.c.b16 %v962, %v961
    %v977 = vpack.c.b16 %v964, %v963
    %v978 = vpack.c.b16 %v966, %v965
    %v979 = vpack.c.b16 %v968, %v967
    %v980 = vpack.c.b16 %v970, %v969
    %v981 = vpack.c.b16 %v972, %v971
    %v982 = vpack.c.b16 %v974, %v973
    %991 = vmatpush.bf16.msra.mxu0 %v982
    %992 = vmatpush.bf16.msra.mxu0 %v981
    %993 = vmatpush.bf16.msra.mxu0 %v980
    %994 = vmatpush.bf16.msra.mxu0 %v979
    %995 = vmatpush.bf16.msra.mxu0 %v978
    %996 = vmatpush.bf16.msra.mxu0 %v977
    %997 = vmatpush.bf16.msra.mxu0 %v976
    %998 = vmatpush.bf16.msra.mxu0 %v975
    %999 = vmatmul.bf16.gmra.mxu0 %v938
    %v1000 = vpop.f32.mrf.mxu0
    %v1001 = vadd.f32 %v941, %v1000
    %v1002 = vpop.f32.mrf.mxu0
    %v1003 = vadd.f32 %v941, %v1002
    %1004 = vmatmul.bf16.gmra.mxu0 %v939
    %v1005 = vpop.f32.mrf.mxu0
    %v1006 = vadd.f32 %v941, %v1005
    %v1007 = vpop.f32.mrf.mxu0
    %v1008 = vadd.f32 %v941, %v1007
    %1009 = vdwg.mxu0
    %v1010 = vadd.f32 %v188, %v1001
    %v1011 = vadd.f32 %v189, %v1003
    %v1012 = vadd.f32 %v190, %v1006
    %v1013 = vadd.f32 %v191, %v1008
    %v1014 = vld [vmem:[%s10] sm:$0x1]
    %v1015 = vld [vmem:[%s11] sm:$0x1]
    %1016 = vadd.xlane.f32.xlu0 %v1010
    %v1017 = vpop.xlane.xlu0 %1016
    %1018 = vadd.xlane.f32.xlu0 %v1011
    %v1019 = vpop.xlane.xlu0 %1018
    %1020 = vadd.xlane.f32.xlu0 %v1012
    %v1021 = vpop.xlane.xlu0 %1020
    %1022 = vadd.xlane.f32.xlu0 %v1013
    %v1023 = vpop.xlane.xlu0 %1022
    %v1024 = vmul.f32 %v1017, %v105
    %v1025 = vmul.f32 %v1019, %v105
    %v1026 = vmul.f32 %v1021, %v105
    %v1027 = vmul.f32 %v1023, %v105
    %v1028 = vsub.f32 %v1010, %v1024
    %v1029 = vsub.f32 %v1011, %v1025
    %v1030 = vsub.f32 %v1012, %v1026
    %v1031 = vsub.f32 %v1013, %v1027
    %v1032 = vmul.f32 %v1028, %v1028
    %v1033 = vmul.f32 %v1029, %v1029
    %v1034 = vmul.f32 %v1030, %v1030
    %v1035 = vmul.f32 %v1031, %v1031
    %1036 = vadd.xlane.f32.xlu0 %v1032
    %v1037 = vpop.xlane.xlu0 %1036
    %1038 = vadd.xlane.f32.xlu0 %v1033
    %v1039 = vpop.xlane.xlu0 %1038
    %1040 = vadd.xlane.f32.xlu0 %v1034
    %v1041 = vpop.xlane.xlu0 %1040
    %1042 = vadd.xlane.f32.xlu0 %v1035
    %v1043 = vpop.xlane.xlu0 %1042
    %v1044 = vmul.f32 %v1037, %v105
    %v1045 = vmul.f32 %v1039, %v105
    %v1046 = vmul.f32 %v1041, %v105
    %v1047 = vmul.f32 %v1043, %v105
    %v1048 = vadd.f32 %v1044, 1e-12
    %v1049 = vadd.f32 %v1045, 1e-12
    %v1050 = vadd.f32 %v1046, 1e-12
    %v1051 = vadd.f32 %v1047, 1e-12
    %v1052 = vrsqrt.pop %v1048
    %v1053 = vmul.f32 %v1052, %v1048
    %v1054 = vmul.f32 %v1053, %v1052
    %v1055 = vmul.f32 0.5, %v1054
    %v1056 = vsub.f32 1.5, %v1055
    %v1057 = vmul.f32 %v1052, %v1056
    %vm1058 = vweird.f32 %v1048
    %vm1059 = vweird.f32 %v1052
    %vm1060 = vmor %vm1058, %vm1059
    %v1061 = vsel %vm1060, %v1052, %v1057
    %v1062 = vrsqrt.pop %v1049
    %v1063 = vmul.f32 %v1062, %v1049
    %v1064 = vmul.f32 %v1063, %v1062
    %v1065 = vmul.f32 0.5, %v1064
    %v1066 = vsub.f32 1.5, %v1065
    %v1067 = vmul.f32 %v1062, %v1066
    %vm1068 = vweird.f32 %v1049
    %vm1069 = vweird.f32 %v1062
    %vm1070 = vmor %vm1068, %vm1069
    %v1071 = vsel %vm1070, %v1062, %v1067
    %v1072 = vrsqrt.pop %v1050
    %v1073 = vmul.f32 %v1072, %v1050
    %v1074 = vmul.f32 %v1073, %v1072
    %v1075 = vmul.f32 0.5, %v1074
    %v1076 = vsub.f32 1.5, %v1075
    %v1077 = vmul.f32 %v1072, %v1076
    %vm1078 = vweird.f32 %v1050
    %vm1079 = vweird.f32 %v1072
    %vm1080 = vmor %vm1078, %vm1079
    %v1081 = vsel %vm1080, %v1072, %v1077
    %v1082 = vrsqrt.pop %v1051
    %v1083 = vmul.f32 %v1082, %v1051
    %v1084 = vmul.f32 %v1083, %v1082
    %v1085 = vmul.f32 0.5, %v1084
    %v1086 = vsub.f32 1.5, %v1085
    %v1087 = vmul.f32 %v1082, %v1086
    %vm1088 = vweird.f32 %v1051
    %vm1089 = vweird.f32 %v1082
    %vm1090 = vmor %vm1088, %vm1089
    %v1091 = vsel %vm1090, %v1082, %v1087
    %v1092 = vmul.f32 %v1028, %v1061
    %v1093 = vmul.f32 %v1029, %v1071
    %v1094 = vmul.f32 %v1030, %v1081
    %v1095 = vmul.f32 %v1031, %v1091
    %v1097 = vperm.slane %v1014, 0
    %v1099 = vmul.f32 %v1092, %v1097
    %v1100 = vmul.f32 %v1093, %v1097
    %v1101 = vmul.f32 %v1094, %v1097
    %v1102 = vmul.f32 %v1095, %v1097
    %v1104 = vperm.slane %v1015, 0
    %v1106 = vadd.f32 %v1099, %v1104
    %v1107 = vadd.f32 %v1100, %v1104
    %v1108 = vadd.f32 %v1101, %v1104
    %v1109 = vadd.f32 %v1102, %v1104
    %v1110 = vpack.c.bf16 %v1107, %v1106
    %v1111 = vpack.c.bf16 %v1109, %v1108
    %v1113 = vperm.slane %v266, 0
    %v1114 = vperm.slane %v266, 1
    %v1133 = vunpack.c.l.b16 %v250
    %v1134 = vunpack.c.h.b16 %v250
    %v1135 = vunpack.c.l.b16 %v251
    %v1136 = vunpack.c.h.b16 %v251
    %v1137 = vunpack.c.l.b16 %v252
    %v1138 = vunpack.c.h.b16 %v252
    %v1139 = vunpack.c.l.b16 %v253
    %v1140 = vunpack.c.h.b16 %v253
    %v1141 = vunpack.c.l.b16 %v254
    %v1142 = vunpack.c.h.b16 %v254
    %v1143 = vunpack.c.l.b16 %v255
    %v1144 = vunpack.c.h.b16 %v255
    %v1145 = vunpack.c.l.b16 %v256
    %v1146 = vunpack.c.h.b16 %v256
    %v1147 = vunpack.c.l.b16 %v257
    %v1148 = vunpack.c.h.b16 %v257
    %v1149 = vunpack.c.l.b16 %v258
    %v1150 = vunpack.c.h.b16 %v258
    %v1151 = vunpack.c.l.b16 %v259
    %v1152 = vunpack.c.h.b16 %v259
    %v1153 = vunpack.c.l.b16 %v260
    %v1154 = vunpack.c.h.b16 %v260
    %v1155 = vunpack.c.l.b16 %v261
    %v1156 = vunpack.c.h.b16 %v261
    %v1157 = vunpack.c.l.b16 %v262
    %v1158 = vunpack.c.h.b16 %v262
    %v1159 = vunpack.c.l.b16 %v263
    %v1160 = vunpack.c.h.b16 %v263
    %v1161 = vunpack.c.l.b16 %v264
    %v1162 = vunpack.c.h.b16 %v264
    %v1163 = vunpack.c.l.b16 %v265
    %v1164 = vunpack.c.h.b16 %v265
    %v1165 = vpack.c.b16 %v1135, %v1133
    %v1166 = vpack.c.b16 %v1136, %v1134
    %v1167 = vpack.c.b16 %v1139, %v1137
    %v1168 = vpack.c.b16 %v1140, %v1138
    %v1169 = vpack.c.b16 %v1143, %v1141
    %v1170 = vpack.c.b16 %v1144, %v1142
    %v1171 = vpack.c.b16 %v1147, %v1145
    %v1172 = vpack.c.b16 %v1148, %v1146
    %v1173 = vpack.c.b16 %v1151, %v1149
    %v1174 = vpack.c.b16 %v1152, %v1150
    %v1175 = vpack.c.b16 %v1155, %v1153
    %v1176 = vpack.c.b16 %v1156, %v1154
    %v1177 = vpack.c.b16 %v1159, %v1157
    %v1178 = vpack.c.b16 %v1160, %v1158
    %v1179 = vpack.c.b16 %v1163, %v1161
    %v1180 = vpack.c.b16 %v1164, %v1162
    %1197 = vmatpush.bf16.msra.mxu0 %v1179
    %1198 = vmatpush.bf16.msra.mxu0 %v1177
    %1199 = vmatpush.bf16.msra.mxu0 %v1175
    %1200 = vmatpush.bf16.msra.mxu0 %v1173
    %1201 = vmatpush.bf16.msra.mxu0 %v1171
    %1202 = vmatpush.bf16.msra.mxu0 %v1169
    %1203 = vmatpush.bf16.msra.mxu0 %v1167
    %1204 = vmatpush.bf16.msra.mxu0 %v1165
    %1205 = vmatmul.bf16.gmra.mxu0 %v1110
    %v1206 = vpop.f32.mrf.mxu0
    %v1207 = vadd.f32 %v1113, %v1206
    %v1208 = vpop.f32.mrf.mxu0
    %v1209 = vadd.f32 %v1113, %v1208
    %1210 = vmatmul.bf16.gmra.mxu0 %v1111
    %v1211 = vpop.f32.mrf.mxu0
    %v1212 = vadd.f32 %v1113, %v1211
    %v1213 = vpop.f32.mrf.mxu0
    %v1214 = vadd.f32 %v1113, %v1213
    %1215 = vdwg.mxu0
    %1216 = vmatpush.bf16.msra.mxu0 %v1180
    %1217 = vmatpush.bf16.msra.mxu0 %v1178
    %1218 = vmatpush.bf16.msra.mxu0 %v1176
    %1219 = vmatpush.bf16.msra.mxu0 %v1174
    %1220 = vmatpush.bf16.msra.mxu0 %v1172
    %1221 = vmatpush.bf16.msra.mxu0 %v1170
    %1222 = vmatpush.bf16.msra.mxu0 %v1168
    %1223 = vmatpush.bf16.msra.mxu0 %v1166
    %1224 = vmatmul.bf16.gmra.mxu0 %v1110
    %v1225 = vpop.f32.mrf.mxu0
    %v1226 = vadd.f32 %v1114, %v1225
    %v1227 = vpop.f32.mrf.mxu0
    %v1228 = vadd.f32 %v1114, %v1227
    %1229 = vmatmul.bf16.gmra.mxu0 %v1111
    %v1230 = vpop.f32.mrf.mxu0
    %v1231 = vadd.f32 %v1114, %v1230
    %v1232 = vpop.f32.mrf.mxu0
    %v1233 = vadd.f32 %v1114, %v1232
    %1234 = vdwg.mxu0
    %v1235 = vmul.f32 %v1207, %v1207
    %v1236 = vmul.f32 %v1226, %v1226
    %v1237 = vmul.f32 %v1209, %v1209
    %v1238 = vmul.f32 %v1228, %v1228
    %v1239 = vmul.f32 %v1212, %v1212
    %v1240 = vmul.f32 %v1231, %v1231
    %v1241 = vmul.f32 %v1214, %v1214
    %v1242 = vmul.f32 %v1233, %v1233
    %v1243 = vmul.f32 %v1207, %v1235
    %v1244 = vmul.f32 %v1226, %v1236
    %v1245 = vmul.f32 %v1209, %v1237
    %v1246 = vmul.f32 %v1228, %v1238
    %v1247 = vmul.f32 %v1212, %v1239
    %v1248 = vmul.f32 %v1231, %v1240
    %v1249 = vmul.f32 %v1214, %v1241
    %v1250 = vmul.f32 %v1233, %v1242
    %v1251 = vmul.f32 %v1243, 0.044715
    %v1252 = vmul.f32 %v1244, 0.044715
    %v1253 = vmul.f32 %v1245, 0.044715
    %v1254 = vmul.f32 %v1246, 0.044715
    %v1255 = vmul.f32 %v1247, 0.044715
    %v1256 = vmul.f32 %v1248, 0.044715
    %v1257 = vmul.f32 %v1249, 0.044715
    %v1258 = vmul.f32 %v1250, 0.044715
    %v1259 = vadd.f32 %v1207, %v1251
    %v1260 = vadd.f32 %v1226, %v1252
    %v1261 = vadd.f32 %v1209, %v1253
    %v1262 = vadd.f32 %v1228, %v1254
    %v1263 = vadd.f32 %v1212, %v1255
    %v1264 = vadd.f32 %v1231, %v1256
    %v1265 = vadd.f32 %v1214, %v1257
    %v1266 = vadd.f32 %v1233, %v1258
    %v1267 = vmul.f32 %v1259, 0.7978846
    %v1268 = vmul.f32 %v1260, 0.7978846
    %v1269 = vmul.f32 %v1261, 0.7978846
    %v1270 = vmul.f32 %v1262, 0.7978846
    %v1271 = vmul.f32 %v1263, 0.7978846
    %v1272 = vmul.f32 %v1264, 0.7978846
    %v1273 = vmul.f32 %v1265, 0.7978846
    %v1274 = vmul.f32 %v1266, 0.7978846
    %v1275 = vtanh.pop %v1267
    %v1276 = vtanh.pop %v1268
    %v1277 = vtanh.pop %v1269
    %v1278 = vtanh.pop %v1270
    %v1279 = vtanh.pop %v1271
    %v1280 = vtanh.pop %v1272
    %v1281 = vtanh.pop %v1273
    %v1282 = vtanh.pop %v1274
    %v1283 = vadd.f32 %v1275, 1.0
    %v1284 = vadd.f32 %v1276, 1.0
    %v1285 = vadd.f32 %v1277, 1.0
    %v1286 = vadd.f32 %v1278, 1.0
    %v1287 = vadd.f32 %v1279, 1.0
    %v1288 = vadd.f32 %v1280, 1.0
    %v1289 = vadd.f32 %v1281, 1.0
    %v1290 = vadd.f32 %v1282, 1.0
    %v1291 = vmul.f32 %v1283, 0.5
    %v1292 = vmul.f32 %v1284, 0.5
    %v1293 = vmul.f32 %v1285, 0.5
    %v1294 = vmul.f32 %v1286, 0.5
    %v1295 = vmul.f32 %v1287, 0.5
    %v1296 = vmul.f32 %v1288, 0.5
    %v1297 = vmul.f32 %v1289, 0.5
    %v1298 = vmul.f32 %v1290, 0.5
    %v1299 = vmul.f32 %v1207, %v1291
    %v1300 = vmul.f32 %v1226, %v1292
    %v1301 = vmul.f32 %v1209, %v1293
    %v1302 = vmul.f32 %v1228, %v1294
    %v1303 = vmul.f32 %v1212, %v1295
    %v1304 = vmul.f32 %v1231, %v1296
    %v1305 = vmul.f32 %v1214, %v1297
    %v1306 = vmul.f32 %v1233, %v1298
    %v1307 = vpack.c.bf16 %v1301, %v1299
    %v1308 = vpack.c.bf16 %v1302, %v1300
    %v1309 = vpack.c.bf16 %v1305, %v1303
    %v1310 = vpack.c.bf16 %v1306, %v1304
    %v1312 = vperm.slane %v299, 0
    %v1346 = vunpack.c.l.b16 %v267
    %v1347 = vunpack.c.l.b16 %v268
    %v1348 = vunpack.c.l.b16 %v269
    %v1349 = vunpack.c.l.b16 %v270
    %v1350 = vunpack.c.l.b16 %v271
    %v1351 = vunpack.c.l.b16 %v272
    %v1352 = vunpack.c.l.b16 %v273
    %v1353 = vunpack.c.l.b16 %v274
    %v1354 = vunpack.c.l.b16 %v275
    %v1355 = vunpack.c.l.b16 %v276
    %v1356 = vunpack.c.l.b16 %v277
    %v1357 = vunpack.c.l.b16 %v278
    %v1358 = vunpack.c.l.b16 %v279
    %v1359 = vunpack.c.l.b16 %v280
    %v1360 = vunpack.c.l.b16 %v281
    %v1361 = vunpack.c.l.b16 %v282
    %v1362 = vunpack.c.l.b16 %v283
    %v1363 = vunpack.c.l.b16 %v284
    %v1364 = vunpack.c.l.b16 %v285
    %v1365 = vunpack.c.l.b16 %v286
    %v1366 = vunpack.c.l.b16 %v287
    %v1367 = vunpack.c.l.b16 %v288
    %v1368 = vunpack.c.l.b16 %v289
    %v1369 = vunpack.c.l.b16 %v290
    %v1370 = vunpack.c.l.b16 %v291
    %v1371 = vunpack.c.l.b16 %v292
    %v1372 = vunpack.c.l.b16 %v293
    %v1373 = vunpack.c.l.b16 %v294
    %v1374 = vunpack.c.l.b16 %v295
    %v1375 = vunpack.c.l.b16 %v296
    %v1376 = vunpack.c.l.b16 %v297
    %v1377 = vunpack.c.l.b16 %v298
    %v1378 = vpack.c.b16 %v1347, %v1346
    %v1379 = vpack.c.b16 %v1349, %v1348
    %v1380 = vpack.c.b16 %v1351, %v1350
    %v1381 = vpack.c.b16 %v1353, %v1352
    %v1382 = vpack.c.b16 %v1355, %v1354
    %v1383 = vpack.c.b16 %v1357, %v1356
    %v1384 = vpack.c.b16 %v1359, %v1358
    %v1385 = vpack.c.b16 %v1361, %v1360
    %v1386 = vpack.c.b16 %v1363, %v1362
    %v1387 = vpack.c.b16 %v1365, %v1364
    %v1388 = vpack.c.b16 %v1367, %v1366
    %v1389 = vpack.c.b16 %v1369, %v1368
    %v1390 = vpack.c.b16 %v1371, %v1370
    %v1391 = vpack.c.b16 %v1373, %v1372
    %v1392 = vpack.c.b16 %v1375, %v1374
    %v1393 = vpack.c.b16 %v1377, %v1376
    %1410 = vmatpush.bf16.msra.mxu0 %v1385
    %1411 = vmatpush.bf16.msra.mxu0 %v1384
    %1412 = vmatpush.bf16.msra.mxu0 %v1383
    %1413 = vmatpush.bf16.msra.mxu0 %v1382
    %1414 = vmatpush.bf16.msra.mxu0 %v1381
    %1415 = vmatpush.bf16.msra.mxu0 %v1380
    %1416 = vmatpush.bf16.msra.mxu0 %v1379
    %1417 = vmatpush.bf16.msra.mxu0 %v1378
    %1418 = vmatmul.bf16.gmra.mxu0 %v1307
    %v1419 = vpop.f32.mrf.mxu0
    %v1420 = vadd.f32 %v1312, %v1419
    %v1421 = vpop.f32.mrf.mxu0
    %v1422 = vadd.f32 %v1312, %v1421
    %1423 = vmatmul.bf16.gmra.mxu0 %v1309
    %v1424 = vpop.f32.mrf.mxu0
    %v1425 = vadd.f32 %v1312, %v1424
    %v1426 = vpop.f32.mrf.mxu0
    %v1427 = vadd.f32 %v1312, %v1426
    %1428 = vdwg.mxu0
    %1429 = vmatpush.bf16.msra.mxu0 %v1393
    %1430 = vmatpush.bf16.msra.mxu0 %v1392
    %1431 = vmatpush.bf16.msra.mxu0 %v1391
    %1432 = vmatpush.bf16.msra.mxu0 %v1390
    %1433 = vmatpush.bf16.msra.mxu0 %v1389
    %1434 = vmatpush.bf16.msra.mxu0 %v1388
    %1435 = vmatpush.bf16.msra.mxu0 %v1387
    %1436 = vmatpush.bf16.msra.mxu0 %v1386
    %1437 = vmatmul.bf16.gmra.mxu0 %v1308
    %v1438 = vpop.f32.mrf.mxu0
    %v1439 = vadd.f32 %v1420, %v1438
    %v1440 = vpop.f32.mrf.mxu0
    %v1441 = vadd.f32 %v1422, %v1440
    %1442 = vmatmul.bf16.gmra.mxu0 %v1310
    %v1443 = vpop.f32.mrf.mxu0
    %v1444 = vadd.f32 %v1425, %v1443
    %v1445 = vpop.f32.mrf.mxu0
    %v1446 = vadd.f32 %v1427, %v1445
    %1447 = vdwg.mxu0
    %v1448 = vadd.f32 %v1106, %v1439
    %v1449 = vadd.f32 %v1107, %v1441
    %v1450 = vadd.f32 %v1108, %v1444
    %v1451 = vadd.f32 %v1109, %v1446
    %v1452 = vld [vmem:[%s16] sm:$0x1]
    %v1453 = vld [vmem:[%s17] sm:$0x1]
    %1454 = vadd.xlane.f32.xlu0 %v1448
    %v1455 = vpop.xlane.xlu0 %1454
    %1456 = vadd.xlane.f32.xlu0 %v1449
    %v1457 = vpop.xlane.xlu0 %1456
    %1458 = vadd.xlane.f32.xlu0 %v1450
    %v1459 = vpop.xlane.xlu0 %1458
    %1460 = vadd.xlane.f32.xlu0 %v1451
    %v1461 = vpop.xlane.xlu0 %1460
    %v1462 = vmul.f32 %v1455, %v105
    %v1463 = vmul.f32 %v1457, %v105
    %v1464 = vmul.f32 %v1459, %v105
    %v1465 = vmul.f32 %v1461, %v105
    %v1466 = vsub.f32 %v1448, %v1462
    %v1467 = vsub.f32 %v1449, %v1463
    %v1468 = vsub.f32 %v1450, %v1464
    %v1469 = vsub.f32 %v1451, %v1465
    %v1470 = vmul.f32 %v1466, %v1466
    %v1471 = vmul.f32 %v1467, %v1467
    %v1472 = vmul.f32 %v1468, %v1468
    %v1473 = vmul.f32 %v1469, %v1469
    %1474 = vadd.xlane.f32.xlu0 %v1470
    %v1475 = vpop.xlane.xlu0 %1474
    %1476 = vadd.xlane.f32.xlu0 %v1471
    %v1477 = vpop.xlane.xlu0 %1476
    %1478 = vadd.xlane.f32.xlu0 %v1472
    %v1479 = vpop.xlane.xlu0 %1478
    %1480 = vadd.xlane.f32.xlu0 %v1473
    %v1481 = vpop.xlane.xlu0 %1480
    %v1482 = vmul.f32 %v1475, %v105
    %v1483 = vmul.f32 %v1477, %v105
    %v1484 = vmul.f32 %v1479, %v105
    %v1485 = vmul.f32 %v1481, %v105
    %v1486 = vadd.f32 %v1482, 1e-12
    %v1487 = vadd.f32 %v1483, 1e-12
    %v1488 = vadd.f32 %v1484, 1e-12
    %v1489 = vadd.f32 %v1485, 1e-12
    %v1490 = vrsqrt.pop %v1486
    %v1491 = vmul.f32 %v1490, %v1486
    %v1492 = vmul.f32 %v1491, %v1490
    %v1493 = vmul.f32 0.5, %v1492
    %v1494 = vsub.f32 1.5, %v1493
    %v1495 = vmul.f32 %v1490, %v1494
    %vm1496 = vweird.f32 %v1486
    %vm1497 = vweird.f32 %v1490
    %vm1498 = vmor %vm1496, %vm1497
    %v1499 = vsel %vm1498, %v1490, %v1495
    %v1500 = vrsqrt.pop %v1487
    %v1501 = vmul.f32 %v1500, %v1487
    %v1502 = vmul.f32 %v1501, %v1500
    %v1503 = vmul.f32 0.5, %v1502
    %v1504 = vsub.f32 1.5, %v1503
    %v1505 = vmul.f32 %v1500, %v1504
    %vm1506 = vweird.f32 %v1487
    %vm1507 = vweird.f32 %v1500
    %vm1508 = vmor %vm1506, %vm1507
    %v1509 = vsel %vm1508, %v1500, %v1505
    %v1510 = vrsqrt.pop %v1488
    %v1511 = vmul.f32 %v1510, %v1488
    %v1512 = vmul.f32 %v1511, %v1510
    %v1513 = vmul.f32 0.5, %v1512
    %v1514 = vsub.f32 1.5, %v1513
    %v1515 = vmul.f32 %v1510, %v1514
    %vm1516 = vweird.f32 %v1488
    %vm1517 = vweird.f32 %v1510
    %vm1518 = vmor %vm1516, %vm1517
    %v1519 = vsel %vm1518, %v1510, %v1515
    %v1520 = vrsqrt.pop %v1489
    %v1521 = vmul.f32 %v1520, %v1489
    %v1522 = vmul.f32 %v1521, %v1520
    %v1523 = vmul.f32 0.5, %v1522
    %v1524 = vsub.f32 1.5, %v1523
    %v1525 = vmul.f32 %v1520, %v1524
    %vm1526 = vweird.f32 %v1489
    %vm1527 = vweird.f32 %v1520
    %vm1528 = vmor %vm1526, %vm1527
    %v1529 = vsel %vm1528, %v1520, %v1525
    %v1530 = vmul.f32 %v1466, %v1499
    %v1531 = vmul.f32 %v1467, %v1509
    %v1532 = vmul.f32 %v1468, %v1519
    %v1533 = vmul.f32 %v1469, %v1529
    %v1535 = vperm.slane %v1452, 0
    %v1537 = vmul.f32 %v1530, %v1535
    %v1538 = vmul.f32 %v1531, %v1535
    %v1539 = vmul.f32 %v1532, %v1535
    %v1540 = vmul.f32 %v1533, %v1535
    %v1542 = vperm.slane %v1453, 0
    %v1544 = vadd.f32 %v1537, %v1542
    %v1545 = vadd.f32 %v1538, %v1542
    %v1546 = vadd.f32 %v1539, %v1542
    %v1547 = vadd.f32 %v1540, %v1542
    %s1548 = scalar_lea.vmem %s6, 192
    %v1549 = vld [vmem:[%s1548] sm:$0xff]
    %v1550 = vld [vmem:[%s1548 + $0x8] sm:$0xf]
    %v1551 = vld [vmem:[%s1548 + $0xc] sm:$0xff]
    %v1552 = vld [vmem:[%s1548 + $0x14] sm:$0xf]
    %v1553 = vld [vmem:[%s1548 + $0x18] sm:$0xff]
    %v1554 = vld [vmem:[%s1548 + $0x20] sm:$0xf]
    %v1555 = vld [vmem:[%s1548 + $0x24] sm:$0xff]
    %v1556 = vld [vmem:[%s1548 + $0x2c] sm:$0xf]
    %v1557 = vld [vmem:[%s1548 + $0x30] sm:$0xff]
    %v1558 = vld [vmem:[%s1548 + $0x38] sm:$0xf]
    %v1559 = vld [vmem:[%s1548 + $0x3c] sm:$0xff]
    %v1560 = vld [vmem:[%s1548 + $0x44] sm:$0xf]
    %v1561 = vld [vmem:[%s1548 + $0x48] sm:$0xff]
    %v1562 = vld [vmem:[%s1548 + $0x50] sm:$0xf]
    %v1563 = vld [vmem:[%s1548 + $0x54] sm:$0xff]
    %v1564 = vld [vmem:[%s1548 + $0x5c] sm:$0xf]
    %v1565 = vld [vmem:[%s1548 + $0x60] sm:$0xff]
    %v1566 = vld [vmem:[%s1548 + $0x68] sm:$0xf]
    %v1567 = vld [vmem:[%s1548 + $0x6c] sm:$0xff]
    %v1568 = vld [vmem:[%s1548 + $0x74] sm:$0xf]
    %v1569 = vld [vmem:[%s1548 + $0x78] sm:$0xff]
    %v1570 = vld [vmem:[%s1548 + $0x80] sm:$0xf]
    %v1571 = vld [vmem:[%s1548 + $0x84] sm:$0xff]
    %v1572 = vld [vmem:[%s1548 + $0x8c] sm:$0xf]
    %v1573 = vld [vmem:[%s1548 + $0x90] sm:$0xff]
    %v1574 = vld [vmem:[%s1548 + $0x98] sm:$0xf]
    %v1575 = vld [vmem:[%s1548 + $0x9c] sm:$0xff]
    %v1576 = vld [vmem:[%s1548 + $0xa4] sm:$0xf]
    %v1577 = vld [vmem:[%s1548 + $0xa8] sm:$0xff]
    %v1578 = vld [vmem:[%s1548 + $0xb0] sm:$0xf]
    %v1579 = vld [vmem:[%s1548 + $0xb4] sm:$0xff]
    %v1580 = vld [vmem:[%s1548 + $0xbc] sm:$0xf]
    %s1581 = scalar_lea.vmem %s7, 3
    %v1582 = vld [vmem:[%s1581] sm:$0x7]
    %s1583 = scalar_lea.vmem %s8, 64
    %v1584 = vld [vmem:[%s1583] sm:$0xf]
    %v1585 = vld [vmem:[%s1583 + $0x4] sm:$0xf]
    %v1586 = vld [vmem:[%s1583 + $0x8] sm:$0xf]
    %v1587 = vld [vmem:[%s1583 + $0xc] sm:$0xf]
    %v1588 = vld [vmem:[%s1583 + $0x10] sm:$0xf]
    %v1589 = vld [vmem:[%s1583 + $0x14] sm:$0xf]
    %v1590 = vld [vmem:[%s1583 + $0x18] sm:$0xf]
    %v1591 = vld [vmem:[%s1583 + $0x1c] sm:$0xf]
    %v1592 = vld [vmem:[%s1583 + $0x20] sm:$0xf]
    %v1593 = vld [vmem:[%s1583 + $0x24] sm:$0xf]
    %v1594 = vld [vmem:[%s1583 + $0x28] sm:$0xf]
    %v1595 = vld [vmem:[%s1583 + $0x2c] sm:$0xf]
    %v1596 = vld [vmem:[%s1583 + $0x30] sm:$0xf]
    %v1597 = vld [vmem:[%s1583 + $0x34] sm:$0xf]
    %v1598 = vld [vmem:[%s1583 + $0x38] sm:$0xf]
    %v1599 = vld [vmem:[%s1583 + $0x3c] sm:$0xf]
    %s1600 = scalar_lea.vmem %s9, 1
    %v1601 = vld [vmem:[%s1600] sm:$0x1]
    %s1602 = scalar_lea.vmem %s12, 128
    %v1603 = vld [vmem:[%s1602] sm:$0xff]
    %v1604 = vld [vmem:[%s1602 + $0x8] sm:$0xff]
    %v1605 = vld [vmem:[%s1602 + $0x10] sm:$0xff]
    %v1606 = vld [vmem:[%s1602 + $0x18] sm:$0xff]
    %v1607 = vld [vmem:[%s1602 + $0x20] sm:$0xff]
    %v1608 = vld [vmem:[%s1602 + $0x28] sm:$0xff]
    %v1609 = vld [vmem:[%s1602 + $0x30] sm:$0xff]
    %v1610 = vld [vmem:[%s1602 + $0x38] sm:$0xff]
    %v1611 = vld [vmem:[%s1602 + $0x40] sm:$0xff]
    %v1612 = vld [vmem:[%s1602 + $0x48] sm:$0xff]
    %v1613 = vld [vmem:[%s1602 + $0x50] sm:$0xff]
    %v1614 = vld [vmem:[%s1602 + $0x58] sm:$0xff]
    %v1615 = vld [vmem:[%s1602 + $0x60] sm:$0xff]
    %v1616 = vld [vmem:[%s1602 + $0x68] sm:$0xff]
    %v1617 = vld [vmem:[%s1602 + $0x70] sm:$0xff]
    %v1618 = vld [vmem:[%s1602 + $0x78] sm:$0xff]
    %s1619 = scalar_lea.vmem %s13, 2
    %v1620 = vld [vmem:[%s1619] sm:$0x3]
    %s1621 = scalar_lea.vmem [#allocation2], 128
    %v1622 = vld [vmem:[%s1621] sm:$0xf]
    %v1623 = vld [vmem:[%s1621 + $0x4] sm:$0xf]
    %v1624 = vld [vmem:[%s1621 + $0x8] sm:$0xf]
    %v1625 = vld [vmem:[%s1621 + $0xc] sm:$0xf]
    %v1626 = vld [vmem:[%s1621 + $0x10] sm:$0xf]
    %v1627 = vld [vmem:[%s1621 + $0x14] sm:$0xf]
    %v1628 = vld [vmem:[%s1621 + $0x18] sm:$0xf]
    %v1629 = vld [vmem:[%s1621 + $0x1c] sm:$0xf]
    %v1630 = vld [vmem:[%s1621 + $0x20] sm:$0xf]
    %v1631 = vld [vmem:[%s1621 + $0x24] sm:$0xf]
    %v1632 = vld [vmem:[%s1621 + $0x28] sm:$0xf]
    %v1633 = vld [vmem:[%s1621 + $0x2c] sm:$0xf]
    %v1634 = vld [vmem:[%s1621 + $0x30] sm:$0xf]
    %v1635 = vld [vmem:[%s1621 + $0x34] sm:$0xf]
    %v1636 = vld [vmem:[%s1621 + $0x38] sm:$0xf]
    %v1637 = vld [vmem:[%s1621 + $0x3c] sm:$0xf]
    %v1638 = vld [vmem:[%s1621 + $0x40] sm:$0xf]
    %v1639 = vld [vmem:[%s1621 + $0x44] sm:$0xf]
    %v1640 = vld [vmem:[%s1621 + $0x48] sm:$0xf]
    %v1641 = vld [vmem:[%s1621 + $0x4c] sm:$0xf]
    %v1642 = vld [vmem:[%s1621 + $0x50] sm:$0xf]
    %v1643 = vld [vmem:[%s1621 + $0x54] sm:$0xf]
    %v1644 = vld [vmem:[%s1621 + $0x58] sm:$0xf]
    %v1645 = vld [vmem:[%s1621 + $0x5c] sm:$0xf]
    %v1646 = vld [vmem:[%s1621 + $0x60] sm:$0xf]
    %v1647 = vld [vmem:[%s1621 + $0x64] sm:$0xf]
    %v1648 = vld [vmem:[%s1621 + $0x68] sm:$0xf]
    %v1649 = vld [vmem:[%s1621 + $0x6c] sm:$0xf]
    %v1650 = vld [vmem:[%s1621 + $0x70] sm:$0xf]
    %v1651 = vld [vmem:[%s1621 + $0x74] sm:$0xf]
    %v1652 = vld [vmem:[%s1621 + $0x78] sm:$0xf]
    %v1653 = vld [vmem:[%s1621 + $0x7c] sm:$0xf]
    %s1654 = scalar_lea.vmem %s15, 1
    %v1655 = vld [vmem:[%s1654] sm:$0x1]
    %v1656 = vpack.c.bf16 %v1545, %v1544
    %v1657 = vpack.c.bf16 %v1547, %v1546
    %v1659 = vperm.slane %v1582, 0
    %v1660 = vperm.slane %v1582, 1
    %v1661 = vperm.slane %v1582, 2
    %v1697 = vunpack.c.l.b16 %v1549
    %v1698 = vunpack.c.h.b16 %v1549
    %v1699 = vunpack.c.l.b16 %v1550
    %v1700 = vunpack.c.l.b16 %v1551
    %v1701 = vunpack.c.h.b16 %v1551
    %v1702 = vunpack.c.l.b16 %v1552
    %v1703 = vunpack.c.l.b16 %v1553
    %v1704 = vunpack.c.h.b16 %v1553
    %v1705 = vunpack.c.l.b16 %v1554
    %v1706 = vunpack.c.l.b16 %v1555
    %v1707 = vunpack.c.h.b16 %v1555
    %v1708 = vunpack.c.l.b16 %v1556
    %v1709 = vunpack.c.l.b16 %v1557
    %v1710 = vunpack.c.h.b16 %v1557
    %v1711 = vunpack.c.l.b16 %v1558
    %v1712 = vunpack.c.l.b16 %v1559
    %v1713 = vunpack.c.h.b16 %v1559
    %v1714 = vunpack.c.l.b16 %v1560
    %v1715 = vunpack.c.l.b16 %v1561
    %v1716 = vunpack.c.h.b16 %v1561
    %v1717 = vunpack.c.l.b16 %v1562
    %v1718 = vunpack.c.l.b16 %v1563
    %v1719 = vunpack.c.h.b16 %v1563
    %v1720 = vunpack.c.l.b16 %v1564
    %v1721 = vunpack.c.l.b16 %v1565
    %v1722 = vunpack.c.h.b16 %v1565
    %v1723 = vunpack.c.l.b16 %v1566
    %v1724 = vunpack.c.l.b16 %v1567
    %v1725 = vunpack.c.h.b16 %v1567
    %v1726 = vunpack.c.l.b16 %v1568
    %v1727 = vunpack.c.l.b16 %v1569
    %v1728 = vunpack.c.h.b16 %v1569
    %v1729 = vunpack.c.l.b16 %v1570
    %v1730 = vunpack.c.l.b16 %v1571
    %v1731 = vunpack.c.h.b16 %v1571
    %v1732 = vunpack.c.l.b16 %v1572
    %v1733 = vunpack.c.l.b16 %v1573
    %v1734 = vunpack.c.h.b16 %v1573
    %v1735 = vunpack.c.l.b16 %v1574
    %v1736 = vunpack.c.l.b16 %v1575
    %v1737 = vunpack.c.h.b16 %v1575
    %v1738 = vunpack.c.l.b16 %v1576
    %v1739 = vunpack.c.l.b16 %v1577
    %v1740 = vunpack.c.h.b16 %v1577
    %v1741 = vunpack.c.l.b16 %v1578
    %v1742 = vunpack.c.l.b16 %v1579
    %v1743 = vunpack.c.h.b16 %v1579
    %v1744 = vunpack.c.l.b16 %v1580
    %v1745 = vpack.c.b16 %v1700, %v1697
    %v1746 = vpack.c.b16 %v1701, %v1698
    %v1747 = vpack.c.b16 %v1702, %v1699
    %v1748 = vpack.c.b16 %v1706, %v1703
    %v1749 = vpack.c.b16 %v1707, %v1704
    %v1750 = vpack.c.b16 %v1708, %v1705
    %v1751 = vpack.c.b16 %v1712, %v1709
    %v1752 = vpack.c.b16 %v1713, %v1710
    %v1753 = vpack.c.b16 %v1714, %v1711
    %v1754 = vpack.c.b16 %v1718, %v1715
    %v1755 = vpack.c.b16 %v1719, %v1716
    %v1756 = vpack.c.b16 %v1720, %v1717
    %v1757 = vpack.c.b16 %v1724, %v1721
    %v1758 = vpack.c.b16 %v1725, %v1722
    %v1759 = vpack.c.b16 %v1726, %v1723
    %v1760 = vpack.c.b16 %v1730, %v1727
    %v1761 = vpack.c.b16 %v1731, %v1728
    %v1762 = vpack.c.b16 %v1732, %v1729
    %v1763 = vpack.c.b16 %v1736, %v1733
    %v1764 = vpack.c.b16 %v1737, %v1734
    %v1765 = vpack.c.b16 %v1738, %v1735
    %v1766 = vpack.c.b16 %v1742, %v1739
    %v1767 = vpack.c.b16 %v1743, %v1740
    %v1768 = vpack.c.b16 %v1744, %v1741
    %1793 = vmatpush.bf16.msra.mxu0 %v1766
    %1794 = vmatpush.bf16.msra.mxu0 %v1763
    %1795 = vmatpush.bf16.msra.mxu0 %v1760
    %1796 = vmatpush.bf16.msra.mxu0 %v1757
    %1797 = vmatpush.bf16.msra.mxu0 %v1754
    %1798 = vmatpush.bf16.msra.mxu0 %v1751
    %1799 = vmatpush.bf16.msra.mxu0 %v1748
    %1800 = vmatpush.bf16.msra.mxu0 %v1745
    %1801 = vmatmul.bf16.gmra.mxu0 %v1656
    %v1802 = vpop.f32.mrf.mxu0
    %v1803 = vadd.f32 %v1659, %v1802
    %v1804 = vpop.f32.mrf.mxu0
    %v1805 = vadd.f32 %v1659, %v1804
    %1806 = vmatmul.bf16.gmra.mxu0 %v1657
    %v1807 = vpop.f32.mrf.mxu0
    %v1808 = vadd.f32 %v1659, %v1807
    %v1809 = vpop.f32.mrf.mxu0
    %v1810 = vadd.f32 %v1659, %v1809
    %1811 = vdwg.mxu0
    %1812 = vmatpush.bf16.msra.mxu0 %v1767
    %1813 = vmatpush.bf16.msra.mxu0 %v1764
    %1814 = vmatpush.bf16.msra.mxu0 %v1761
    %1815 = vmatpush.bf16.msra.mxu0 %v1758
    %1816 = vmatpush.bf16.msra.mxu0 %v1755
    %1817 = vmatpush.bf16.msra.mxu0 %v1752
    %1818 = vmatpush.bf16.msra.mxu0 %v1749
    %1819 = vmatpush.bf16.msra.mxu0 %v1746
    %1820 = vmatmul.bf16.gmra.mxu0 %v1656
    %v1821 = vpop.f32.mrf.mxu0
    %v1822 = vadd.f32 %v1660, %v1821
    %v1823 = vpop.f32.mrf.mxu0
    %v1824 = vadd.f32 %v1660, %v1823
    %1825 = vmatmul.bf16.gmra.mxu0 %v1657
    %v1826 = vpop.f32.mrf.mxu0
    %v1827 = vadd.f32 %v1660, %v1826
    %v1828 = vpop.f32.mrf.mxu0
    %v1829 = vadd.f32 %v1660, %v1828
    %1830 = vdwg.mxu0
    %1831 = vmatpush.bf16.msra.mxu0 %v1768
    %1832 = vmatpush.bf16.msra.mxu0 %v1765
    %1833 = vmatpush.bf16.msra.mxu0 %v1762
    %1834 = vmatpush.bf16.msra.mxu0 %v1759
    %1835 = vmatpush.bf16.msra.mxu0 %v1756
    %1836 = vmatpush.bf16.msra.mxu0 %v1753
    %1837 = vmatpush.bf16.msra.mxu0 %v1750
    %1838 = vmatpush.bf16.msra.mxu0 %v1747
    %1839 = vmatmul.bf16.gmra.mxu0 %v1656
    %v1840 = vpop.f32.mrf.mxu0
    %v1841 = vadd.f32 %v1661, %v1840
    %v1842 = vpop.f32.mrf.mxu0
    %v1843 = vadd.f32 %v1661, %v1842
    %1844 = vmatmul.bf16.gmra.mxu0 %v1657
    %v1845 = vpop.f32.mrf.mxu0
    %v1846 = vadd.f32 %v1661, %v1845
    %v1847 = vpop.f32.mrf.mxu0
    %v1848 = vadd.f32 %v1661, %v1847
    %1849 = vdwg.mxu0
    %1854 = vrot.lane.b32.xlu0 %v1803, 64
    %v1855 = vpop.permute.xlu0 %1854
    %1856 = vrot.lane.b32.xlu0 %v1805, 64
    %v1857 = vpop.permute.xlu0 %1856
    %1858 = vrot.lane.b32.xlu0 %v1808, 64
    %v1859 = vpop.permute.xlu0 %1858
    %1860 = vrot.lane.b32.xlu0 %v1810, 64
    %v1861 = vpop.permute.xlu0 %1860
    %v1866 = vpack.c.bf16 %v1803, %v1803
    %v1867 = vpack.c.bf16 %v1805, %v1805
    %v1868 = vpack.c.bf16 %v1808, %v1808
    %v1869 = vpack.c.bf16 %v1810, %v1810
    %v1870 = vpack.c.bf16 %v1855, %v1855
    %v1871 = vpack.c.bf16 %v1857, %v1857
    %v1872 = vpack.c.bf16 %v1859, %v1859
    %v1873 = vpack.c.bf16 %v1861, %v1861
    %1878 = vrot.lane.b32.xlu0 %v1822, 64
    %v1879 = vpop.permute.xlu0 %1878
    %1880 = vrot.lane.b32.xlu0 %v1824, 64
    %v1881 = vpop.permute.xlu0 %1880
    %1882 = vrot.lane.b32.xlu0 %v1827, 64
    %v1883 = vpop.permute.xlu0 %1882
    %1884 = vrot.lane.b32.xlu0 %v1829, 64
    %v1885 = vpop.permute.xlu0 %1884
    %v1890 = vpack.c.bf16 %v1822, %v1822
    %v1891 = vpack.c.bf16 %v1824, %v1824
    %v1892 = vpack.c.bf16 %v1827, %v1827
    %v1893 = vpack.c.bf16 %v1829, %v1829
    %v1894 = vpack.c.bf16 %v1879, %v1879
    %v1895 = vpack.c.bf16 %v1881, %v1881
    %v1896 = vpack.c.bf16 %v1883, %v1883
    %v1897 = vpack.c.bf16 %v1885, %v1885
    %1902 = vrot.lane.b32.xlu0 %v1841, 64
    %v1903 = vpop.permute.xlu0 %1902
    %1904 = vrot.lane.b32.xlu0 %v1843, 64
    %v1905 = vpop.permute.xlu0 %1904
    %1906 = vrot.lane.b32.xlu0 %v1846, 64
    %v1907 = vpop.permute.xlu0 %1906
    %1908 = vrot.lane.b32.xlu0 %v1848, 64
    %v1909 = vpop.permute.xlu0 %1908
    %v1914 = vpack.c.bf16 %v1841, %v1841
    %v1915 = vpack.c.bf16 %v1843, %v1843
    %v1916 = vpack.c.bf16 %v1846, %v1846
    %v1917 = vpack.c.bf16 %v1848, %v1848
    %v1918 = vpack.c.bf16 %v1903, %v1903
    %v1919 = vpack.c.bf16 %v1905, %v1905
    %v1920 = vpack.c.bf16 %v1907, %v1907
    %v1921 = vpack.c.bf16 %v1909, %v1909
    %v1924 = vunpack.c.l.b16 %v1866
    %v1925 = vunpack.c.l.b16 %v1867
    %v1926 = vpack.c.b16 %v1925, %v1924
    %v1929 = vunpack.c.l.b16 %v1890
    %v1930 = vunpack.c.l.b16 %v1891
    %v1931 = vpack.c.b16 %v1930, %v1929
    %v1933 = vsel %vm576, %v1926, 0
    %v1936 = vsel %vm576, %v1931, 0
    %1938 = vmatpush.bf16.xpose.msra.mxu0 0
    %1939 = vmatpush.bf16.xpose.msra.mxu0 0
    %1940 = vmatpush.bf16.xpose.msra.mxu0 0
    %1941 = vmatpush.bf16.xpose.msra.mxu0 0
    %1942 = vmatpush.bf16.xpose.msra.mxu0 0
    %1943 = vmatpush.bf16.xpose.msra.mxu0 0
    %1944 = vmatpush.bf16.xpose.msra.mxu0 0
    %1945 = vmatpush.bf16.xpose.msra.mxu0 %v1936
    %1946 = vmatmul.bf16.gmra.mxu0 %v1933
    %v1947 = vpop.f32.mrf.mxu0
    %v1948 = vadd.f32 0.0, %v1947
    %v1949 = vpop.f32.mrf.mxu0
    %v1950 = vadd.f32 0.0, %v1949
    %1951 = vdwg.mxu0
    %v1954 = vunpack.c.l.b16 %v1868
    %v1955 = vunpack.c.l.b16 %v1869
    %v1956 = vpack.c.b16 %v1955, %v1954
    %v1959 = vunpack.c.l.b16 %v1892
    %v1960 = vunpack.c.l.b16 %v1893
    %v1961 = vpack.c.b16 %v1960, %v1959
    %v1963 = vsel %vm576, %v1956, 0
    %v1966 = vsel %vm576, %v1961, 0
    %1968 = vmatpush.bf16.xpose.msra.mxu0 0
    %1969 = vmatpush.bf16.xpose.msra.mxu0 0
    %1970 = vmatpush.bf16.xpose.msra.mxu0 0
    %1971 = vmatpush.bf16.xpose.msra.mxu0 0
    %1972 = vmatpush.bf16.xpose.msra.mxu0 0
    %1973 = vmatpush.bf16.xpose.msra.mxu0 0
    %1974 = vmatpush.bf16.xpose.msra.mxu0 0
    %1975 = vmatpush.bf16.xpose.msra.mxu0 %v1966
    %1976 = vmatmul.bf16.gmra.mxu0 %v1963
    %v1977 = vpop.f32.mrf.mxu0
    %v1978 = vadd.f32 0.0, %v1977
    %v1979 = vpop.f32.mrf.mxu0
    %v1980 = vadd.f32 0.0, %v1979
    %1981 = vdwg.mxu0
    %v1984 = vunpack.c.l.b16 %v1870
    %v1985 = vunpack.c.l.b16 %v1871
    %v1986 = vpack.c.b16 %v1985, %v1984
    %v1989 = vunpack.c.l.b16 %v1894
    %v1990 = vunpack.c.l.b16 %v1895
    %v1991 = vpack.c.b16 %v1990, %v1989
    %v1993 = vsel %vm576, %v1986, 0
    %v1996 = vsel %vm576, %v1991, 0
    %1998 = vmatpush.bf16.xpose.msra.mxu0 0
    %1999 = vmatpush.bf16.xpose.msra.mxu0 0
    %2000 = vmatpush.bf16.xpose.msra.mxu0 0
    %2001 = vmatpush.bf16.xpose.msra.mxu0 0
    %2002 = vmatpush.bf16.xpose.msra.mxu0 0
    %2003 = vmatpush.bf16.xpose.msra.mxu0 0
    %2004 = vmatpush.bf16.xpose.msra.mxu0 0
    %2005 = vmatpush.bf16.xpose.msra.mxu0 %v1996
    %2006 = vmatmul.bf16.gmra.mxu0 %v1993
    %v2007 = vpop.f32.mrf.mxu0
    %v2008 = vadd.f32 0.0, %v2007
    %v2009 = vpop.f32.mrf.mxu0
    %v2010 = vadd.f32 0.0, %v2009
    %2011 = vdwg.mxu0
    %v2014 = vunpack.c.l.b16 %v1872
    %v2015 = vunpack.c.l.b16 %v1873
    %v2016 = vpack.c.b16 %v2015, %v2014
    %v2019 = vunpack.c.l.b16 %v1896
    %v2020 = vunpack.c.l.b16 %v1897
    %v2021 = vpack.c.b16 %v2020, %v2019
    %v2023 = vsel %vm576, %v2016, 0
    %v2026 = vsel %vm576, %v2021, 0
    %2028 = vmatpush.bf16.xpose.msra.mxu0 0
    %2029 = vmatpush.bf16.xpose.msra.mxu0 0
    %2030 = vmatpush.bf16.xpose.msra.mxu0 0
    %2031 = vmatpush.bf16.xpose.msra.mxu0 0
    %2032 = vmatpush.bf16.xpose.msra.mxu0 0
    %2033 = vmatpush.bf16.xpose.msra.mxu0 0
    %2034 = vmatpush.bf16.xpose.msra.mxu0 0
    %2035 = vmatpush.bf16.xpose.msra.mxu0 %v2026
    %2036 = vmatmul.bf16.gmra.mxu0 %v2023
    %v2037 = vpop.f32.mrf.mxu0
    %v2038 = vadd.f32 0.0, %v2037
    %v2039 = vpop.f32.mrf.mxu0
    %v2040 = vadd.f32 0.0, %v2039
    %2041 = vdwg.mxu0
    %v2042 = vmul.f32 %v1948, 0.125
    %v2043 = vmul.f32 %v1950, 0.125
    %v2044 = vmul.f32 %v1978, 0.125
    %v2045 = vmul.f32 %v1980, 0.125
    %v2046 = vmul.f32 %v2008, 0.125
    %v2047 = vmul.f32 %v2010, 0.125
    %v2048 = vmul.f32 %v2038, 0.125
    %v2049 = vmul.f32 %v2040, 0.125
    %v2050 = vadd.f32 %v2042, %v697
    %v2051 = vadd.f32 %v2043, %v697
    %v2052 = vadd.f32 %v2044, %v698
    %v2053 = vadd.f32 %v2045, %v698
    %v2054 = vadd.f32 %v2046, %v697
    %v2055 = vadd.f32 %v2047, %v697
    %v2056 = vadd.f32 %v2048, %v698
    %v2057 = vadd.f32 %v2049, %v698
    %v2058 = vsel %vm709, %v2050, -inf
    %2059 = vmax.xlane.f32.xlu0 %v2058
    %v2060 = vpop.xlane.xlu0 %2059
    %v2061 = vsel %vm709, %v2051, -inf
    %2062 = vmax.xlane.f32.xlu0 %v2061
    %v2063 = vpop.xlane.xlu0 %2062
    %v2064 = vsel %vm709, %v2052, -inf
    %2065 = vmax.xlane.f32.xlu0 %v2064
    %v2066 = vpop.xlane.xlu0 %2065
    %v2067 = vsel %vm709, %v2053, -inf
    %2068 = vmax.xlane.f32.xlu0 %v2067
    %v2069 = vpop.xlane.xlu0 %2068
    %v2070 = vsel %vm709, %v2054, -inf
    %2071 = vmax.xlane.f32.xlu0 %v2070
    %v2072 = vpop.xlane.xlu0 %2071
    %v2073 = vsel %vm709, %v2055, -inf
    %2074 = vmax.xlane.f32.xlu0 %v2073
    %v2075 = vpop.xlane.xlu0 %2074
    %v2076 = vsel %vm709, %v2056, -inf
    %2077 = vmax.xlane.f32.xlu0 %v2076
    %v2078 = vpop.xlane.xlu0 %2077
    %v2079 = vsel %vm709, %v2057, -inf
    %2080 = vmax.xlane.f32.xlu0 %v2079
    %v2081 = vpop.xlane.xlu0 %2080
    %v2082 = vsub.f32 %v2050, %v2060
    %v2083 = vsub.f32 %v2051, %v2063
    %v2084 = vsub.f32 %v2052, %v2066
    %v2085 = vsub.f32 %v2053, %v2069
    %v2086 = vsub.f32 %v2054, %v2072
    %v2087 = vsub.f32 %v2055, %v2075
    %v2088 = vsub.f32 %v2056, %v2078
    %v2089 = vsub.f32 %v2057, %v2081
    %v2090 = vmul.f32 %v2082, 1.442695
    %v2091 = vpow.pop %v2090
    %v2092 = vmul.f32 %v2083, 1.442695
    %v2093 = vpow.pop %v2092
    %v2094 = vmul.f32 %v2084, 1.442695
    %v2095 = vpow.pop %v2094
    %v2096 = vmul.f32 %v2085, 1.442695
    %v2097 = vpow.pop %v2096
    %v2098 = vmul.f32 %v2086, 1.442695
    %v2099 = vpow.pop %v2098
    %v2100 = vmul.f32 %v2087, 1.442695
    %v2101 = vpow.pop %v2100
    %v2102 = vmul.f32 %v2088, 1.442695
    %v2103 = vpow.pop %v2102
    %v2104 = vmul.f32 %v2089, 1.442695
    %v2105 = vpow.pop %v2104
    %v2106 = vsel %vm709, %v2091, 0.0
    %2107 = vadd.xlane.f32.xlu0 %v2106
    %v2108 = vpop.xlane.xlu0 %2107
    %v2109 = vsel %vm709, %v2093, 0.0
    %2110 = vadd.xlane.f32.xlu0 %v2109
    %v2111 = vpop.xlane.xlu0 %2110
    %v2112 = vsel %vm709, %v2095, 0.0
    %2113 = vadd.xlane.f32.xlu0 %v2112
    %v2114 = vpop.xlane.xlu0 %2113
    %v2115 = vsel %vm709, %v2097, 0.0
    %2116 = vadd.xlane.f32.xlu0 %v2115
    %v2117 = vpop.xlane.xlu0 %2116
    %v2118 = vsel %vm709, %v2099, 0.0
    %2119 = vadd.xlane.f32.xlu0 %v2118
    %v2120 = vpop.xlane.xlu0 %2119
    %v2121 = vsel %vm709, %v2101, 0.0
    %2122 = vadd.xlane.f32.xlu0 %v2121
    %v2123 = vpop.xlane.xlu0 %2122
    %v2124 = vsel %vm709, %v2103, 0.0
    %2125 = vadd.xlane.f32.xlu0 %v2124
    %v2126 = vpop.xlane.xlu0 %2125
    %v2127 = vsel %vm709, %v2105, 0.0
    %2128 = vadd.xlane.f32.xlu0 %v2127
    %v2129 = vpop.xlane.xlu0 %2128
    %v2130 = vrcp.pop %v2108
    %v2131 = vrcp.pop %v2111
    %v2132 = vrcp.pop %v2114
    %v2133 = vrcp.pop %v2117
    %v2134 = vrcp.pop %v2120
    %v2135 = vrcp.pop %v2123
    %v2136 = vrcp.pop %v2126
    %v2137 = vrcp.pop %v2129
    %v2138 = vmul.f32 %v2091, %v2130
    %v2139 = vmul.f32 %v2093, %v2131
    %v2140 = vmul.f32 %v2095, %v2132
    %v2141 = vmul.f32 %v2097, %v2133
    %v2142 = vmul.f32 %v2099, %v2134
    %v2143 = vmul.f32 %v2101, %v2135
    %v2144 = vmul.f32 %v2103, %v2136
    %v2145 = vmul.f32 %v2105, %v2137
    %v2146 = vpack.c.bf16 %v2138, %v2138
    %v2147 = vpack.c.bf16 %v2139, %v2139
    %v2148 = vpack.c.bf16 %v2140, %v2140
    %v2149 = vpack.c.bf16 %v2141, %v2141
    %v2150 = vpack.c.bf16 %v2142, %v2142
    %v2151 = vpack.c.bf16 %v2143, %v2143
    %v2152 = vpack.c.bf16 %v2144, %v2144
    %v2153 = vpack.c.bf16 %v2145, %v2145
    %v2156 = vunpack.c.l.b16 %v2146
    %v2157 = vunpack.c.l.b16 %v2147
    %v2158 = vpack.c.b16 %v2157, %v2156
    %v2161 = vunpack.c.l.b16 %v1914
    %v2162 = vunpack.c.l.b16 %v1915
    %v2163 = vpack.c.b16 %v2162, %v2161
    %v2166 = vsel %vm709, %v2158, 0
    %2168 = vmatpush.bf16.msra.mxu0 0
    %2169 = vmatpush.bf16.msra.mxu0 0
    %2170 = vmatpush.bf16.msra.mxu0 0
    %2171 = vmatpush.bf16.msra.mxu0 0
    %2172 = vmatpush.bf16.msra.mxu0 0
    %2173 = vmatpush.bf16.msra.mxu0 0
    %2174 = vmatpush.bf16.msra.mxu0 0
    %2175 = vmatpush.bf16.msra.mxu0 %v2163
    %2176 = vmatmul.bf16.gmra.mxu0 %v2166
    %v2177 = vpop.f32.mrf.mxu0
    %v2178 = vadd.f32 0.0, %v2177
    %v2179 = vpop.f32.mrf.mxu0
    %v2180 = vadd.f32 0.0, %v2179
    %2181 = vdwg.mxu0
    %v2184 = vunpack.c.l.b16 %v2148
    %v2185 = vunpack.c.l.b16 %v2149
    %v2186 = vpack.c.b16 %v2185, %v2184
    %v2189 = vunpack.c.l.b16 %v1916
    %v2190 = vunpack.c.l.b16 %v1917
    %v2191 = vpack.c.b16 %v2190, %v2189
    %v2194 = vsel %vm709, %v2186, 0
    %2196 = vmatpush.bf16.msra.mxu0 0
    %2197 = vmatpush.bf16.msra.mxu0 0
    %2198 = vmatpush.bf16.msra.mxu0 0
    %2199 = vmatpush.bf16.msra.mxu0 0
    %2200 = vmatpush.bf16.msra.mxu0 0
    %2201 = vmatpush.bf16.msra.mxu0 0
    %2202 = vmatpush.bf16.msra.mxu0 0
    %2203 = vmatpush.bf16.msra.mxu0 %v2191
    %2204 = vmatmul.bf16.gmra.mxu0 %v2194
    %v2205 = vpop.f32.mrf.mxu0
    %v2206 = vadd.f32 0.0, %v2205
    %v2207 = vpop.f32.mrf.mxu0
    %v2208 = vadd.f32 0.0, %v2207
    %2209 = vdwg.mxu0
    %v2212 = vunpack.c.l.b16 %v2150
    %v2213 = vunpack.c.l.b16 %v2151
    %v2214 = vpack.c.b16 %v2213, %v2212
    %v2217 = vunpack.c.l.b16 %v1918
    %v2218 = vunpack.c.l.b16 %v1919
    %v2219 = vpack.c.b16 %v2218, %v2217
    %v2222 = vsel %vm709, %v2214, 0
    %2224 = vmatpush.bf16.msra.mxu0 0
    %2225 = vmatpush.bf16.msra.mxu0 0
    %2226 = vmatpush.bf16.msra.mxu0 0
    %2227 = vmatpush.bf16.msra.mxu0 0
    %2228 = vmatpush.bf16.msra.mxu0 0
    %2229 = vmatpush.bf16.msra.mxu0 0
    %2230 = vmatpush.bf16.msra.mxu0 0
    %2231 = vmatpush.bf16.msra.mxu0 %v2219
    %2232 = vmatmul.bf16.gmra.mxu0 %v2222
    %v2233 = vpop.f32.mrf.mxu0
    %v2234 = vadd.f32 0.0, %v2233
    %v2235 = vpop.f32.mrf.mxu0
    %v2236 = vadd.f32 0.0, %v2235
    %2237 = vdwg.mxu0
    %v2240 = vunpack.c.l.b16 %v2152
    %v2241 = vunpack.c.l.b16 %v2153
    %v2242 = vpack.c.b16 %v2241, %v2240
    %v2245 = vunpack.c.l.b16 %v1920
    %v2246 = vunpack.c.l.b16 %v1921
    %v2247 = vpack.c.b16 %v2246, %v2245
    %v2250 = vsel %vm709, %v2242, 0
    %2252 = vmatpush.bf16.msra.mxu0 0
    %2253 = vmatpush.bf16.msra.mxu0 0
    %2254 = vmatpush.bf16.msra.mxu0 0
    %2255 = vmatpush.bf16.msra.mxu0 0
    %2256 = vmatpush.bf16.msra.mxu0 0
    %2257 = vmatpush.bf16.msra.mxu0 0
    %2258 = vmatpush.bf16.msra.mxu0 0
    %2259 = vmatpush.bf16.msra.mxu0 %v2247
    %2260 = vmatmul.bf16.gmra.mxu0 %v2250
    %v2261 = vpop.f32.mrf.mxu0
    %v2262 = vadd.f32 0.0, %v2261
    %v2263 = vpop.f32.mrf.mxu0
    %v2264 = vadd.f32 0.0, %v2263
    %2265 = vdwg.mxu0
    %2270 = vrot.lane.b32.xlu0 %v2234, 64
    %v2271 = vpop.permute.xlu0 %2270
    %2272 = vrot.lane.b32.xlu0 %v2236, 64
    %v2273 = vpop.permute.xlu0 %2272
    %2274 = vrot.lane.b32.xlu0 %v2262, 64
    %v2275 = vpop.permute.xlu0 %2274
    %2276 = vrot.lane.b32.xlu0 %v2264, 64
    %v2277 = vpop.permute.xlu0 %2276
    %v2282 = vsel %vm576, %v2178, %v2271
    %v2283 = vsel %vm576, %v2180, %v2273
    %v2284 = vsel %vm576, %v2206, %v2275
    %v2285 = vsel %vm576, %v2208, %v2277
    %v2286 = vpack.c.bf16 %v2283, %v2282
    %v2287 = vpack.c.bf16 %v2285, %v2284
    %v2289 = vperm.slane %v1601, 0
    %v2307 = vunpack.c.l.b16 %v1584
    %v2308 = vunpack.c.l.b16 %v1585
    %v2309 = vunpack.c.l.b16 %v1586
    %v2310 = vunpack.c.l.b16 %v1587
    %v2311 = vunpack.c.l.b16 %v1588
    %v2312 = vunpack.c.l.b16 %v1589
    %v2313 = vunpack.c.l.b16 %v1590
    %v2314 = vunpack.c.l.b16 %v1591
    %v2315 = vunpack.c.l.b16 %v1592
    %v2316 = vunpack.c.l.b16 %v1593
    %v2317 = vunpack.c.l.b16 %v1594
    %v2318 = vunpack.c.l.b16 %v1595
    %v2319 = vunpack.c.l.b16 %v1596
    %v2320 = vunpack.c.l.b16 %v1597
    %v2321 = vunpack.c.l.b16 %v1598
    %v2322 = vunpack.c.l.b16 %v1599
    %v2323 = vpack.c.b16 %v2308, %v2307
    %v2324 = vpack.c.b16 %v2310, %v2309
    %v2325 = vpack.c.b16 %v2312, %v2311
    %v2326 = vpack.c.b16 %v2314, %v2313
    %v2327 = vpack.c.b16 %v2316, %v2315
    %v2328 = vpack.c.b16 %v2318, %v2317
    %v2329 = vpack.c.b16 %v2320, %v2319
    %v2330 = vpack.c.b16 %v2322, %v2321
    %2339 = vmatpush.bf16.msra.mxu0 %v2330
    %2340 = vmatpush.bf16.msra.mxu0 %v2329
    %2341 = vmatpush.bf16.msra.mxu0 %v2328
    %2342 = vmatpush.bf16.msra.mxu0 %v2327
    %2343 = vmatpush.bf16.msra.mxu0 %v2326
    %2344 = vmatpush.bf16.msra.mxu0 %v2325
    %2345 = vmatpush.bf16.msra.mxu0 %v2324
    %2346 = vmatpush.bf16.msra.mxu0 %v2323
    %2347 = vmatmul.bf16.gmra.mxu0 %v2286
    %v2348 = vpop.f32.mrf.mxu0
    %v2349 = vadd.f32 %v2289, %v2348
    %v2350 = vpop.f32.mrf.mxu0
    %v2351 = vadd.f32 %v2289, %v2350
    %2352 = vmatmul.bf16.gmra.mxu0 %v2287
    %v2353 = vpop.f32.mrf.mxu0
    %v2354 = vadd.f32 %v2289, %v2353
    %v2355 = vpop.f32.mrf.mxu0
    %v2356 = vadd.f32 %v2289, %v2355
    %2357 = vdwg.mxu0
    %v2358 = vadd.f32 %v1544, %v2349
    %v2359 = vadd.f32 %v1545, %v2351
    %v2360 = vadd.f32 %v1546, %v2354
    %v2361 = vadd.f32 %v1547, %v2356
    %s2362 = scalar_lea.vmem %s10, 1
    %v2363 = vld [vmem:[%s2362] sm:$0x1]
    %s2364 = scalar_lea.vmem %s11, 1
    %v2365 = vld [vmem:[%s2364] sm:$0x1]
    %2366 = vadd.xlane.f32.xlu0 %v2358
    %v2367 = vpop.xlane.xlu0 %2366
    %2368 = vadd.xlane.f32.xlu0 %v2359
    %v2369 = vpop.xlane.xlu0 %2368
    %2370 = vadd.xlane.f32.xlu0 %v2360
    %v2371 = vpop.xlane.xlu0 %2370
    %2372 = vadd.xlane.f32.xlu0 %v2361
    %v2373 = vpop.xlane.xlu0 %2372
    %v2374 = vmul.f32 %v2367, %v105
    %v2375 = vmul.f32 %v2369, %v105
    %v2376 = vmul.f32 %v2371, %v105
    %v2377 = vmul.f32 %v2373, %v105
    %v2378 = vsub.f32 %v2358, %v2374
    %v2379 = vsub.f32 %v2359, %v2375
    %v2380 = vsub.f32 %v2360, %v2376
    %v2381 = vsub.f32 %v2361, %v2377
    %v2382 = vmul.f32 %v2378, %v2378
    %v2383 = vmul.f32 %v2379, %v2379
    %v2384 = vmul.f32 %v2380, %v2380
    %v2385 = vmul.f32 %v2381, %v2381
    %2386 = vadd.xlane.f32.xlu0 %v2382
    %v2387 = vpop.xlane.xlu0 %2386
    %2388 = vadd.xlane.f32.xlu0 %v2383
    %v2389 = vpop.xlane.xlu0 %2388
    %2390 = vadd.xlane.f32.xlu0 %v2384
    %v2391 = vpop.xlane.xlu0 %2390
    %2392 = vadd.xlane.f32.xlu0 %v2385
    %v2393 = vpop.xlane.xlu0 %2392
    %v2394 = vmul.f32 %v2387, %v105
    %v2395 = vmul.f32 %v2389, %v105
    %v2396 = vmul.f32 %v2391, %v105
    %v2397 = vmul.f32 %v2393, %v105
    %v2398 = vadd.f32 %v2394, 1e-12
    %v2399 = vadd.f32 %v2395, 1e-12
    %v2400 = vadd.f32 %v2396, 1e-12
    %v2401 = vadd.f32 %v2397, 1e-12
    %v2402 = vrsqrt.pop %v2398
    %v2403 = vmul.f32 %v2402, %v2398
    %v2404 = vmul.f32 %v2403, %v2402
    %v2405 = vmul.f32 0.5, %v2404
    %v2406 = vsub.f32 1.5, %v2405
    %v2407 = vmul.f32 %v2402, %v2406
    %vm2408 = vweird.f32 %v2398
    %vm2409 = vweird.f32 %v2402
    %vm2410 = vmor %vm2408, %vm2409
    %v2411 = vsel %vm2410, %v2402, %v2407
    %v2412 = vrsqrt.pop %v2399
    %v2413 = vmul.f32 %v2412, %v2399
    %v2414 = vmul.f32 %v2413, %v2412
    %v2415 = vmul.f32 0.5, %v2414
    %v2416 = vsub.f32 1.5, %v2415
    %v2417 = vmul.f32 %v2412, %v2416
    %vm2418 = vweird.f32 %v2399
    %vm2419 = vweird.f32 %v2412
    %vm2420 = vmor %vm2418, %vm2419
    %v2421 = vsel %vm2420, %v2412, %v2417
    %v2422 = vrsqrt.pop %v2400
    %v2423 = vmul.f32 %v2422, %v2400
    %v2424 = vmul.f32 %v2423, %v2422
    %v2425 = vmul.f32 0.5, %v2424
    %v2426 = vsub.f32 1.5, %v2425
    %v2427 = vmul.f32 %v2422, %v2426
    %vm2428 = vweird.f32 %v2400
    %vm2429 = vweird.f32 %v2422
    %vm2430 = vmor %vm2428, %vm2429
    %v2431 = vsel %vm2430, %v2422, %v2427
    %v2432 = vrsqrt.pop %v2401
    %v2433 = vmul.f32 %v2432, %v2401
    %v2434 = vmul.f32 %v2433, %v2432
    %v2435 = vmul.f32 0.5, %v2434
    %v2436 = vsub.f32 1.5, %v2435
    %v2437 = vmul.f32 %v2432, %v2436
    %vm2438 = vweird.f32 %v2401
    %vm2439 = vweird.f32 %v2432
    %vm2440 = vmor %vm2438, %vm2439
    %v2441 = vsel %vm2440, %v2432, %v2437
    %v2442 = vmul.f32 %v2378, %v2411
    %v2443 = vmul.f32 %v2379, %v2421
    %v2444 = vmul.f32 %v2380, %v2431
    %v2445 = vmul.f32 %v2381, %v2441
    %v2447 = vperm.slane %v2363, 0
    %v2449 = vmul.f32 %v2442, %v2447
    %v2450 = vmul.f32 %v2443, %v2447
    %v2451 = vmul.f32 %v2444, %v2447
    %v2452 = vmul.f32 %v2445, %v2447
    %v2454 = vperm.slane %v2365, 0
    %v2456 = vadd.f32 %v2449, %v2454
    %v2457 = vadd.f32 %v2450, %v2454
    %v2458 = vadd.f32 %v2451, %v2454
    %v2459 = vadd.f32 %v2452, %v2454
    %v2460 = vpack.c.bf16 %v2457, %v2456
    %v2461 = vpack.c.bf16 %v2459, %v2458
    %v2463 = vperm.slane %v1620, 0
    %v2464 = vperm.slane %v1620, 1
    %v2483 = vunpack.c.l.b16 %v1603
    %v2484 = vunpack.c.h.b16 %v1603
    %v2485 = vunpack.c.l.b16 %v1604
    %v2486 = vunpack.c.h.b16 %v1604
    %v2487 = vunpack.c.l.b16 %v1605
    %v2488 = vunpack.c.h.b16 %v1605
    %v2489 = vunpack.c.l.b16 %v1606
    %v2490 = vunpack.c.h.b16 %v1606
    %v2491 = vunpack.c.l.b16 %v1607
    %v2492 = vunpack.c.h.b16 %v1607
    %v2493 = vunpack.c.l.b16 %v1608
    %v2494 = vunpack.c.h.b16 %v1608
    %v2495 = vunpack.c.l.b16 %v1609
    %v2496 = vunpack.c.h.b16 %v1609
    %v2497 = vunpack.c.l.b16 %v1610
    %v2498 = vunpack.c.h.b16 %v1610
    %v2499 = vunpack.c.l.b16 %v1611
    %v2500 = vunpack.c.h.b16 %v1611
    %v2501 = vunpack.c.l.b16 %v1612
    %v2502 = vunpack.c.h.b16 %v1612
    %v2503 = vunpack.c.l.b16 %v1613
    %v2504 = vunpack.c.h.b16 %v1613
    %v2505 = vunpack.c.l.b16 %v1614
    %v2506 = vunpack.c.h.b16 %v1614
    %v2507 = vunpack.c.l.b16 %v1615
    %v2508 = vunpack.c.h.b16 %v1615
    %v2509 = vunpack.c.l.b16 %v1616
    %v2510 = vunpack.c.h.b16 %v1616
    %v2511 = vunpack.c.l.b16 %v1617
    %v2512 = vunpack.c.h.b16 %v1617
    %v2513 = vunpack.c.l.b16 %v1618
    %v2514 = vunpack.c.h.b16 %v1618
    %v2515 = vpack.c.b16 %v2485, %v2483
    %v2516 = vpack.c.b16 %v2486, %v2484
    %v2517 = vpack.c.b16 %v2489, %v2487
    %v2518 = vpack.c.b16 %v2490, %v2488
    %v2519 = vpack.c.b16 %v2493, %v2491
    %v2520 = vpack.c.b16 %v2494, %v2492
    %v2521 = vpack.c.b16 %v2497, %v2495
    %v2522 = vpack.c.b16 %v2498, %v2496
    %v2523 = vpack.c.b16 %v2501, %v2499
    %v2524 = vpack.c.b16 %v2502, %v2500
    %v2525 = vpack.c.b16 %v2505, %v2503
    %v2526 = vpack.c.b16 %v2506, %v2504
    %v2527 = vpack.c.b16 %v2509, %v2507
    %v2528 = vpack.c.b16 %v2510, %v2508
    %v2529 = vpack.c.b16 %v2513, %v2511
    %v2530 = vpack.c.b16 %v2514, %v2512
    %2547 = vmatpush.bf16.msra.mxu0 %v2529
    %2548 = vmatpush.bf16.msra.mxu0 %v2527
    %2549 = vmatpush.bf16.msra.mxu0 %v2525
    %2550 = vmatpush.bf16.msra.mxu0 %v2523
    %2551 = vmatpush.bf16.msra.mxu0 %v2521
    %2552 = vmatpush.bf16.msra.mxu0 %v2519
    %2553 = vmatpush.bf16.msra.mxu0 %v2517
    %2554 = vmatpush.bf16.msra.mxu0 %v2515
    %2555 = vmatmul.bf16.gmra.mxu0 %v2460
    %v2556 = vpop.f32.mrf.mxu0
    %v2557 = vadd.f32 %v2463, %v2556
    %v2558 = vpop.f32.mrf.mxu0
    %v2559 = vadd.f32 %v2463, %v2558
    %2560 = vmatmul.bf16.gmra.mxu0 %v2461
    %v2561 = vpop.f32.mrf.mxu0
    %v2562 = vadd.f32 %v2463, %v2561
    %v2563 = vpop.f32.mrf.mxu0
    %v2564 = vadd.f32 %v2463, %v2563
    %2565 = vdwg.mxu0
    %2566 = vmatpush.bf16.msra.mxu0 %v2530
    %2567 = vmatpush.bf16.msra.mxu0 %v2528
    %2568 = vmatpush.bf16.msra.mxu0 %v2526
    %2569 = vmatpush.bf16.msra.mxu0 %v2524
    %2570 = vmatpush.bf16.msra.mxu0 %v2522
    %2571 = vmatpush.bf16.msra.mxu0 %v2520
    %2572 = vmatpush.bf16.msra.mxu0 %v2518
    %2573 = vmatpush.bf16.msra.mxu0 %v2516
    %2574 = vmatmul.bf16.gmra.mxu0 %v2460
    %v2575 = vpop.f32.mrf.mxu0
    %v2576 = vadd.f32 %v2464, %v2575
    %v2577 = vpop.f32.mrf.mxu0
    %v2578 = vadd.f32 %v2464, %v2577
    %2579 = vmatmul.bf16.gmra.mxu0 %v2461
    %v2580 = vpop.f32.mrf.mxu0
    %v2581 = vadd.f32 %v2464, %v2580
    %v2582 = vpop.f32.mrf.mxu0
    %v2583 = vadd.f32 %v2464, %v2582
    %2584 = vdwg.mxu0
    %v2585 = vmul.f32 %v2557, %v2557
    %v2586 = vmul.f32 %v2576, %v2576
    %v2587 = vmul.f32 %v2559, %v2559
    %v2588 = vmul.f32 %v2578, %v2578
    %v2589 = vmul.f32 %v2562, %v2562
    %v2590 = vmul.f32 %v2581, %v2581
    %v2591 = vmul.f32 %v2564, %v2564
    %v2592 = vmul.f32 %v2583, %v2583
    %v2593 = vmul.f32 %v2557, %v2585
    %v2594 = vmul.f32 %v2576, %v2586
    %v2595 = vmul.f32 %v2559, %v2587
    %v2596 = vmul.f32 %v2578, %v2588
    %v2597 = vmul.f32 %v2562, %v2589
    %v2598 = vmul.f32 %v2581, %v2590
    %v2599 = vmul.f32 %v2564, %v2591
    %v2600 = vmul.f32 %v2583, %v2592
    %v2601 = vmul.f32 %v2593, 0.044715
    %v2602 = vmul.f32 %v2594, 0.044715
    %v2603 = vmul.f32 %v2595, 0.044715
    %v2604 = vmul.f32 %v2596, 0.044715
    %v2605 = vmul.f32 %v2597, 0.044715
    %v2606 = vmul.f32 %v2598, 0.044715
    %v2607 = vmul.f32 %v2599, 0.044715
    %v2608 = vmul.f32 %v2600, 0.044715
    %v2609 = vadd.f32 %v2557, %v2601
    %v2610 = vadd.f32 %v2576, %v2602
    %v2611 = vadd.f32 %v2559, %v2603
    %v2612 = vadd.f32 %v2578, %v2604
    %v2613 = vadd.f32 %v2562, %v2605
    %v2614 = vadd.f32 %v2581, %v2606
    %v2615 = vadd.f32 %v2564, %v2607
    %v2616 = vadd.f32 %v2583, %v2608
    %v2617 = vmul.f32 %v2609, 0.7978846
    %v2618 = vmul.f32 %v2610, 0.7978846
    %v2619 = vmul.f32 %v2611, 0.7978846
    %v2620 = vmul.f32 %v2612, 0.7978846
    %v2621 = vmul.f32 %v2613, 0.7978846
    %v2622 = vmul.f32 %v2614, 0.7978846
    %v2623 = vmul.f32 %v2615, 0.7978846
    %v2624 = vmul.f32 %v2616, 0.7978846
    %v2625 = vtanh.pop %v2617
    %v2626 = vtanh.pop %v2618
    %v2627 = vtanh.pop %v2619
    %v2628 = vtanh.pop %v2620
    %v2629 = vtanh.pop %v2621
    %v2630 = vtanh.pop %v2622
    %v2631 = vtanh.pop %v2623
    %v2632 = vtanh.pop %v2624
    %v2633 = vadd.f32 %v2625, 1.0
    %v2634 = vadd.f32 %v2626, 1.0
    %v2635 = vadd.f32 %v2627, 1.0
    %v2636 = vadd.f32 %v2628, 1.0
    %v2637 = vadd.f32 %v2629, 1.0
    %v2638 = vadd.f32 %v2630, 1.0
    %v2639 = vadd.f32 %v2631, 1.0
    %v2640 = vadd.f32 %v2632, 1.0
    %v2641 = vmul.f32 %v2633, 0.5
    %v2642 = vmul.f32 %v2634, 0.5
    %v2643 = vmul.f32 %v2635, 0.5
    %v2644 = vmul.f32 %v2636, 0.5
    %v2645 = vmul.f32 %v2637, 0.5
    %v2646 = vmul.f32 %v2638, 0.5
    %v2647 = vmul.f32 %v2639, 0.5
    %v2648 = vmul.f32 %v2640, 0.5
    %v2649 = vmul.f32 %v2557, %v2641
    %v2650 = vmul.f32 %v2576, %v2642
    %v2651 = vmul.f32 %v2559, %v2643
    %v2652 = vmul.f32 %v2578, %v2644
    %v2653 = vmul.f32 %v2562, %v2645
    %v2654 = vmul.f32 %v2581, %v2646
    %v2655 = vmul.f32 %v2564, %v2647
    %v2656 = vmul.f32 %v2583, %v2648
    %v2657 = vpack.c.bf16 %v2651, %v2649
    %v2658 = vpack.c.bf16 %v2652, %v2650
    %v2659 = vpack.c.bf16 %v2655, %v2653
    %v2660 = vpack.c.bf16 %v2656, %v2654
    %v2662 = vperm.slane %v1655, 0
    %v2696 = vunpack.c.l.b16 %v1622
    %v2697 = vunpack.c.l.b16 %v1623
    %v2698 = vunpack.c.l.b16 %v1624
    %v2699 = vunpack.c.l.b16 %v1625
    %v2700 = vunpack.c.l.b16 %v1626
    %v2701 = vunpack.c.l.b16 %v1627
    %v2702 = vunpack.c.l.b16 %v1628
    %v2703 = vunpack.c.l.b16 %v1629
    %v2704 = vunpack.c.l.b16 %v1630
    %v2705 = vunpack.c.l.b16 %v1631
    %v2706 = vunpack.c.l.b16 %v1632
    %v2707 = vunpack.c.l.b16 %v1633
    %v2708 = vunpack.c.l.b16 %v1634
    %v2709 = vunpack.c.l.b16 %v1635
    %v2710 = vunpack.c.l.b16 %v1636
    %v2711 = vunpack.c.l.b16 %v1637
    %v2712 = vunpack.c.l.b16 %v1638
    %v2713 = vunpack.c.l.b16 %v1639
    %v2714 = vunpack.c.l.b16 %v1640
    %v2715 = vunpack.c.l.b16 %v1641
    %v2716 = vunpack.c.l.b16 %v1642
    %v2717 = vunpack.c.l.b16 %v1643
    %v2718 = vunpack.c.l.b16 %v1644
    %v2719 = vunpack.c.l.b16 %v1645
    %v2720 = vunpack.c.l.b16 %v1646
    %v2721 = vunpack.c.l.b16 %v1647
    %v2722 = vunpack.c.l.b16 %v1648
    %v2723 = vunpack.c.l.b16 %v1649
    %v2724 = vunpack.c.l.b16 %v1650
    %v2725 = vunpack.c.l.b16 %v1651
    %v2726 = vunpack.c.l.b16 %v1652
    %v2727 = vunpack.c.l.b16 %v1653
    %v2728 = vpack.c.b16 %v2697, %v2696
    %v2729 = vpack.c.b16 %v2699, %v2698
    %v2730 = vpack.c.b16 %v2701, %v2700
    %v2731 = vpack.c.b16 %v2703, %v2702
    %v2732 = vpack.c.b16 %v2705, %v2704
    %v2733 = vpack.c.b16 %v2707, %v2706
    %v2734 = vpack.c.b16 %v2709, %v2708
    %v2735 = vpack.c.b16 %v2711, %v2710
    %v2736 = vpack.c.b16 %v2713, %v2712
    %v2737 = vpack.c.b16 %v2715, %v2714
    %v2738 = vpack.c.b16 %v2717, %v2716
    %v2739 = vpack.c.b16 %v2719, %v2718
    %v2740 = vpack.c.b16 %v2721, %v2720
    %v2741 = vpack.c.b16 %v2723, %v2722
    %v2742 = vpack.c.b16 %v2725, %v2724
    %v2743 = vpack.c.b16 %v2727, %v2726
    %2760 = vmatpush.bf16.msra.mxu0 %v2735
    %2761 = vmatpush.bf16.msra.mxu0 %v2734
    %2762 = vmatpush.bf16.msra.mxu0 %v2733
    %2763 = vmatpush.bf16.msra.mxu0 %v2732
    %2764 = vmatpush.bf16.msra.mxu0 %v2731
    %2765 = vmatpush.bf16.msra.mxu0 %v2730
    %2766 = vmatpush.bf16.msra.mxu0 %v2729
    %2767 = vmatpush.bf16.msra.mxu0 %v2728
    %2768 = vmatmul.bf16.gmra.mxu0 %v2657
    %v2769 = vpop.f32.mrf.mxu0
    %v2770 = vadd.f32 %v2662, %v2769
    %v2771 = vpop.f32.mrf.mxu0
    %v2772 = vadd.f32 %v2662, %v2771
    %2773 = vmatmul.bf16.gmra.mxu0 %v2659
    %v2774 = vpop.f32.mrf.mxu0
    %v2775 = vadd.f32 %v2662, %v2774
    %v2776 = vpop.f32.mrf.mxu0
    %v2777 = vadd.f32 %v2662, %v2776
    %2778 = vdwg.mxu0
    %2779 = vmatpush.bf16.msra.mxu0 %v2743
    %2780 = vmatpush.bf16.msra.mxu0 %v2742
    %2781 = vmatpush.bf16.msra.mxu0 %v2741
    %2782 = vmatpush.bf16.msra.mxu0 %v2740
    %2783 = vmatpush.bf16.msra.mxu0 %v2739
    %2784 = vmatpush.bf16.msra.mxu0 %v2738
    %2785 = vmatpush.bf16.msra.mxu0 %v2737
    %2786 = vmatpush.bf16.msra.mxu0 %v2736
    %2787 = vmatmul.bf16.gmra.mxu0 %v2658
    %v2788 = vpop.f32.mrf.mxu0
    %v2789 = vadd.f32 %v2770, %v2788
    %v2790 = vpop.f32.mrf.mxu0
    %v2791 = vadd.f32 %v2772, %v2790
    %2792 = vmatmul.bf16.gmra.mxu0 %v2660
    %v2793 = vpop.f32.mrf.mxu0
    %v2794 = vadd.f32 %v2775, %v2793
    %v2795 = vpop.f32.mrf.mxu0
    %v2796 = vadd.f32 %v2777, %v2795
    %2797 = vdwg.mxu0
    %v2798 = vadd.f32 %v2456, %v2789
    %v2799 = vadd.f32 %v2457, %v2791
    %v2800 = vadd.f32 %v2458, %v2794
    %v2801 = vadd.f32 %v2459, %v2796
    %s2802 = scalar_lea.vmem %s16, 1
    %v2803 = vld [vmem:[%s2802] sm:$0x1]
    %s2804 = scalar_lea.vmem %s17, 1
    %v2805 = vld [vmem:[%s2804] sm:$0x1]
    %2806 = vadd.xlane.f32.xlu0 %v2798
    %v2807 = vpop.xlane.xlu0 %2806
    %2808 = vadd.xlane.f32.xlu0 %v2799
    %v2809 = vpop.xlane.xlu0 %2808
    %2810 = vadd.xlane.f32.xlu0 %v2800
    %v2811 = vpop.xlane.xlu0 %2810
    %2812 = vadd.xlane.f32.xlu0 %v2801
    %v2813 = vpop.xlane.xlu0 %2812
    %v2814 = vmul.f32 %v2807, %v105
    %v2815 = vmul.f32 %v2809, %v105
    %v2816 = vmul.f32 %v2811, %v105
    %v2817 = vmul.f32 %v2813, %v105
    %v2818 = vsub.f32 %v2798, %v2814
    %v2819 = vsub.f32 %v2799, %v2815
    %v2820 = vsub.f32 %v2800, %v2816
    %v2821 = vsub.f32 %v2801, %v2817
    %v2822 = vmul.f32 %v2818, %v2818
    %v2823 = vmul.f32 %v2819, %v2819
    %v2824 = vmul.f32 %v2820, %v2820
    %v2825 = vmul.f32 %v2821, %v2821
    %2826 = vadd.xlane.f32.xlu0 %v2822
    %v2827 = vpop.xlane.xlu0 %2826
    %2828 = vadd.xlane.f32.xlu0 %v2823
    %v2829 = vpop.xlane.xlu0 %2828
    %2830 = vadd.xlane.f32.xlu0 %v2824
    %v2831 = vpop.xlane.xlu0 %2830
    %2832 = vadd.xlane.f32.xlu0 %v2825
    %v2833 = vpop.xlane.xlu0 %2832
    %v2834 = vmul.f32 %v2827, %v105
    %v2835 = vmul.f32 %v2829, %v105
    %v2836 = vmul.f32 %v2831, %v105
    %v2837 = vmul.f32 %v2833, %v105
    %v2838 = vadd.f32 %v2834, 1e-12
    %v2839 = vadd.f32 %v2835, 1e-12
    %v2840 = vadd.f32 %v2836, 1e-12
    %v2841 = vadd.f32 %v2837, 1e-12
    %v2842 = vrsqrt.pop %v2838
    %v2843 = vmul.f32 %v2842, %v2838
    %v2844 = vmul.f32 %v2843, %v2842
    %v2845 = vmul.f32 0.5, %v2844
    %v2846 = vsub.f32 1.5, %v2845
    %v2847 = vmul.f32 %v2842, %v2846
    %vm2848 = vweird.f32 %v2838
    %vm2849 = vweird.f32 %v2842
    %vm2850 = vmor %vm2848, %vm2849
    %v2851 = vsel %vm2850, %v2842, %v2847
    %v2852 = vrsqrt.pop %v2839
    %v2853 = vmul.f32 %v2852, %v2839
    %v2854 = vmul.f32 %v2853, %v2852
    %v2855 = vmul.f32 0.5, %v2854
    %v2856 = vsub.f32 1.5, %v2855
    %v2857 = vmul.f32 %v2852, %v2856
    %vm2858 = vweird.f32 %v2839
    %vm2859 = vweird.f32 %v2852
    %vm2860 = vmor %vm2858, %vm2859
    %v2861 = vsel %vm2860, %v2852, %v2857
    %v2862 = vrsqrt.pop %v2840
    %v2863 = vmul.f32 %v2862, %v2840
    %v2864 = vmul.f32 %v2863, %v2862
    %v2865 = vmul.f32 0.5, %v2864
    %v2866 = vsub.f32 1.5, %v2865
    %v2867 = vmul.f32 %v2862, %v2866
    %vm2868 = vweird.f32 %v2840
    %vm2869 = vweird.f32 %v2862
    %vm2870 = vmor %vm2868, %vm2869
    %v2871 = vsel %vm2870, %v2862, %v2867
    %v2872 = vrsqrt.pop %v2841
    %v2873 = vmul.f32 %v2872, %v2841
    %v2874 = vmul.f32 %v2873, %v2872
    %v2875 = vmul.f32 0.5, %v2874
    %v2876 = vsub.f32 1.5, %v2875
    %v2877 = vmul.f32 %v2872, %v2876
    %vm2878 = vweird.f32 %v2841
    %vm2879 = vweird.f32 %v2872
    %vm2880 = vmor %vm2878, %vm2879
    %v2881 = vsel %vm2880, %v2872, %v2877
    %v2882 = vmul.f32 %v2818, %v2851
    %v2883 = vmul.f32 %v2819, %v2861
    %v2884 = vmul.f32 %v2820, %v2871
    %v2885 = vmul.f32 %v2821, %v2881
    %v2887 = vperm.slane %v2803, 0
    %v2889 = vmul.f32 %v2882, %v2887
    %v2890 = vmul.f32 %v2883, %v2887
    %v2891 = vmul.f32 %v2884, %v2887
    %v2892 = vmul.f32 %v2885, %v2887
    %v2894 = vperm.slane %v2805, 0
    %v2896 = vadd.f32 %v2889, %v2894
    %v2897 = vadd.f32 %v2890, %v2894
    %v2898 = vadd.f32 %v2891, %v2894
    %v2899 = vadd.f32 %v2892, %v2894
    %v2900 = vpack.c.bf16 %v2897, %v2896
    %v2901 = vpack.c.bf16 %v2899, %v2898
    %v2902 = vld [vmem:[%s18] sm:$0xf]
    %v2903 = vld [vmem:[%s18 + $0x4] sm:$0xf]
    %v2904 = vld [vmem:[%s18 + $0x8] sm:$0xf]
    %v2905 = vld [vmem:[%s18 + $0xc] sm:$0xf]
    %v2906 = vld [vmem:[%s18 + $0x10] sm:$0xf]
    %v2907 = vld [vmem:[%s18 + $0x14] sm:$0xf]
    %v2908 = vld [vmem:[%s18 + $0x18] sm:$0xf]
    %v2909 = vld [vmem:[%s18 + $0x1c] sm:$0xf]
    %v2910 = vld [vmem:[%s18 + $0x20] sm:$0xf]
    %v2911 = vld [vmem:[%s18 + $0x24] sm:$0xf]
    %v2912 = vld [vmem:[%s18 + $0x28] sm:$0xf]
    %v2913 = vld [vmem:[%s18 + $0x2c] sm:$0xf]
    %v2914 = vld [vmem:[%s18 + $0x30] sm:$0xf]
    %v2915 = vld [vmem:[%s18 + $0x34] sm:$0xf]
    %v2916 = vld [vmem:[%s18 + $0x38] sm:$0xf]
    %v2917 = vld [vmem:[%s18 + $0x3c] sm:$0xf]
    %v2918 = vld [vmem:[%s19] sm:$0x1]
    %v2920 = vperm.slane %v2918, 0
    %v2938 = vunpack.c.l.b16 %v2902
    %v2939 = vunpack.c.l.b16 %v2903
    %v2940 = vunpack.c.l.b16 %v2904
    %v2941 = vunpack.c.l.b16 %v2905
    %v2942 = vunpack.c.l.b16 %v2906
    %v2943 = vunpack.c.l.b16 %v2907
    %v2944 = vunpack.c.l.b16 %v2908
    %v2945 = vunpack.c.l.b16 %v2909
    %v2946 = vunpack.c.l.b16 %v2910
    %v2947 = vunpack.c.l.b16 %v2911
    %v2948 = vunpack.c.l.b16 %v2912
    %v2949 = vunpack.c.l.b16 %v2913
    %v2950 = vunpack.c.l.b16 %v2914
    %v2951 = vunpack.c.l.b16 %v2915
    %v2952 = vunpack.c.l.b16 %v2916
    %v2953 = vunpack.c.l.b16 %v2917
    %v2954 = vpack.c.b16 %v2939, %v2938
    %v2955 = vpack.c.b16 %v2941, %v2940
    %v2956 = vpack.c.b16 %v2943, %v2942
    %v2957 = vpack.c.b16 %v2945, %v2944
    %v2958 = vpack.c.b16 %v2947, %v2946
    %v2959 = vpack.c.b16 %v2949, %v2948
    %v2960 = vpack.c.b16 %v2951, %v2950
    %v2961 = vpack.c.b16 %v2953, %v2952
    %2970 = vmatpush.bf16.msra.mxu0 %v2961
    %2971 = vmatpush.bf16.msra.mxu0 %v2960
    %2972 = vmatpush.bf16.msra.mxu0 %v2959
    %2973 = vmatpush.bf16.msra.mxu0 %v2958
    %2974 = vmatpush.bf16.msra.mxu0 %v2957
    %2975 = vmatpush.bf16.msra.mxu0 %v2956
    %2976 = vmatpush.bf16.msra.mxu0 %v2955
    %2977 = vmatpush.bf16.msra.mxu0 %v2954
    %2978 = vmatmul.bf16.gmra.mxu0 %v2900
    %v2979 = vpop.f32.mrf.mxu0
    %v2980 = vadd.f32 %v2920, %v2979
    %v2981 = vpop.f32.mrf.mxu0
    %v2982 = vadd.f32 %v2920, %v2981
    %2983 = vmatmul.bf16.gmra.mxu0 %v2901
    %v2984 = vpop.f32.mrf.mxu0
    %v2985 = vadd.f32 %v2920, %v2984
    %v2986 = vpop.f32.mrf.mxu0
    %v2987 = vadd.f32 %v2920, %v2986
    %2988 = vdwg.mxu0
    %2989 = vst [vmem:[%s20] sm:$0xff] %v2980
    %2990 = vst [vmem:[%s20 + $0x8] sm:$0xff] %v2982
    %2991 = vst [vmem:[%s20 + $0x10] sm:$0xff] %v2985
    %2992 = vst [vmem:[%s20 + $0x18] sm:$0xff] %v2987
    %v2993 = vlaneseq
    %v2994 = vand.u32 %v2993, 127
    %vm2995 = vcmp.lt.s32.totalorder %v2994, 8
    %v2996 = vsel %vm2995, %v2980, -1e+30
    %v2997 = vsel %vm2995, %v2982, -1e+30
    %v2998 = vsel %vm2995, %v2985, -1e+30
    %v2999 = vsel %vm2995, %v2987, -1e+30
    %3000 = vmax.xlane.f32.xlu0 %v2996
    %v3001 = vpop.xlane.xlu0 %3000
    %3002 = vmax.xlane.f32.xlu0 %v2997
    %v3003 = vpop.xlane.xlu0 %3002
    %3004 = vmax.xlane.f32.xlu0 %v2998
    %v3005 = vpop.xlane.xlu0 %3004
    %3006 = vmax.xlane.f32.xlu0 %v2999
    %v3007 = vpop.xlane.xlu0 %3006
    %v3008 = vsub.f32 %v2996, %v3001
    %v3009 = vsub.f32 %v2997, %v3003
    %v3010 = vsub.f32 %v2998, %v3005
    %v3011 = vsub.f32 %v2999, %v3007
    %v3012 = vmul.f32 %v3008, 1.442695
    %v3013 = vpow.pop %v3012
    %v3014 = vmul.f32 %v3009, 1.442695
    %v3015 = vpow.pop %v3014
    %v3016 = vmul.f32 %v3010, 1.442695
    %v3017 = vpow.pop %v3016
    %v3018 = vmul.f32 %v3011, 1.442695
    %v3019 = vpow.pop %v3018
    %3020 = vadd.xlane.f32.xlu0 %v3013
    %v3021 = vpop.xlane.xlu0 %3020
    %3022 = vadd.xlane.f32.xlu0 %v3015
    %v3023 = vpop.xlane.xlu0 %3022
    %3024 = vadd.xlane.f32.xlu0 %v3017
    %v3025 = vpop.xlane.xlu0 %3024
    %3026 = vadd.xlane.f32.xlu0 %v3019
    %v3027 = vpop.xlane.xlu0 %3026
    %v3028 = vlog2.pop %v3021
    %v3029 = vmul.f32 %v3028, 0.6931472
    %v3030 = vlog2.pop %v3023
    %v3031 = vmul.f32 %v3030, 0.6931472
    %v3032 = vlog2.pop %v3025
    %v3033 = vmul.f32 %v3032, 0.6931472
    %v3034 = vlog2.pop %v3027
    %v3035 = vmul.f32 %v3034, 0.6931472
    %v3036 = vadd.f32 %v3001, %v3029
    %v3037 = vadd.f32 %v3003, %v3031
    %v3038 = vadd.f32 %v3005, %v3033
    %v3039 = vadd.f32 %v3007, %v3035
    %v3040 = vld [vmem:[%s3] sm:$0xff]
    %v3041 = vld [vmem:[%s3 + $0x8] sm:$0xff]
    %v3042 = vld [vmem:[%s3 + $0x10] sm:$0xff]
    %v3043 = vld [vmem:[%s3 + $0x18] sm:$0xff]
    %3044 = vset.pattern.permute.xlu0 0
    %3045 = vperm.xlu0 %3044, %v3040
    %v3046 = vpop.permute.xlu0 %3045
    %3047 = vset.pattern.permute.xlu0 0
    %3048 = vperm.xlu0 %3047, %v3041
    %v3049 = vpop.permute.xlu0 %3048
    %3050 = vset.pattern.permute.xlu0 0
    %3051 = vperm.xlu0 %3050, %v3042
    %v3052 = vpop.permute.xlu0 %3051
    %3053 = vset.pattern.permute.xlu0 0
    %3054 = vperm.xlu0 %3053, %v3043
    %v3055 = vpop.permute.xlu0 %3054
    %vm3056 = vcmp.eq.s32.totalorder %v2994, %v3046
    %vm3057 = vcmp.eq.s32.totalorder %v2994, %v3049
    %vm3058 = vcmp.eq.s32.totalorder %v2994, %v3052
    %vm3059 = vcmp.eq.s32.totalorder %v2994, %v3055
    %vm3060 = vmand %vm3056, %vm2995
    %vm3061 = vmand %vm3057, %vm2995
    %vm3062 = vmand %vm3058, %vm2995
    %vm3063 = vmand %vm3059, %vm2995
    %v3064 = vsel %vm3060, %v2980, 0.0
    %v3065 = vsel %vm3061, %v2982, 0.0
    %v3066 = vsel %vm3062, %v2985, 0.0
    %v3067 = vsel %vm3063, %v2987, 0.0
    %3068 = vadd.xlane.f32.xlu0 %v3064
    %v3069 = vpop.xlane.xlu0 %3068
    %3070 = vadd.xlane.f32.xlu0 %v3065
    %v3071 = vpop.xlane.xlu0 %3070
    %3072 = vadd.xlane.f32.xlu0 %v3066
    %v3073 = vpop.xlane.xlu0 %3072
    %3074 = vadd.xlane.f32.xlu0 %v3067
    %v3075 = vpop.xlane.xlu0 %3074
    %v3076 = vsub.f32 %v3036, %v3069
    %v3077 = vsub.f32 %v3037, %v3071
    %v3078 = vsub.f32 %v3038, %v3073
    %v3079 = vsub.f32 %v3039, %v3075
    %v3080 = vld [vmem:[%s2] sm:$0xff]
    %v3081 = vld [vmem:[%s2 + $0x8] sm:$0xff]
    %v3082 = vld [vmem:[%s2 + $0x10] sm:$0xff]
    %v3083 = vld [vmem:[%s2 + $0x18] sm:$0xff]
    %vm3084 = vcmp.eq.s32.totalorder %v3080, 1
    %vm3085 = vcmp.eq.s32.totalorder %v3081, 1
    %vm3086 = vcmp.eq.s32.totalorder %v3082, 1
    %vm3087 = vcmp.eq.s32.totalorder %v3083, 1
    %v3088 = vsel %vm3084, 1, 0
    %v3089 = vsel %vm3085, 1, 0
    %v3090 = vsel %vm3086, 1, 0
    %v3091 = vsel %vm3087, 1, 0
    %v3092 = vcvt.s32.f32 %v3088
    %v3093 = vcvt.s32.f32 %v3089
    %v3094 = vcvt.s32.f32 %v3090
    %v3095 = vcvt.s32.f32 %v3091
    %v3096 = vmul.f32 %v3076, %v3092
    %v3097 = vmul.f32 %v3077, %v3093
    %v3098 = vmul.f32 %v3078, %v3094
    %v3099 = vmul.f32 %v3079, %v3095
    %vm3100 = vcmask 7168
    %v3101 = vsel %vm3100, %v3096, 0.0
    %v3102 = vsel %vm3100, %v3097, 0.0
    %v3103 = vadd.f32 %v3101, %v3102
    %v3104 = vsel %vm3100, %v3098, 0.0
    %v3105 = vadd.f32 %v3103, %v3104
    %v3106 = vsel %vm3100, %v3099, 0.0
    %v3107 = vadd.f32 %v3105, %v3106
    %3108 = vadd.xlane.f32.xlu0 %v3107
    %v3109 = vpop.xlane.xlu0 %3108
    %v3110 = vrot.slane %v3109, 4
    %v3111 = vadd.f32 %v3109, %v3110
    %v3112 = vrot.slane %v3111, 2
    %v3113 = vadd.f32 %v3111, %v3112
    %v3114 = vrot.slane %v3113, 1
    %v3115 = vadd.f32 %v3113, %v3114
    %s3116 = vtos %v3115
    %v3117 = vsel %vm3100, %v3092, 0.0
    %v3118 = vsel %vm3100, %v3093, 0.0
    %v3119 = vadd.f32 %v3117, %v3118
    %v3120 = vsel %vm3100, %v3094, 0.0
    %v3121 = vadd.f32 %v3119, %v3120
    %v3122 = vsel %vm3100, %v3095, 0.0
    %v3123 = vadd.f32 %v3121, %v3122
    %3124 = vadd.xlane.f32.xlu0 %v3123
    %v3125 = vpop.xlane.xlu0 %3124
    %v3126 = vrot.slane %v3125, 4
    %v3127 = vadd.f32 %v3125, %v3126
    %v3128 = vrot.slane %v3127, 2
    %v3129 = vadd.f32 %v3127, %v3128
    %v3130 = vrot.slane %v3129, 1
    %v3131 = vadd.f32 %v3129, %v3130
    %s3132 = vtos %v3131
    %s3133 = smax.f32 %s3132, 1.0
    %v3134 = vstv %s3133
    %v3135 = vrcp.pop %v3134
    %v3136 = vmul.f32 %v3134, %v3135
    %v3137 = vsub.f32 1.0, %v3136
    %v3138 = vmul.f32 %v3135, %v3137
    %v3139 = vadd.f32 %v3135, %v3138
    %vm3140 = vweird.f32 %v3134
    %vm3141 = vweird.f32 %v3135
    %vm3142 = vmor %vm3140, %vm3141
    %v3143 = vsel %vm3142, %v3135, %v3139
    %v3144 = vand.u32 2147483647, %v3134
    %vm3145 = vcmp.eq.f32.partialorder %v3144, 8.507059e+37
    %v3146 = vand.u32 %v3134, 2147483648
    %v3147 = vor.u32 1.1754944e-38, %v3146
    %v3148 = vsel %vm3145, %v3147, %v3143
    %s3149 = vtos %v3148
    %s3150 = smul.f32 %s3116, %s3149
    %s3151 = scalar_lea.smem [#allocation5], 0
    %3152 = sst [smem:[%s3151]] %s3150
    // Predicated region
    $region86: #{entity_model_forward.1} parent=1 // pred_check
      _
    $region87: #{entity_model_forward.1} parent=1 // pred_check_branch
      %3154 = sbr.rel (0) target = $region89
    $region88: #{entity_model_forward.1} parent=1 // pred_region
      _
    $region89: #{entity_model_forward.1} parent=1 // pred_fallthru
      _
    // Predicated region
    $region90: #{entity_model_forward.1} parent=1 // pred_check
      _
    $region91: #{entity_model_forward.1} parent=1 // pred_check_branch
      %3156 = sbr.rel (0) target = $region93
    $region92: #{entity_model_forward.1} parent=1 // pred_region
      %3158 = vsyncadd [#allocation4], 0
      %s3160 = sshll.u32 %s21, 4
      %s3161 = int_to_ptr.hbm [resolvable:$true] %s3160
      %3163 = dma.smem_to_hbm [#allocation5], 16, %s3161, [#allocation4]
    $region93: #{entity_model_forward.1} parent=1 // pred_fallthru
      _
    // Predicated region
    $region94: #{entity_model_forward.1} parent=1 // pred_check
      _
    $region95: #{entity_model_forward.1} parent=1 // pred_check_branch
      %3165 = sbr.rel (0) target = $region97
    $region96: #{entity_model_forward.1} parent=1 // pred_region
      _
    $region97: #{entity_model_forward.1} parent=1 // pred_fallthru
      _
    // Predicated region
    $region98: #{entity_model_forward.1} parent=1 // pred_check
      _
    $region99: #{entity_model_forward.1} parent=1 // pred_check_branch
      %3167 = sbr.rel (0) target = $region101
    $region100: #{entity_model_forward.1} parent=1 // pred_region
      %3169 = dma.done [#allocation4], 16
    $region101: #{entity_model_forward.1} parent=1 // pred_fallthru
      _
    %3170 = sfence
    %3171 = vsyncpa [#allocation3], 1
    %3172 = vsyncpa [#allocation4], 1

</llo_original>
